<compile_context>
chip_gen: v7x
topology: tpu7x:2x2x1
jax: 0.10.0
libtpu: 0.0.40
codegen_flags: <defaults>
</compile_context>

<pallas_src>
import jax
import jax.numpy as jnp
from jax.experimental import pallas as pl
from jax.experimental.pallas import tpu as pltpu

N_ROWS = 50                 # action matrix is (50, 50), softmax over dim=1
N_COLS = 50
IN_DIM = 50 * 51            # 2550
GRID = 2                    # action-head split: one 25-row block per grid step
ROWS_PER_BLK = N_ROWS // GRID


def _softplus(x):
    # numerically stable log(1 + exp(x))  (nn.Softplus)
    return jnp.maximum(x, 0.0) + jnp.log1p(jnp.exp(-jnp.abs(x)))


def _sigmoid(x):
    # overflow-free sigmoid (only exp(-|x|) is ever evaluated)
    e = jnp.exp(-jnp.abs(x))
    return jnp.where(x >= 0.0, 1.0 / (1.0 + e), e / (1.0 + e))


def fused_kernel(x_ref,
                 w1_ref, s1_ref, b1_ref, w2_ref, b2_ref,
                 wv1_ref, bv1_ref, wv2_ref, bv2_ref,
                 wa1_ref, ba1_ref,
                 wa2_ref, sa2_ref, ba2_ref,
                 value_ref, action_ref,
                 a1_scr):
    step = pl.program_id(0)

    # ---- trunk + value head + action layer-1: ONLY on grid step 0 ----------
    @pl.when(step == 0)
    def _():
        # Linear(2550,128) [int8 weight, per-col scale] -> Softplus
        x_bf = x_ref[...].astype(jnp.bfloat16)                      # (1, 2550)
        w1_bf = w1_ref[...].astype(jnp.bfloat16)                    # dequant: cast only
        h1 = _softplus(jnp.dot(x_bf, w1_bf,
                               preferred_element_type=jnp.float32)
                       * s1_ref[...] + b1_ref[...])                 # (1, 128)
        # Linear(128,128) [bf16] -> Softplus
        h2 = _softplus(jnp.dot(h1.astype(jnp.bfloat16), w2_ref[...],
                               preferred_element_type=jnp.float32) + b2_ref[...])
        h2_bf = h2.astype(jnp.bfloat16)

        # value head: Linear(128,64) -> Tanhshrink -> Linear(64,1) -> Sigmoid
        v1 = jnp.dot(h2_bf, wv1_ref[...],
                     preferred_element_type=jnp.float32) + bv1_ref[...]
        v1 = v1 - jnp.tanh(v1)                                      # Tanhshrink
        # (64,1) matmul replaced by a VPU multiply + lane reduce
        v2 = jnp.sum(v1 * wv2_ref[...], axis=-1, keepdims=True) + bv2_ref[...]
        value_ref[...] = _sigmoid(v2)                               # (1, 1), written once

        # action head layer 1: Linear(128,256) -> Softplus, carried in scratch
        a1 = _softplus(jnp.dot(h2_bf, wa1_ref[...],
                               preferred_element_type=jnp.float32) + ba1_ref[...])
        a1_scr[...] = a1.astype(jnp.bfloat16)                       # (1, 256)

    # ---- action head block: this grid step's 25 of the 50 softmax rows -----
    # Linear(256,2500) [int8, per-out-channel scale] -> reshape(50,50) -> Softmax(dim=1)
    a1_b = jnp.broadcast_to(a1_scr[...].reshape(1, 1, 256),
                            (ROWS_PER_BLK, 1, 256))                 # bf16
    wa2_bf = wa2_ref[...].astype(jnp.bfloat16)                      # (25, 256, 50)
    # wa2 pre-arranged (rows, 256, 50): logits[r,0,c] = sum_k a1[k]*W[k,50r+c]
    logits = (jnp.einsum('rik,rkc->ric', a1_b, wa2_bf,
                         preferred_element_type=jnp.float32)
              * sa2_ref[...] + ba2_ref[...])                        # (25, 1, 50) f32
    m = jnp.max(logits, axis=-1, keepdims=True)
    e = jnp.exp(logits - m)
    action_ref[...] = e / jnp.sum(e, axis=-1, keepdims=True)        # (25, 1, 50)


def _full(shape):
    # block == whole array, constant block index (fetched once across the grid)
    return pl.BlockSpec(shape, lambda i: (0,) * len(shape))


def energy_50_rl_forward(x, params):
    """x: (50, 51) float32 -> (value (1,), action (50, 50))."""
    (w1q, s1, b1, w2, b2, wv1, bv1, wv2, bv2,
     wa1, ba1, wa2q, sa2, ba2b) = params
    x_flat = x.reshape(1, IN_DIM).astype(jnp.float32)               # (1, 2550)

    in_specs = [
        _full((1, IN_DIM)),                                         # x
        _full(w1q.shape), _full(s1.shape), _full(b1.shape),         # trunk 1 (int8 + scale)
        _full(w2.shape), _full(b2.shape),                           # trunk 2 (bf16)
        _full(wv1.shape), _full(bv1.shape),                         # value 1 (bf16)
        _full(wv2.shape), _full(bv2.shape),                         # value 2 (f32, tiny)
        _full(wa1.shape), _full(ba1.shape),                         # action 1 (bf16)
        pl.BlockSpec((ROWS_PER_BLK, 256, N_COLS), lambda i: (i, 0, 0)),  # wa2q int8
        pl.BlockSpec((ROWS_PER_BLK, 1, N_COLS), lambda i: (i, 0, 0)),    # sa2 scales
        pl.BlockSpec((ROWS_PER_BLK, 1, N_COLS), lambda i: (i, 0, 0)),    # ba2b
    ]
    out_specs = (
        pl.BlockSpec((1, 1), lambda i: (0, 0)),                          # value (single block)
        pl.BlockSpec((ROWS_PER_BLK, 1, N_COLS), lambda i: (i, 0, 0)),    # action rows
    )

    value, action3 = pl.pallas_call(
        fused_kernel,
        grid=(GRID,),
        out_shape=(jax.ShapeDtypeStruct((1, 1), jnp.float32),
                   jax.ShapeDtypeStruct((N_ROWS, 1, N_COLS), jnp.float32)),
        in_specs=in_specs,
        out_specs=out_specs,
        scratch_shapes=[pltpu.VMEM((1, 256), jnp.bfloat16)],             # a1 carry
        compiler_params=pltpu.CompilerParams(
            # "arbitrary": sequential steps on one core -> scratch carry is
            # valid and the trunk weights are not duplicated across v7x cores.
            dimension_semantics=("arbitrary",)),
    )(x_flat, w1q, s1, b1, w2, b2, wv1, bv1, wv2, bv2, wa1, ba1, wa2q, sa2, ba2b)

    return value.reshape(1), action3.reshape(N_ROWS, N_COLS)


def _quantize_int8(w, axis):
    """Symmetric per-output-channel int8 quantization. Returns (q_int8, f32 scale)."""
    amax = jnp.max(jnp.abs(w), axis=axis, keepdims=True)
    scale = jnp.maximum(amax, 1e-8) / 127.0
    q = jnp.clip(jnp.round(w / scale), -127.0, 127.0).astype(jnp.int8)
    return q, scale.astype(jnp.float32)


def init_params(key):
    """PyTorch-default init U(-1/sqrt(fan_in), 1/sqrt(fan_in)), stored in kernel
    layout: weights transposed to (fan_in, fan_out); w1 and wa2 int8-quantized
    with per-output-channel f32 scales; w2/wv1/wa1 bf16; wa2 pre-arranged to
    (50, 256, 50) with wa2b[r,k,c] = W[k, 50r+c] so the in-kernel batched
    matmul emits the (50,50) logit rows directly (matches the PyTorch
    row-major reshape(50,50))."""
    def linear(k, fan_in, fan_out):
        kw, kb = jax.random.split(k)
        bound = 1.0 / (fan_in ** 0.5)
        w = jax.random.uniform(kw, (fan_in, fan_out), jnp.float32, -bound, bound)
        b = jax.random.uniform(kb, (1, fan_out), jnp.float32, -bound, bound)
        return w, b

    keys = jax.random.split(key, 6)
    w1, b1 = linear(keys[0], IN_DIM, 128)
    w2, b2 = linear(keys[1], 128, 128)
    wv1, bv1 = linear(keys[2], 128, 64)
    wv2, bv2 = linear(keys[3], 64, 1)
    wa1, ba1 = linear(keys[4], 128, 256)
    wa2, ba2 = linear(keys[5], 256, N_ROWS * N_COLS)

    # one-time (offline) kernel-layout conversions:
    w1q, s1 = _quantize_int8(w1, axis=0)                       # (2550,128) i8, (1,128) f32
    w2 = w2.astype(jnp.bfloat16)
    wv1 = wv1.astype(jnp.bfloat16)
    wv2 = wv2.reshape(1, 64)                                    # value head: VPU dot (f32)
    wa1 = wa1.astype(jnp.bfloat16)

    wa2q_flat, sa2_flat = _quantize_int8(wa2, axis=0)           # (256,2500) i8, (1,2500) f32
    wa2q = jnp.transpose(wa2q_flat.reshape(256, N_ROWS, N_COLS),
                         (1, 0, 2))                             # (50, 256, 50) int8, 640 KB
    sa2 = sa2_flat.reshape(N_ROWS, N_COLS)[:, None, :]          # (50, 1, 50) f32
    ba2b = ba2.reshape(N_ROWS, 1, N_COLS)                       # (50, 1, 50) f32
    return (w1q, s1, b1, w2, b2, wv1, bv1, wv2, bv2, wa1, ba1, wa2q, sa2, ba2b)


def reference_forward(x, params):
    """Pure-JAX reference using the SAME (dequantized) weights as the kernel."""
    (w1q, s1, b1, w2, b2, wv1, bv1, wv2, bv2,
     wa1, ba1, wa2q, sa2, ba2b) = params
    xf = x.reshape(1, IN_DIM).astype(jnp.float32)
    w1 = w1q.astype(jnp.float32) * s1
    h1 = jax.nn.softplus(xf @ w1 + b1)
    h2 = jax.nn.softplus(h1 @ w2.astype(jnp.float32) + b2)
    v1 = h2 @ wv1.astype(jnp.float32) + bv1
    v1 = v1 - jnp.tanh(v1)
    value = jax.nn.sigmoid(jnp.sum(v1 * wv2, axis=-1, keepdims=True) + bv2)
    a1 = jax.nn.softplus(h2 @ wa1.astype(jnp.float32) + ba1)
    wa2 = wa2q.astype(jnp.float32) * sa2                        # (50, 256, 50)
    logits = jnp.einsum('k,rkc->rc', a1[0], wa2) + ba2b[:, 0, :]
    action = jax.nn.softmax(logits, axis=1)
    return value.reshape(1), action


if __name__ == "__main__":
    key = jax.random.PRNGKey(0)
    kx, kp = jax.random.split(key)

    x = jax.random.normal(kx, (N_ROWS, 51), dtype=jnp.float32)
    params = init_params(kp)

    value, action = jax.jit(energy_50_rl_forward)(x, params)
    value = jax.block_until_ready(value)
    action = jax.block_until_ready(action)

    assert value.shape == (1,), value.shape
    assert action.shape == (50, 50), action.shape
    assert bool(jnp.all(jnp.isfinite(value)))
    row_sums = jnp.sum(action, axis=1)
    assert bool(jnp.all(jnp.abs(row_sums - 1.0) < 1e-4))

    # correctness vs a pure-JAX reference with identical (dequantized) weights;
    # tolerance only needs to absorb bf16 activation/weight rounding.
    v_ref, a_ref = reference_forward(x, params)
    assert bool(jnp.max(jnp.abs(value - v_ref)) < 5e-2)
    assert bool(jnp.max(jnp.abs(action - a_ref)) < 5e-2)

    print("KERNEL_OK")
</pallas_src>

<mosaic_0001>
module attributes {stable_mosaic.version = 11 : i64} {
  func.func @fused_kernel(%arg0: i32, %arg1: memref<1x2550xf32, #tpu.memory_space<vmem>>, %arg2: memref<2550x128xi8, #tpu.memory_space<vmem>>, %arg3: memref<1x128xf32, #tpu.memory_space<vmem>>, %arg4: memref<1x128xf32, #tpu.memory_space<vmem>>, %arg5: memref<128x128xbf16, #tpu.memory_space<vmem>>, %arg6: memref<1x128xf32, #tpu.memory_space<vmem>>, %arg7: memref<128x64xbf16, #tpu.memory_space<vmem>>, %arg8: memref<1x64xf32, #tpu.memory_space<vmem>>, %arg9: memref<1x64xf32, #tpu.memory_space<vmem>>, %arg10: memref<1x1xf32, #tpu.memory_space<vmem>>, %arg11: memref<128x256xbf16, #tpu.memory_space<vmem>>, %arg12: memref<1x256xf32, #tpu.memory_space<vmem>>, %arg13: memref<25x256x50xi8, #tpu.memory_space<vmem>>, %arg14: memref<25x1x50xf32, #tpu.memory_space<vmem>>, %arg15: memref<25x1x50xf32, #tpu.memory_space<vmem>>, %arg16: memref<1x1xf32, #tpu.memory_space<vmem>>, %arg17: memref<25x1x50xf32, #tpu.memory_space<vmem>>, %arg18: memref<1x256xbf16, #tpu.memory_space<vmem>>) attributes {dimension_semantics = [#tpu.dimension_semantics<arbitrary>], iteration_bounds = array<i64: 2>, scalar_prefetch = 0 : i64, scratch_operands = 1 : i64, tpu.core_type = #tpu.core_type<tc>, window_params = [{pipeline_mode = #tpu.pipeline_mode<synchronous>, transform_indices = @transform_0, window_bounds = array<i64: 1, 2550>}, {pipeline_mode = #tpu.pipeline_mode<synchronous>, transform_indices = @transform_1, window_bounds = array<i64: 2550, 128>}, {pipeline_mode = #tpu.pipeline_mode<synchronous>, transform_indices = @transform_2, window_bounds = array<i64: 1, 128>}, {pipeline_mode = #tpu.pipeline_mode<synchronous>, transform_indices = @transform_3, window_bounds = array<i64: 1, 128>}, {pipeline_mode = #tpu.pipeline_mode<synchronous>, transform_indices = @transform_4, window_bounds = array<i64: 128, 128>}, {pipeline_mode = #tpu.pipeline_mode<synchronous>, transform_indices = @transform_5, window_bounds = array<i64: 1, 128>}, {pipeline_mode = #tpu.pipeline_mode<synchronous>, transform_indices = @transform_6, window_bounds = array<i64: 128, 64>}, {pipeline_mode = #tpu.pipeline_mode<synchronous>, transform_indices = @transform_7, window_bounds = array<i64: 1, 64>}, {pipeline_mode = #tpu.pipeline_mode<synchronous>, transform_indices = @transform_8, window_bounds = array<i64: 1, 64>}, {pipeline_mode = #tpu.pipeline_mode<synchronous>, transform_indices = @transform_9, window_bounds = array<i64: 1, 1>}, {pipeline_mode = #tpu.pipeline_mode<synchronous>, transform_indices = @transform_10, window_bounds = array<i64: 128, 256>}, {pipeline_mode = #tpu.pipeline_mode<synchronous>, transform_indices = @transform_11, window_bounds = array<i64: 1, 256>}, {transform_indices = @transform_12, window_bounds = array<i64: 25, 256, 50>}, {transform_indices = @transform_13, window_bounds = array<i64: 25, 1, 50>}, {transform_indices = @transform_14, window_bounds = array<i64: 25, 1, 50>}, {pipeline_mode = #tpu.pipeline_mode<synchronous>, transform_indices = @transform_15, window_bounds = array<i64: 1, 1>}, {transform_indices = @transform_16, window_bounds = array<i64: 25, 1, 50>}]} {
    %c0_i32 = arith.constant 0 : i32
    %0 = arith.cmpi eq, %arg0, %c0_i32 : i32
    %1 = arith.extui %0 : i1 to i32
    %c0_i32_0 = arith.constant 0 : i32
    %2 = arith.cmpi ne, %1, %c0_i32_0 : i32
    scf.if %2 {
      %c0_16 = arith.constant 0 : index
      %c0_17 = arith.constant 0 : index
      %24 = vector.load %arg1[%c0_16, %c0_17] : memref<1x2550xf32, #tpu.memory_space<vmem>>, vector<1x2550xf32>
      %25 = arith.truncf %24 : vector<1x2550xf32> to vector<1x2550xbf16>
      %c0_18 = arith.constant 0 : index
      %c0_19 = arith.constant 0 : index
      %26 = vector.load %arg2[%c0_18, %c0_19] : memref<2550x128xi8, #tpu.memory_space<vmem>>, vector<2550x128xi8>
      %27 = arith.sitofp %26 : vector<2550x128xi8> to vector<2550x128xbf16>
      %cst_20 = arith.constant dense<0.000000e+00> : vector<1x128xf32>
      %28 = tpu.matmul %25, %27, %cst_20 {dimension_numbers = #tpu.dot_dimension_numbers<[1], [0], [0], [1], [0, 0, 1, 1], [], []>} : vector<1x2550xbf16>, vector<2550x128xbf16>, vector<1x128xf32> -> vector<1x128xf32>
      %c0_21 = arith.constant 0 : index
      %c0_22 = arith.constant 0 : index
      %29 = vector.load %arg3[%c0_21, %c0_22] : memref<1x128xf32, #tpu.memory_space<vmem>>, vector<1x128xf32>
      %30 = arith.mulf %28, %29 : vector<1x128xf32>
      %c0_23 = arith.constant 0 : index
      %c0_24 = arith.constant 0 : index
      %31 = vector.load %arg4[%c0_23, %c0_24] : memref<1x128xf32, #tpu.memory_space<vmem>>, vector<1x128xf32>
      %32 = arith.addf %30, %31 : vector<1x128xf32>
      %cst_25 = arith.constant 0.000000e+00 : f32
      %33 = vector.broadcast %cst_25 : f32 to vector<1x128xf32>
      %34 = arith.maximumf %32, %33 : vector<1x128xf32>
      %35 = math.absf %32 : vector<1x128xf32>
      %cst_26 = arith.constant 0.000000e+00 : f32
      %36 = vector.broadcast %cst_26 : f32 to vector<1x128xf32>
      %37 = arith.subf %36, %35 : vector<1x128xf32>
      %38 = math.exp %37 : vector<1x128xf32>
      %39 = math.log1p %38 : vector<1x128xf32>
      %40 = arith.addf %34, %39 : vector<1x128xf32>
      %41 = arith.truncf %40 : vector<1x128xf32> to vector<1x128xbf16>
      %c0_27 = arith.constant 0 : index
      %c0_28 = arith.constant 0 : index
      %42 = vector.load %arg5[%c0_27, %c0_28] : memref<128x128xbf16, #tpu.memory_space<vmem>>, vector<128x128xbf16>
      %cst_29 = arith.constant dense<0.000000e+00> : vector<1x128xf32>
      %43 = tpu.matmul %41, %42, %cst_29 {dimension_numbers = #tpu.dot_dimension_numbers<[1], [0], [0], [1], [0, 0, 1, 1], [], []>} : vector<1x128xbf16>, vector<128x128xbf16>, vector<1x128xf32> -> vector<1x128xf32>
      %c0_30 = arith.constant 0 : index
      %c0_31 = arith.constant 0 : index
      %44 = vector.load %arg6[%c0_30, %c0_31] : memref<1x128xf32, #tpu.memory_space<vmem>>, vector<1x128xf32>
      %45 = arith.addf %43, %44 : vector<1x128xf32>
      %cst_32 = arith.constant 0.000000e+00 : f32
      %46 = vector.broadcast %cst_32 : f32 to vector<1x128xf32>
      %47 = arith.maximumf %45, %46 : vector<1x128xf32>
      %48 = math.absf %45 : vector<1x128xf32>
      %cst_33 = arith.constant 0.000000e+00 : f32
      %49 = vector.broadcast %cst_33 : f32 to vector<1x128xf32>
      %50 = arith.subf %49, %48 : vector<1x128xf32>
      %51 = math.exp %50 : vector<1x128xf32>
      %52 = math.log1p %51 : vector<1x128xf32>
      %53 = arith.addf %47, %52 : vector<1x128xf32>
      %54 = arith.truncf %53 : vector<1x128xf32> to vector<1x128xbf16>
      %c0_34 = arith.constant 0 : index
      %c0_35 = arith.constant 0 : index
      %55 = vector.load %arg7[%c0_34, %c0_35] : memref<128x64xbf16, #tpu.memory_space<vmem>>, vector<128x64xbf16>
      %cst_36 = arith.constant dense<0.000000e+00> : vector<1x64xf32>
      %56 = tpu.matmul %54, %55, %cst_36 {dimension_numbers = #tpu.dot_dimension_numbers<[1], [0], [0], [1], [0, 0, 1, 1], [], []>} : vector<1x128xbf16>, vector<128x64xbf16>, vector<1x64xf32> -> vector<1x64xf32>
      %c0_37 = arith.constant 0 : index
      %c0_38 = arith.constant 0 : index
      %57 = vector.load %arg8[%c0_37, %c0_38] : memref<1x64xf32, #tpu.memory_space<vmem>>, vector<1x64xf32>
      %58 = arith.addf %56, %57 : vector<1x64xf32>
      %59 = math.tanh %58 : vector<1x64xf32>
      %60 = arith.subf %58, %59 : vector<1x64xf32>
      %c0_39 = arith.constant 0 : index
      %c0_40 = arith.constant 0 : index
      %61 = vector.load %arg9[%c0_39, %c0_40] : memref<1x64xf32, #tpu.memory_space<vmem>>, vector<1x64xf32>
      %62 = arith.mulf %60, %61 : vector<1x64xf32>
      %cst_41 = arith.constant dense<0.000000e+00> : vector<1xf32>
      %63 = vector.multi_reduction <add>, %62, %cst_41 [1] : vector<1x64xf32> to vector<1xf32>
      %64 = vector.shape_cast %63 : vector<1xf32> to vector<1x1xf32>
      %c0_42 = arith.constant 0 : index
      %c0_43 = arith.constant 0 : index
      %65 = vector.load %arg10[%c0_42, %c0_43] : memref<1x1xf32, #tpu.memory_space<vmem>>, vector<1x1xf32>
      %66 = arith.addf %64, %65 : vector<1x1xf32>
      %67 = math.absf %66 : vector<1x1xf32>
      %cst_44 = arith.constant 0.000000e+00 : f32
      %68 = vector.broadcast %cst_44 : f32 to vector<1x1xf32>
      %69 = arith.subf %68, %67 : vector<1x1xf32>
      %70 = math.exp %69 : vector<1x1xf32>
      %cst_45 = arith.constant 0.000000e+00 : f32
      %71 = vector.broadcast %cst_45 : f32 to vector<1x1xf32>
      %72 = arith.cmpf oge, %66, %71 : vector<1x1xf32>
      %cst_46 = arith.constant 1.000000e+00 : f32
      %73 = vector.broadcast %cst_46 : f32 to vector<1x1xf32>
      %74 = arith.addf %73, %70 : vector<1x1xf32>
      %cst_47 = arith.constant 1.000000e+00 : f32
      %75 = vector.broadcast %cst_47 : f32 to vector<1x1xf32>
      %76 = arith.divf %75, %74 : vector<1x1xf32>
      %cst_48 = arith.constant 1.000000e+00 : f32
      %77 = vector.broadcast %cst_48 : f32 to vector<1x1xf32>
      %78 = arith.addf %77, %70 : vector<1x1xf32>
      %79 = arith.divf %70, %78 : vector<1x1xf32>
      %80 = arith.select %72, %76, %79 : vector<1x1xi1>, vector<1x1xf32>
      %c0_49 = arith.constant 0 : index
      %c0_50 = arith.constant 0 : index
      %81 = vector.load %arg16[%c0_49, %c0_50] : memref<1x1xf32, #tpu.memory_space<vmem>>, vector<1x1xf32>
      tpu.vector_store %arg16[%c0_49, %c0_50], %80 {strides = array<i32>} : memref<1x1xf32, #tpu.memory_space<vmem>>, vector<1x1xf32>,
      %c0_51 = arith.constant 0 : index
      %c0_52 = arith.constant 0 : index
      %82 = vector.load %arg11[%c0_51, %c0_52] : memref<128x256xbf16, #tpu.memory_space<vmem>>, vector<128x256xbf16>
      %cst_53 = arith.constant dense<0.000000e+00> : vector<1x256xf32>
      %83 = tpu.matmul %54, %82, %cst_53 {dimension_numbers = #tpu.dot_dimension_numbers<[1], [0], [0], [1], [0, 0, 1, 1], [], []>} : vector<1x128xbf16>, vector<128x256xbf16>, vector<1x256xf32> -> vector<1x256xf32>
      %c0_54 = arith.constant 0 : index
      %c0_55 = arith.constant 0 : index
      %84 = vector.load %arg12[%c0_54, %c0_55] : memref<1x256xf32, #tpu.memory_space<vmem>>, vector<1x256xf32>
      %85 = arith.addf %83, %84 : vector<1x256xf32>
      %cst_56 = arith.constant 0.000000e+00 : f32
      %86 = vector.broadcast %cst_56 : f32 to vector<1x256xf32>
      %87 = arith.maximumf %85, %86 : vector<1x256xf32>
      %88 = math.absf %85 : vector<1x256xf32>
      %cst_57 = arith.constant 0.000000e+00 : f32
      %89 = vector.broadcast %cst_57 : f32 to vector<1x256xf32>
      %90 = arith.subf %89, %88 : vector<1x256xf32>
      %91 = math.exp %90 : vector<1x256xf32>
      %92 = math.log1p %91 : vector<1x256xf32>
      %93 = arith.addf %87, %92 : vector<1x256xf32>
      %94 = arith.truncf %93 : vector<1x256xf32> to vector<1x256xbf16>
      %c0_58 = arith.constant 0 : index
      %c0_59 = arith.constant 0 : index
      %95 = vector.load %arg18[%c0_58, %c0_59] : memref<1x256xbf16, #tpu.memory_space<vmem>>, vector<1x256xbf16>
      tpu.vector_store %arg18[%c0_58, %c0_59], %94 {strides = array<i32>} : memref<1x256xbf16, #tpu.memory_space<vmem>>, vector<1x256xbf16>,
    } else {
    }
    %c0 = arith.constant 0 : index
    %c0_1 = arith.constant 0 : index
    %3 = vector.load %arg18[%c0, %c0_1] : memref<1x256xbf16, #tpu.memory_space<vmem>>, vector<1x256xbf16>
    %4 = vector.shape_cast %3 : vector<1x256xbf16> to vector<1x1x256xbf16>
    %5 = vector.shape_cast %4 : vector<1x1x256xbf16> to vector<1x1x256xbf16>
    %6 = vector.broadcast %5 : vector<1x1x256xbf16> to vector<25x1x256xbf16>
    %c0_2 = arith.constant 0 : index
    %c0_3 = arith.constant 0 : index
    %c0_4 = arith.constant 0 : index
    %7 = vector.load %arg13[%c0_2, %c0_3, %c0_4] : memref<25x256x50xi8, #tpu.memory_space<vmem>>, vector<25x256x50xi8>
    %8 = arith.sitofp %7 : vector<25x256x50xi8> to vector<25x256x50xbf16>
    "tpu.trace_start"() <{level = 10 : i32, message = "rik,rkc->ric"}> : () -> ()
    %cst = arith.constant dense<0.000000e+00> : vector<25x1x50xf32>
    %9 = tpu.matmul %6, %8, %cst {dimension_numbers = #tpu.dot_dimension_numbers<[2], [1], [1], [2], [0, 0, 0, 1, 1, 2], [0], [0]>} : vector<25x1x256xbf16>, vector<25x256x50xbf16>, vector<25x1x50xf32> -> vector<25x1x50xf32>
    "tpu.trace_stop"() : () -> ()
    %c0_5 = arith.constant 0 : index
    %c0_6 = arith.constant 0 : index
    %c0_7 = arith.constant 0 : index
    %10 = vector.load %arg14[%c0_5, %c0_6, %c0_7] : memref<25x1x50xf32, #tpu.memory_space<vmem>>, vector<25x1x50xf32>
    %11 = arith.mulf %9, %10 : vector<25x1x50xf32>
    %c0_8 = arith.constant 0 : index
    %c0_9 = arith.constant 0 : index
    %c0_10 = arith.constant 0 : index
    %12 = vector.load %arg15[%c0_8, %c0_9, %c0_10] : memref<25x1x50xf32, #tpu.memory_space<vmem>>, vector<25x1x50xf32>
    %13 = arith.addf %11, %12 : vector<25x1x50xf32>
    %cst_11 = arith.constant dense<0xFF800000> : vector<25x1xf32>
    %14 = vector.multi_reduction <maximumf>, %13, %cst_11 [2] : vector<25x1x50xf32> to vector<25x1xf32>
    %15 = vector.shape_cast %14 : vector<25x1xf32> to vector<25x1x1xf32>
    %16 = vector.broadcast %15 : vector<25x1x1xf32> to vector<25x1x50xf32>
    %17 = arith.subf %13, %16 : vector<25x1x50xf32>
    %18 = math.exp %17 : vector<25x1x50xf32>
    %cst_12 = arith.constant dense<0.000000e+00> : vector<25x1xf32>
    %19 = vector.multi_reduction <add>, %18, %cst_12 [2] : vector<25x1x50xf32> to vector<25x1xf32>
    %20 = vector.shape_cast %19 : vector<25x1xf32> to vector<25x1x1xf32>
    %21 = vector.broadcast %20 : vector<25x1x1xf32> to vector<25x1x50xf32>
    %22 = arith.divf %18, %21 : vector<25x1x50xf32>
    %c0_13 = arith.constant 0 : index
    %c0_14 = arith.constant 0 : index
    %c0_15 = arith.constant 0 : index
    %23 = vector.load %arg17[%c0_13, %c0_14, %c0_15] : memref<25x1x50xf32, #tpu.memory_space<vmem>>, vector<25x1x50xf32>
    tpu.vector_store %arg17[%c0_13, %c0_14, %c0_15], %22 {strides = array<i32>} : memref<25x1x50xf32, #tpu.memory_space<vmem>>, vector<25x1x50xf32>,
    return
  }
  func.func @transform_0(%arg0: i32) -> (i32, i32) {
    %c0_i32 = arith.constant 0 : i32
    %c0_i32_0 = arith.constant 0 : i32
    %c0_i32_1 = arith.constant 0 : i32
    return %c0_i32, %c0_i32_0 : i32, i32
  }
  func.func @transform_1(%arg0: i32) -> (i32, i32) {
    %c0_i32 = arith.constant 0 : i32
    %c0_i32_0 = arith.constant 0 : i32
    %c0_i32_1 = arith.constant 0 : i32
    return %c0_i32, %c0_i32_0 : i32, i32
  }
  func.func @transform_2(%arg0: i32) -> (i32, i32) {
    %c0_i32 = arith.constant 0 : i32
    %c0_i32_0 = arith.constant 0 : i32
    %c0_i32_1 = arith.constant 0 : i32
    return %c0_i32, %c0_i32_0 : i32, i32
  }
  func.func @transform_3(%arg0: i32) -> (i32, i32) {
    %c0_i32 = arith.constant 0 : i32
    %c0_i32_0 = arith.constant 0 : i32
    %c0_i32_1 = arith.constant 0 : i32
    return %c0_i32, %c0_i32_0 : i32, i32
  }
  func.func @transform_4(%arg0: i32) -> (i32, i32) {
    %c0_i32 = arith.constant 0 : i32
    %c0_i32_0 = arith.constant 0 : i32
    %c0_i32_1 = arith.constant 0 : i32
    return %c0_i32, %c0_i32_0 : i32, i32
  }
  func.func @transform_5(%arg0: i32) -> (i32, i32) {
    %c0_i32 = arith.constant 0 : i32
    %c0_i32_0 = arith.constant 0 : i32
    %c0_i32_1 = arith.constant 0 : i32
    return %c0_i32, %c0_i32_0 : i32, i32
  }
  func.func @transform_6(%arg0: i32) -> (i32, i32) {
    %c0_i32 = arith.constant 0 : i32
    %c0_i32_0 = arith.constant 0 : i32
    %c0_i32_1 = arith.constant 0 : i32
    return %c0_i32, %c0_i32_0 : i32, i32
  }
  func.func @transform_7(%arg0: i32) -> (i32, i32) {
    %c0_i32 = arith.constant 0 : i32
    %c0_i32_0 = arith.constant 0 : i32
    %c0_i32_1 = arith.constant 0 : i32
    return %c0_i32, %c0_i32_0 : i32, i32
  }
  func.func @transform_8(%arg0: i32) -> (i32, i32) {
    %c0_i32 = arith.constant 0 : i32
    %c0_i32_0 = arith.constant 0 : i32
    %c0_i32_1 = arith.constant 0 : i32
    return %c0_i32, %c0_i32_0 : i32, i32
  }
  func.func @transform_9(%arg0: i32) -> (i32, i32) {
    %c0_i32 = arith.constant 0 : i32
    %c0_i32_0 = arith.constant 0 : i32
    %c0_i32_1 = arith.constant 0 : i32
    return %c0_i32, %c0_i32_0 : i32, i32
  }
  func.func @transform_10(%arg0: i32) -> (i32, i32) {
    %c0_i32 = arith.constant 0 : i32
    %c0_i32_0 = arith.constant 0 : i32
    %c0_i32_1 = arith.constant 0 : i32
    return %c0_i32, %c0_i32_0 : i32, i32
  }
  func.func @transform_11(%arg0: i32) -> (i32, i32) {
    %c0_i32 = arith.constant 0 : i32
    %c0_i32_0 = arith.constant 0 : i32
    %c0_i32_1 = arith.constant 0 : i32
    return %c0_i32, %c0_i32_0 : i32, i32
  }
  func.func @transform_12(%arg0: i32) -> (i32, i32, i32) {
    %c0_i32 = arith.constant 0 : i32
    %c0_i32_0 = arith.constant 0 : i32
    %c0_i32_1 = arith.constant 0 : i32
    return %arg0, %c0_i32, %c0_i32_0 : i32, i32, i32
  }
  func.func @transform_13(%arg0: i32) -> (i32, i32, i32) {
    %c0_i32 = arith.constant 0 : i32
    %c0_i32_0 = arith.constant 0 : i32
    %c0_i32_1 = arith.constant 0 : i32
    return %arg0, %c0_i32, %c0_i32_0 : i32, i32, i32
  }
  func.func @transform_14(%arg0: i32) -> (i32, i32, i32) {
    %c0_i32 = arith.constant 0 : i32
    %c0_i32_0 = arith.constant 0 : i32
    %c0_i32_1 = arith.constant 0 : i32
    return %arg0, %c0_i32, %c0_i32_0 : i32, i32, i32
  }
  func.func @transform_15(%arg0: i32) -> (i32, i32) {
    %c0_i32 = arith.constant 0 : i32
    %c0_i32_0 = arith.constant 0 : i32
    %c0_i32_1 = arith.constant 0 : i32
    return %c0_i32, %c0_i32_0 : i32, i32
  }
  func.func @transform_16(%arg0: i32) -> (i32, i32, i32) {
    %c0_i32 = arith.constant 0 : i32
    %c0_i32_0 = arith.constant 0 : i32
    %c0_i32_1 = arith.constant 0 : i32
    return %arg0, %c0_i32, %c0_i32_0 : i32, i32, i32
  }
}

</mosaic_0001>

<llo_original>
// kernel: energy_50_rl_forward.1
$region0: #{energy_50_rl_forward.1}
  #allocation0 [shape = 'u32[]', space=smem, size = 0x4, offset = 0x4, fixed_abs, tag = 'smem constant byte address 0x4 - core index']
  #allocation1 [shape = 'u32[144,128]{1,0:T(1,128)}', space=vmem, size = 0x12000, scoped, tag = 'internal scratch']
  #allocation2 [shape = 'bf16[1,256]{1,0:T(2,128)(2,1)}', space=vmem, size = 0x400, scoped, tag = 'scratch operand']
  #allocation3 [shape = 'f32[1,1]{1,0:T(1,128)S(1)}', space=vmem, size = 0x200, scoped, tag = 'scoped memory for energy_50_rl_forward.1']
  %s0 = inlined_call_operand.vmem [shape: f32[1,2550], index: 0, kind: input, shape index: {}]
  %s1 = inlined_call_operand.vmem [shape: s8[2550,128], index: 1, kind: input, shape index: {}]
  %s2 = inlined_call_operand.vmem [shape: f32[1,128], index: 2, kind: input, shape index: {}]
  %s3 = inlined_call_operand.vmem [shape: f32[1,128], index: 3, kind: input, shape index: {}]
  %s4 = inlined_call_operand.vmem [shape: bf16[128,128], index: 4, kind: input, shape index: {}]
  %s5 = inlined_call_operand.vmem [shape: f32[1,128], index: 5, kind: input, shape index: {}]
  %s6 = inlined_call_operand.vmem [shape: bf16[128,64], index: 6, kind: input, shape index: {}]
  %s7 = inlined_call_operand.vmem [shape: f32[1,64], index: 7, kind: input, shape index: {}]
  %s8 = inlined_call_operand.vmem [shape: f32[1,64], index: 8, kind: input, shape index: {}]
  %s9 = inlined_call_operand.<no memory space> [shape: f32[1,1], index: 9, kind: input, shape index: {}]
  %s10 = inlined_call_operand.vmem [shape: bf16[128,256], index: 10, kind: input, shape index: {}]
  %s11 = inlined_call_operand.vmem [shape: f32[1,256], index: 11, kind: input, shape index: {}]
  %s12 = inlined_call_operand.vmem [shape: s8[50,256,50], index: 12, kind: input, shape index: {}]
  %s13 = inlined_call_operand.vmem [shape: f32[50,1,50], index: 13, kind: input, shape index: {}]
  %s14 = inlined_call_operand.vmem [shape: f32[50,1,50], index: 14, kind: input, shape index: {}]
  %s15 = inlined_call_operand.hbm [shape: f32[1,1], index: 15, kind: output, shape index: {0}]
  %s16 = inlined_call_operand.vmem [shape: f32[50,1,50], index: 16, kind: output, shape index: {1}]
  %17 = xla_tuple %s15, %s16
  %s18 = sld [smem:[#allocation0]]
  $region105: #{energy_50_rl_forward.1} parent=0
    _
  %s20 = ssub.s32 1, %s18
  %s21 = scalar_select 0, %s20, %s18
  %v22 = vstv %s9
  %23 = vst [vmem:[#allocation3] sm:$0x1] %v22
  $region1: #{energy_50_rl_forward.1} parent=0
    #allocation4 [shape = 'u8[512]{0}', space=vmem, size = 0x400, scoped, tag = 'output window, operand 0, single buffered']
    #allocation5 [shape = 's32[2]{0}', space=sflag, size = 0x8, scoped, tag = 'scoped memory for energy_50_rl_forward.1']
    %24 = vsyncpa [#allocation5], 0
    loop: start=0, step=1, limit=4
    $region2: #{energy_50_rl_forward.1} parent=1 // loop_pre_header
      _
    $region3: #{energy_50_rl_forward.1} parent=1 // loop_header
      %s26 = sphi 0, %s30
      %p27 = scmp.ge.s32.totalorder %s26, 4
      %s34 = sphi 0, %s34
      %s36 = sphi 0, %s34
      %s37 = sphi 0, %s36
      %s51 = sphi 0, %s37
      %s55 = sphi 0, %s55
      %s57 = sphi 0, %s55
      %s58 = sphi 0, %s57
      %s72 = sphi 0, %s58
      %s76 = sphi 0, %s76
      %s78 = sphi 0, %s76
      %s79 = sphi 0, %s78
      %s93 = sphi 0, %s79
      %s97 = sphi 0, %s97
      %s99 = sphi 0, %s97
      %s100 = sphi 0, %s99
      %s114 = sphi 0, %s100
      %s118 = sphi 0, %s118
      %s120 = sphi 0, %s118
      %s121 = sphi 0, %s120
      %s135 = sphi 0, %s121
      %s139 = sphi 0, %s139
      %s141 = sphi 0, %s139
      %s142 = sphi 0, %s141
      %s156 = sphi 0, %s142
      %s160 = sphi 0, %s160
      %s162 = sphi 0, %s160
      %s163 = sphi 0, %s162
      %s177 = sphi 0, %s163
      %s181 = sphi 0, %s181
      %s183 = sphi 0, %s181
      %s184 = sphi 0, %s183
      %s198 = sphi 0, %s184
      %s202 = sphi 0, %s202
      %s204 = sphi 0, %s202
      %s205 = sphi 0, %s204
      %s219 = sphi 0, %s205
      %s223 = sphi 0, %s223
      %s225 = sphi 0, %s223
      %s226 = sphi 0, %s225
      %s240 = sphi 0, %s226
      %s244 = sphi 0, %s244
      %s246 = sphi 0, %s244
      %s247 = sphi 0, %s246
      %s261 = sphi 0, %s247
      %s265 = sphi 0, %s265
      %s267 = sphi 0, %s265
      %s268 = sphi 0, %s267
      %s282 = sphi 0, %s268
      %s288 = sphi 0, %s290
      %s291 = sphi 0, %s288
      %s292 = sphi 0, %s291
      %s308 = sphi 0, %s292
      %s314 = sphi 0, %s316
      %s317 = sphi 0, %s314
      %s318 = sphi 0, %s317
      %s334 = sphi 0, %s318
      %s340 = sphi 0, %s342
      %s343 = sphi 0, %s340
      %s344 = sphi 0, %s343
      %s360 = sphi 0, %s344
      %s364 = sphi 0, %s364
      %s366 = sphi 0, %s364
      %s367 = sphi 0, %s366
      %s381 = sphi 0, %s367
      %s387 = sphi 0, %s389
      %s390 = sphi 0, %s387
      %s391 = sphi 0, %s390
      %s407 = sphi 0, %s391
    $region4: #{energy_50_rl_forward.1} parent=1 // loop_header_branch
      %29 = sbr.rel (%p27) target = $region8
    $region5: #{energy_50_rl_forward.1} parent=1 // loop_body
      %s31 = ssub.s32 %s26, 1
      %s32 = ssub.s32 %s26, 2
      %s33 = sadd.s32 %s26, 1
      %s35 = sadd.s32 %s34, 1
      %p38 = scmp.eq.s32.totalorder %s26, 1
      %p39 = scmp.ne.s32.totalorder %s34, %s36
      %p40 = scmp.eq.s32.totalorder %s26, 0
      %p41 = por %p39, %p40
      %p42 = scmp.ne.s32.totalorder %s34, %s36
      %p43 = scmp.eq.s32.totalorder %s31, 1
      %p44 = por %p42, %p43
      %p45 = scmp.ne.s32.totalorder %s36, %s37
      %p46 = scmp.eq.s32.totalorder %s31, 0
      %p47 = por %p45, %p46
      %p48 = scmp.ne.s32.totalorder %s36, %s37
      %p49 = scmp.eq.s32.totalorder %s32, 1
      %p50 = por %p48, %p49
      %p52 = scmp.ne.s32.totalorder %s37, %s51
      %p53 = scmp.eq.s32.totalorder %s32, 0
      %p54 = por %p52, %p53
      %s56 = sadd.s32 %s55, 1
      %p59 = scmp.eq.s32.totalorder %s26, 1
      %p60 = scmp.ne.s32.totalorder %s55, %s57
      %p61 = scmp.eq.s32.totalorder %s26, 0
      %p62 = por %p60, %p61
      %p63 = scmp.ne.s32.totalorder %s55, %s57
      %p64 = scmp.eq.s32.totalorder %s31, 1
      %p65 = por %p63, %p64
      %p66 = scmp.ne.s32.totalorder %s57, %s58
      %p67 = scmp.eq.s32.totalorder %s31, 0
      %p68 = por %p66, %p67
      %p69 = scmp.ne.s32.totalorder %s57, %s58
      %p70 = scmp.eq.s32.totalorder %s32, 1
      %p71 = por %p69, %p70
      %p73 = scmp.ne.s32.totalorder %s58, %s72
      %p74 = scmp.eq.s32.totalorder %s32, 0
      %p75 = por %p73, %p74
      %s77 = sadd.s32 %s76, 1
      %p80 = scmp.eq.s32.totalorder %s26, 1
      %p81 = scmp.ne.s32.totalorder %s76, %s78
      %p82 = scmp.eq.s32.totalorder %s26, 0
      %p83 = por %p81, %p82
      %p84 = scmp.ne.s32.totalorder %s76, %s78
      %p85 = scmp.eq.s32.totalorder %s31, 1
      %p86 = por %p84, %p85
      %p87 = scmp.ne.s32.totalorder %s78, %s79
      %p88 = scmp.eq.s32.totalorder %s31, 0
      %p89 = por %p87, %p88
      %p90 = scmp.ne.s32.totalorder %s78, %s79
      %p91 = scmp.eq.s32.totalorder %s32, 1
      %p92 = por %p90, %p91
      %p94 = scmp.ne.s32.totalorder %s79, %s93
      %p95 = scmp.eq.s32.totalorder %s32, 0
      %p96 = por %p94, %p95
      %s98 = sadd.s32 %s97, 1
      %p101 = scmp.eq.s32.totalorder %s26, 1
      %p102 = scmp.ne.s32.totalorder %s97, %s99
      %p103 = scmp.eq.s32.totalorder %s26, 0
      %p104 = por %p102, %p103
      %p105 = scmp.ne.s32.totalorder %s97, %s99
      %p106 = scmp.eq.s32.totalorder %s31, 1
      %p107 = por %p105, %p106
      %p108 = scmp.ne.s32.totalorder %s99, %s100
      %p109 = scmp.eq.s32.totalorder %s31, 0
      %p110 = por %p108, %p109
      %p111 = scmp.ne.s32.totalorder %s99, %s100
      %p112 = scmp.eq.s32.totalorder %s32, 1
      %p113 = por %p111, %p112
      %p115 = scmp.ne.s32.totalorder %s100, %s114
      %p116 = scmp.eq.s32.totalorder %s32, 0
      %p117 = por %p115, %p116
      %s119 = sadd.s32 %s118, 1
      %p122 = scmp.eq.s32.totalorder %s26, 1
      %p123 = scmp.ne.s32.totalorder %s118, %s120
      %p124 = scmp.eq.s32.totalorder %s26, 0
      %p125 = por %p123, %p124
      %p126 = scmp.ne.s32.totalorder %s118, %s120
      %p127 = scmp.eq.s32.totalorder %s31, 1
      %p128 = por %p126, %p127
      %p129 = scmp.ne.s32.totalorder %s120, %s121
      %p130 = scmp.eq.s32.totalorder %s31, 0
      %p131 = por %p129, %p130
      %p132 = scmp.ne.s32.totalorder %s120, %s121
      %p133 = scmp.eq.s32.totalorder %s32, 1
      %p134 = por %p132, %p133
      %p136 = scmp.ne.s32.totalorder %s121, %s135
      %p137 = scmp.eq.s32.totalorder %s32, 0
      %p138 = por %p136, %p137
      %s140 = sadd.s32 %s139, 1
      %p143 = scmp.eq.s32.totalorder %s26, 1
      %p144 = scmp.ne.s32.totalorder %s139, %s141
      %p145 = scmp.eq.s32.totalorder %s26, 0
      %p146 = por %p144, %p145
      %p147 = scmp.ne.s32.totalorder %s139, %s141
      %p148 = scmp.eq.s32.totalorder %s31, 1
      %p149 = por %p147, %p148
      %p150 = scmp.ne.s32.totalorder %s141, %s142
      %p151 = scmp.eq.s32.totalorder %s31, 0
      %p152 = por %p150, %p151
      %p153 = scmp.ne.s32.totalorder %s141, %s142
      %p154 = scmp.eq.s32.totalorder %s32, 1
      %p155 = por %p153, %p154
      %p157 = scmp.ne.s32.totalorder %s142, %s156
      %p158 = scmp.eq.s32.totalorder %s32, 0
      %p159 = por %p157, %p158
      %s161 = sadd.s32 %s160, 1
      %p164 = scmp.eq.s32.totalorder %s26, 1
      %p165 = scmp.ne.s32.totalorder %s160, %s162
      %p166 = scmp.eq.s32.totalorder %s26, 0
      %p167 = por %p165, %p166
      %p168 = scmp.ne.s32.totalorder %s160, %s162
      %p169 = scmp.eq.s32.totalorder %s31, 1
      %p170 = por %p168, %p169
      %p171 = scmp.ne.s32.totalorder %s162, %s163
      %p172 = scmp.eq.s32.totalorder %s31, 0
      %p173 = por %p171, %p172
      %p174 = scmp.ne.s32.totalorder %s162, %s163
      %p175 = scmp.eq.s32.totalorder %s32, 1
      %p176 = por %p174, %p175
      %p178 = scmp.ne.s32.totalorder %s163, %s177
      %p179 = scmp.eq.s32.totalorder %s32, 0
      %p180 = por %p178, %p179
      %s182 = sadd.s32 %s181, 1
      %p185 = scmp.eq.s32.totalorder %s26, 1
      %p186 = scmp.ne.s32.totalorder %s181, %s183
      %p187 = scmp.eq.s32.totalorder %s26, 0
      %p188 = por %p186, %p187
      %p189 = scmp.ne.s32.totalorder %s181, %s183
      %p190 = scmp.eq.s32.totalorder %s31, 1
      %p191 = por %p189, %p190
      %p192 = scmp.ne.s32.totalorder %s183, %s184
      %p193 = scmp.eq.s32.totalorder %s31, 0
      %p194 = por %p192, %p193
      %p195 = scmp.ne.s32.totalorder %s183, %s184
      %p196 = scmp.eq.s32.totalorder %s32, 1
      %p197 = por %p195, %p196
      %p199 = scmp.ne.s32.totalorder %s184, %s198
      %p200 = scmp.eq.s32.totalorder %s32, 0
      %p201 = por %p199, %p200
      %s203 = sadd.s32 %s202, 1
      %p206 = scmp.eq.s32.totalorder %s26, 1
      %p207 = scmp.ne.s32.totalorder %s202, %s204
      %p208 = scmp.eq.s32.totalorder %s26, 0
      %p209 = por %p207, %p208
      %p210 = scmp.ne.s32.totalorder %s202, %s204
      %p211 = scmp.eq.s32.totalorder %s31, 1
      %p212 = por %p210, %p211
      %p213 = scmp.ne.s32.totalorder %s204, %s205
      %p214 = scmp.eq.s32.totalorder %s31, 0
      %p215 = por %p213, %p214
      %p216 = scmp.ne.s32.totalorder %s204, %s205
      %p217 = scmp.eq.s32.totalorder %s32, 1
      %p218 = por %p216, %p217
      %p220 = scmp.ne.s32.totalorder %s205, %s219
      %p221 = scmp.eq.s32.totalorder %s32, 0
      %p222 = por %p220, %p221
      %s224 = sadd.s32 %s223, 1
      %p227 = scmp.eq.s32.totalorder %s26, 1
      %p228 = scmp.ne.s32.totalorder %s223, %s225
      %p229 = scmp.eq.s32.totalorder %s26, 0
      %p230 = por %p228, %p229
      %p231 = scmp.ne.s32.totalorder %s223, %s225
      %p232 = scmp.eq.s32.totalorder %s31, 1
      %p233 = por %p231, %p232
      %p234 = scmp.ne.s32.totalorder %s225, %s226
      %p235 = scmp.eq.s32.totalorder %s31, 0
      %p236 = por %p234, %p235
      %p237 = scmp.ne.s32.totalorder %s225, %s226
      %p238 = scmp.eq.s32.totalorder %s32, 1
      %p239 = por %p237, %p238
      %p241 = scmp.ne.s32.totalorder %s226, %s240
      %p242 = scmp.eq.s32.totalorder %s32, 0
      %p243 = por %p241, %p242
      %s245 = sadd.s32 %s244, 1
      %p248 = scmp.eq.s32.totalorder %s26, 1
      %p249 = scmp.ne.s32.totalorder %s244, %s246
      %p250 = scmp.eq.s32.totalorder %s26, 0
      %p251 = por %p249, %p250
      %p252 = scmp.ne.s32.totalorder %s244, %s246
      %p253 = scmp.eq.s32.totalorder %s31, 1
      %p254 = por %p252, %p253
      %p255 = scmp.ne.s32.totalorder %s246, %s247
      %p256 = scmp.eq.s32.totalorder %s31, 0
      %p257 = por %p255, %p256
      %p258 = scmp.ne.s32.totalorder %s246, %s247
      %p259 = scmp.eq.s32.totalorder %s32, 1
      %p260 = por %p258, %p259
      %p262 = scmp.ne.s32.totalorder %s247, %s261
      %p263 = scmp.eq.s32.totalorder %s32, 0
      %p264 = por %p262, %p263
      %s266 = sadd.s32 %s265, 1
      %p269 = scmp.eq.s32.totalorder %s26, 1
      %p270 = scmp.ne.s32.totalorder %s265, %s267
      %p271 = scmp.eq.s32.totalorder %s26, 0
      %p272 = por %p270, %p271
      %p273 = scmp.ne.s32.totalorder %s265, %s267
      %p274 = scmp.eq.s32.totalorder %s31, 1
      %p275 = por %p273, %p274
      %p276 = scmp.ne.s32.totalorder %s267, %s268
      %p277 = scmp.eq.s32.totalorder %s31, 0
      %p278 = por %p276, %p277
      %p279 = scmp.ne.s32.totalorder %s267, %s268
      %p280 = scmp.eq.s32.totalorder %s32, 1
      %p281 = por %p279, %p280
      %p283 = scmp.ne.s32.totalorder %s268, %s282
      %p284 = scmp.eq.s32.totalorder %s32, 0
      %p285 = por %p283, %p284
      %s286 = ssub.s32 %s26, %s33
      %p287 = scmp.eq.s32.totalorder %s286, 0
      %s289 = sadd.s32 %s288, 1
      %s290 = scalar_select %p287, %s288, %s289
      %p293 = pneg %p287
      %p294 = scmp.eq.s32.totalorder %s26, 1
      %p295 = por %p293, %p294
      %p296 = scmp.ne.s32.totalorder %s288, %s291
      %p297 = scmp.eq.s32.totalorder %s26, 0
      %p298 = por %p296, %p297
      %p299 = scmp.ne.s32.totalorder %s288, %s291
      %p300 = scmp.eq.s32.totalorder %s31, 1
      %p301 = por %p299, %p300
      %p302 = scmp.ne.s32.totalorder %s291, %s292
      %p303 = scmp.eq.s32.totalorder %s31, 0
      %p304 = por %p302, %p303
      %p305 = scmp.ne.s32.totalorder %s291, %s292
      %p306 = scmp.eq.s32.totalorder %s32, 1
      %p307 = por %p305, %p306
      %p309 = scmp.ne.s32.totalorder %s292, %s308
      %p310 = scmp.eq.s32.totalorder %s32, 0
      %p311 = por %p309, %p310
      %s312 = ssub.s32 %s26, %s33
      %p313 = scmp.eq.s32.totalorder %s312, 0
      %s315 = sadd.s32 %s314, 1
      %s316 = scalar_select %p313, %s314, %s315
      %p319 = pneg %p313
      %p320 = scmp.eq.s32.totalorder %s26, 1
      %p321 = por %p319, %p320
      %p322 = scmp.ne.s32.totalorder %s314, %s317
      %p323 = scmp.eq.s32.totalorder %s26, 0
      %p324 = por %p322, %p323
      %p325 = scmp.ne.s32.totalorder %s314, %s317
      %p326 = scmp.eq.s32.totalorder %s31, 1
      %p327 = por %p325, %p326
      %p328 = scmp.ne.s32.totalorder %s317, %s318
      %p329 = scmp.eq.s32.totalorder %s31, 0
      %p330 = por %p328, %p329
      %p331 = scmp.ne.s32.totalorder %s317, %s318
      %p332 = scmp.eq.s32.totalorder %s32, 1
      %p333 = por %p331, %p332
      %p335 = scmp.ne.s32.totalorder %s318, %s334
      %p336 = scmp.eq.s32.totalorder %s32, 0
      %p337 = por %p335, %p336
      %s338 = ssub.s32 %s26, %s33
      %p339 = scmp.eq.s32.totalorder %s338, 0
      %s341 = sadd.s32 %s340, 1
      %s342 = scalar_select %p339, %s340, %s341
      %p345 = pneg %p339
      %p346 = scmp.eq.s32.totalorder %s26, 1
      %p347 = por %p345, %p346
      %p348 = scmp.ne.s32.totalorder %s340, %s343
      %p349 = scmp.eq.s32.totalorder %s26, 0
      %p350 = por %p348, %p349
      %p351 = scmp.ne.s32.totalorder %s340, %s343
      %p352 = scmp.eq.s32.totalorder %s31, 1
      %p353 = por %p351, %p352
      %p354 = scmp.ne.s32.totalorder %s343, %s344
      %p355 = scmp.eq.s32.totalorder %s31, 0
      %p356 = por %p354, %p355
      %p357 = scmp.ne.s32.totalorder %s343, %s344
      %p358 = scmp.eq.s32.totalorder %s32, 1
      %p359 = por %p357, %p358
      %p361 = scmp.ne.s32.totalorder %s344, %s360
      %p362 = scmp.eq.s32.totalorder %s32, 0
      %p363 = por %p361, %p362
      %s365 = sadd.s32 %s364, 1
      %p368 = scmp.eq.s32.totalorder %s26, 1
      %p369 = scmp.ne.s32.totalorder %s364, %s366
      %p370 = scmp.eq.s32.totalorder %s26, 0
      %p371 = por %p369, %p370
      %p372 = scmp.ne.s32.totalorder %s364, %s366
      %p373 = scmp.eq.s32.totalorder %s31, 1
      %p374 = por %p372, %p373
      %p375 = scmp.ne.s32.totalorder %s366, %s367
      %p376 = scmp.eq.s32.totalorder %s31, 0
      %p377 = por %p375, %p376
      %p378 = scmp.ne.s32.totalorder %s366, %s367
      %p379 = scmp.eq.s32.totalorder %s32, 1
      %p380 = por %p378, %p379
      %p382 = scmp.ne.s32.totalorder %s367, %s381
      %p383 = scmp.eq.s32.totalorder %s32, 0
      %p384 = por %p382, %p383
      %s385 = ssub.s32 %s26, %s33
      %p386 = scmp.eq.s32.totalorder %s385, 0
      %s388 = sadd.s32 %s387, 1
      %s389 = scalar_select %p386, %s387, %s388
      %p392 = pneg %p386
      %p393 = scmp.eq.s32.totalorder %s26, 1
      %p394 = por %p392, %p393
      %p395 = scmp.ne.s32.totalorder %s387, %s390
      %p396 = scmp.eq.s32.totalorder %s26, 0
      %p397 = por %p395, %p396
      %p398 = scmp.ne.s32.totalorder %s387, %s390
      %p399 = scmp.eq.s32.totalorder %s31, 1
      %p400 = por %p398, %p399
      %p401 = scmp.ne.s32.totalorder %s390, %s391
      %p402 = scmp.eq.s32.totalorder %s31, 0
      %p403 = por %p401, %p402
      %p404 = scmp.ne.s32.totalorder %s390, %s391
      %p405 = scmp.eq.s32.totalorder %s32, 1
      %p406 = por %p404, %p405
      %p408 = scmp.ne.s32.totalorder %s391, %s407
      %p409 = scmp.eq.s32.totalorder %s32, 0
      %p410 = por %p408, %p409
      %p411 = scmp.le.s32.totalorder 1, %s26
      %p412 = scmp.lt.s32.totalorder %s26, 3
      %p413 = pnand %p411, %p412
      %p414 = pneg %p413
      // Predicated region
      $region9: #{energy_50_rl_forward.1} parent=5 // pred_check
        _
      $region10: #{energy_50_rl_forward.1} parent=5 // pred_check_branch
        %416 = sbr.rel (%p413) target = $region12
      $region11: #{energy_50_rl_forward.1} parent=5 // pred_region
        %s417 = ssub.s32 %s26, 1
        // Predicated region
        $region13: #{energy_50_rl_forward.1} parent=11 // pred_check
          %p418 = pneg %p47
        $region14: #{energy_50_rl_forward.1} parent=11 // pred_check_branch
          %420 = sbr.rel (%p418) target = $region16
        $region15: #{energy_50_rl_forward.1} parent=11 // pred_region
          _
        $region16: #{energy_50_rl_forward.1} parent=11 // pred_fallthru
          _
        // Predicated region
        $region17: #{energy_50_rl_forward.1} parent=11 // pred_check
          %p421 = pneg %p68
        $region18: #{energy_50_rl_forward.1} parent=11 // pred_check_branch
          %423 = sbr.rel (%p421) target = $region20
        $region19: #{energy_50_rl_forward.1} parent=11 // pred_region
          _
        $region20: #{energy_50_rl_forward.1} parent=11 // pred_fallthru
          _
        // Predicated region
        $region21: #{energy_50_rl_forward.1} parent=11 // pred_check
          %p424 = pneg %p89
        $region22: #{energy_50_rl_forward.1} parent=11 // pred_check_branch
          %426 = sbr.rel (%p424) target = $region24
        $region23: #{energy_50_rl_forward.1} parent=11 // pred_region
          _
        $region24: #{energy_50_rl_forward.1} parent=11 // pred_fallthru
          _
        // Predicated region
        $region25: #{energy_50_rl_forward.1} parent=11 // pred_check
          %p427 = pneg %p110
        $region26: #{energy_50_rl_forward.1} parent=11 // pred_check_branch
          %429 = sbr.rel (%p427) target = $region28
        $region27: #{energy_50_rl_forward.1} parent=11 // pred_region
          _
        $region28: #{energy_50_rl_forward.1} parent=11 // pred_fallthru
          _
        // Predicated region
        $region29: #{energy_50_rl_forward.1} parent=11 // pred_check
          %p430 = pneg %p131
        $region30: #{energy_50_rl_forward.1} parent=11 // pred_check_branch
          %432 = sbr.rel (%p430) target = $region32
        $region31: #{energy_50_rl_forward.1} parent=11 // pred_region
          _
        $region32: #{energy_50_rl_forward.1} parent=11 // pred_fallthru
          _
        // Predicated region
        $region33: #{energy_50_rl_forward.1} parent=11 // pred_check
          %p433 = pneg %p152
        $region34: #{energy_50_rl_forward.1} parent=11 // pred_check_branch
          %435 = sbr.rel (%p433) target = $region36
        $region35: #{energy_50_rl_forward.1} parent=11 // pred_region
          _
        $region36: #{energy_50_rl_forward.1} parent=11 // pred_fallthru
          _
        // Predicated region
        $region37: #{energy_50_rl_forward.1} parent=11 // pred_check
          %p436 = pneg %p173
        $region38: #{energy_50_rl_forward.1} parent=11 // pred_check_branch
          %438 = sbr.rel (%p436) target = $region40
        $region39: #{energy_50_rl_forward.1} parent=11 // pred_region
          _
        $region40: #{energy_50_rl_forward.1} parent=11 // pred_fallthru
          _
        // Predicated region
        $region41: #{energy_50_rl_forward.1} parent=11 // pred_check
          %p439 = pneg %p194
        $region42: #{energy_50_rl_forward.1} parent=11 // pred_check_branch
          %441 = sbr.rel (%p439) target = $region44
        $region43: #{energy_50_rl_forward.1} parent=11 // pred_region
          _
        $region44: #{energy_50_rl_forward.1} parent=11 // pred_fallthru
          _
        // Predicated region
        $region45: #{energy_50_rl_forward.1} parent=11 // pred_check
          %p442 = pneg %p215
        $region46: #{energy_50_rl_forward.1} parent=11 // pred_check_branch
          %444 = sbr.rel (%p442) target = $region48
        $region47: #{energy_50_rl_forward.1} parent=11 // pred_region
          _
        $region48: #{energy_50_rl_forward.1} parent=11 // pred_fallthru
          _
        // Predicated region
        $region49: #{energy_50_rl_forward.1} parent=11 // pred_check
          %p445 = pneg %p236
        $region50: #{energy_50_rl_forward.1} parent=11 // pred_check_branch
          %447 = sbr.rel (%p445) target = $region52
        $region51: #{energy_50_rl_forward.1} parent=11 // pred_region
          _
        $region52: #{energy_50_rl_forward.1} parent=11 // pred_fallthru
          _
        // Predicated region
        $region53: #{energy_50_rl_forward.1} parent=11 // pred_check
          %p448 = pneg %p257
        $region54: #{energy_50_rl_forward.1} parent=11 // pred_check_branch
          %450 = sbr.rel (%p448) target = $region56
        $region55: #{energy_50_rl_forward.1} parent=11 // pred_region
          _
        $region56: #{energy_50_rl_forward.1} parent=11 // pred_fallthru
          _
        // Predicated region
        $region57: #{energy_50_rl_forward.1} parent=11 // pred_check
          %p451 = pneg %p278
        $region58: #{energy_50_rl_forward.1} parent=11 // pred_check_branch
          %453 = sbr.rel (%p451) target = $region60
        $region59: #{energy_50_rl_forward.1} parent=11 // pred_region
          _
        $region60: #{energy_50_rl_forward.1} parent=11 // pred_fallthru
          _
      $region12: #{energy_50_rl_forward.1} parent=5 // pred_fallthru
        _
      %p454 = scmp.lt.s32.totalorder %s26, 2
      // Predicated region
      $region61: #{energy_50_rl_forward.1} parent=5 // pred_check
        %p455 = pneg %p454
      $region62: #{energy_50_rl_forward.1} parent=5 // pred_check_branch
        %457 = sbr.rel (%p455) target = $region64
      $region63: #{energy_50_rl_forward.1} parent=5 // pred_region
        // Predicated region
        $region65: #{energy_50_rl_forward.1} parent=63 // pred_check
          %p458 = pneg %p298
        $region66: #{energy_50_rl_forward.1} parent=63 // pred_check_branch
          %460 = sbr.rel (%p458) target = $region68
        $region67: #{energy_50_rl_forward.1} parent=63 // pred_region
          %s461 = smul.u32 25, %s26
          %p462 = scmp.lt.s32.totalorder %s461, 49
          %s463 = scalar_select %p462, %s461, 49
          %s464 = smul.addr %s463, 8
          %s465 = smul.addr %s464, 8
          %s466 = scalar_lea.vmem %s12, %s465
          %s467 = smul.u32 25, %s26
        $region68: #{energy_50_rl_forward.1} parent=63 // pred_fallthru
          _
        // Predicated region
        $region69: #{energy_50_rl_forward.1} parent=63 // pred_check
          %p468 = pneg %p324
        $region70: #{energy_50_rl_forward.1} parent=63 // pred_check_branch
          %470 = sbr.rel (%p468) target = $region72
        $region71: #{energy_50_rl_forward.1} parent=63 // pred_region
          %s471 = smul.u32 25, %s26
          %p472 = scmp.lt.s32.totalorder %s471, 49
          %s473 = scalar_select %p472, %s471, 49
          %s474 = scalar_lea.vmem %s13, %s473
          %s475 = smul.u32 25, %s26
        $region72: #{energy_50_rl_forward.1} parent=63 // pred_fallthru
          _
        // Predicated region
        $region73: #{energy_50_rl_forward.1} parent=63 // pred_check
          %p476 = pneg %p350
        $region74: #{energy_50_rl_forward.1} parent=63 // pred_check_branch
          %478 = sbr.rel (%p476) target = $region76
        $region75: #{energy_50_rl_forward.1} parent=63 // pred_region
          %s479 = smul.u32 25, %s26
          %p480 = scmp.lt.s32.totalorder %s479, 49
          %s481 = scalar_select %p480, %s479, 49
          %s482 = scalar_lea.vmem %s14, %s481
          %s483 = smul.u32 25, %s26
        $region76: #{energy_50_rl_forward.1} parent=63 // pred_fallthru
          _
      $region64: #{energy_50_rl_forward.1} parent=5 // pred_fallthru
        _
      %p484 = scmp.le.s32.totalorder 1, %s26
      %p485 = scmp.lt.s32.totalorder %s26, 3
      %p486 = pnand %p484, %p485
      %p487 = pneg %p486
      // Predicated region
      $region77: #{energy_50_rl_forward.1} parent=5 // pred_check
        _
      $region78: #{energy_50_rl_forward.1} parent=5 // pred_check_branch
        %489 = sbr.rel (%p486) target = $region80
      $region79: #{energy_50_rl_forward.1} parent=5 // pred_region
        %s490 = ssub.s32 %s26, 1
        %p491 = pneg %p47
        %p492 = pneg %p44
        %p493 = pneg %p68
        %p494 = pneg %p65
        %p495 = pneg %p89
        %p496 = pneg %p86
        %p497 = pneg %p110
        %p498 = pneg %p107
        %p499 = pneg %p131
        %p500 = pneg %p128
        %p501 = pneg %p152
        %p502 = pneg %p149
        %p503 = pneg %p173
        %p504 = pneg %p170
        %p505 = pneg %p194
        %p506 = pneg %p191
        %p507 = pneg %p215
        %p508 = pneg %p212
        %p509 = pneg %p236
        %p510 = pneg %p233
        %p511 = pneg %p257
        %p512 = pneg %p254
        %p513 = pneg %p278
        %p514 = pneg %p275
        %s515 = smul.u32 25, %s31
        %p516 = scmp.lt.s32.totalorder %s515, 49
        %s517 = scalar_select %p516, %s515, 49
        %s518 = smul.addr %s517, 8
        %s519 = smul.addr %s518, 8
        %s520 = scalar_lea.vmem %s12, %s519
        %p521 = pneg %p304
        %p522 = pneg %p301
        %s523 = smul.u32 25, %s31
        %p524 = scmp.lt.s32.totalorder %s523, 49
        %s525 = scalar_select %p524, %s523, 49
        %s526 = scalar_lea.vmem %s13, %s525
        %p527 = pneg %p330
        %p528 = pneg %p327
        %s529 = smul.u32 25, %s31
        %p530 = scmp.lt.s32.totalorder %s529, 49
        %s531 = scalar_select %p530, %s529, 49
        %s532 = scalar_lea.vmem %s14, %s531
        %p533 = pneg %p356
        %p534 = pneg %p353
        %p535 = pneg %p377
        %p536 = pneg %p374
        %p537 = pneg %p403
        %p538 = pneg %p400
        %s539 = smul.u32 25, %s31
        %p540 = scmp.lt.s32.totalorder %s539, 49
        %s541 = scalar_select %p540, %s539, 49
        %s542 = scalar_lea.vmem %s16, %s541
        %s543 = smul.u32 25, %s31
        %p544 = scmp.lt.s32.totalorder %s543, 49
        %s545 = scalar_select %p544, %s543, 49
        %s546 = smul.addr %s545, 8
        %s547 = smul.addr %s546, 8
        %s548 = scalar_lea.vmem %s12, %s547
        %s549 = smul.u32 25, %s31
        %s550 = smul.u32 25, %s31
        %p551 = scmp.lt.s32.totalorder %s550, 49
        %s552 = scalar_select %p551, %s550, 49
        %s553 = scalar_lea.vmem %s13, %s552
        %s554 = smul.u32 25, %s31
        %s555 = smul.u32 25, %s31
        %p556 = scmp.lt.s32.totalorder %s555, 49
        %s557 = scalar_select %p556, %s555, 49
        %s558 = scalar_lea.vmem %s14, %s557
        %s559 = smul.u32 25, %s31
        %s560 = smul.u32 25, %s31
        %p561 = scmp.lt.s32.totalorder %s560, 49
        %s562 = scalar_select %p561, %s560, 49
        %s563 = scalar_lea.vmem %s16, %s562
        %s564 = smul.u32 25, %s31
        %p566 = scmp.eq.s32.totalorder %s31, 0
        // Predicated region
        $region81: #{energy_50_rl_forward.1} parent=79 // pred_check
          %p567 = pneg %p566
        $region82: #{energy_50_rl_forward.1} parent=79 // pred_check_branch
          %569 = sbr.rel (%p567) target = $region84
        $region83: #{energy_50_rl_forward.1} parent=79 // pred_region
          %v570 = vld [vmem:[%s0] sm:$0xff]
          %v571 = vld [vmem:[%s0 + $0x8] sm:$0xff]
          %v572 = vld [vmem:[%s0 + $0x10] sm:$0xf]
          %v576 = vlaneseq
          %v577 = vshrl.u32 %v576, 7
          %v578 = vsub.s32 0, %v577
          %v579 = vrot.slane %v570, %v578
          %v580 = vlaneseq
          %v581 = vshrl.u32 %v580, 7
          %v582 = vsub.s32 1, %v581
          %v583 = vrot.slane %v570, %v582
          %v584 = vlaneseq
          %v585 = vshrl.u32 %v584, 7
          %v586 = vsub.s32 2, %v585
          %v587 = vrot.slane %v570, %v586
          %v588 = vlaneseq
          %v589 = vshrl.u32 %v588, 7
          %v590 = vsub.s32 3, %v589
          %v591 = vrot.slane %v570, %v590
          %v592 = vlaneseq
          %v593 = vshrl.u32 %v592, 7
          %v594 = vsub.s32 4, %v593
          %v595 = vrot.slane %v570, %v594
          %v596 = vlaneseq
          %v597 = vshrl.u32 %v596, 7
          %v598 = vsub.s32 5, %v597
          %v599 = vrot.slane %v570, %v598
          %v600 = vlaneseq
          %v601 = vshrl.u32 %v600, 7
          %v602 = vsub.s32 6, %v601
          %v603 = vrot.slane %v570, %v602
          %v604 = vlaneseq
          %v605 = vshrl.u32 %v604, 7
          %v606 = vsub.s32 7, %v605
          %v607 = vrot.slane %v570, %v606
          %v608 = vlaneseq
          %v609 = vshrl.u32 %v608, 7
          %v610 = vsub.s32 0, %v609
          %v611 = vrot.slane %v571, %v610
          %v612 = vlaneseq
          %v613 = vshrl.u32 %v612, 7
          %v614 = vsub.s32 1, %v613
          %v615 = vrot.slane %v571, %v614
          %v616 = vlaneseq
          %v617 = vshrl.u32 %v616, 7
          %v618 = vsub.s32 2, %v617
          %v619 = vrot.slane %v571, %v618
          %v620 = vlaneseq
          %v621 = vshrl.u32 %v620, 7
          %v622 = vsub.s32 3, %v621
          %v623 = vrot.slane %v571, %v622
          %v624 = vlaneseq
          %v625 = vshrl.u32 %v624, 7
          %v626 = vsub.s32 4, %v625
          %v627 = vrot.slane %v571, %v626
          %v628 = vlaneseq
          %v629 = vshrl.u32 %v628, 7
          %v630 = vsub.s32 5, %v629
          %v631 = vrot.slane %v571, %v630
          %v632 = vlaneseq
          %v633 = vshrl.u32 %v632, 7
          %v634 = vsub.s32 6, %v633
          %v635 = vrot.slane %v571, %v634
          %v636 = vlaneseq
          %v637 = vshrl.u32 %v636, 7
          %v638 = vsub.s32 7, %v637
          %v639 = vrot.slane %v571, %v638
          %v640 = vlaneseq
          %v641 = vshrl.u32 %v640, 7
          %v642 = vsub.s32 0, %v641
          %v643 = vrot.slane %v572, %v642
          %v644 = vlaneseq
          %v645 = vshrl.u32 %v644, 7
          %v646 = vsub.s32 1, %v645
          %v647 = vrot.slane %v572, %v646
          %v648 = vlaneseq
          %v649 = vshrl.u32 %v648, 7
          %v650 = vsub.s32 2, %v649
          %v651 = vrot.slane %v572, %v650
          %v652 = vlaneseq
          %v653 = vshrl.u32 %v652, 7
          %v654 = vsub.s32 3, %v653
          %v655 = vrot.slane %v572, %v654
          %v676 = vpack.c.bf16 %v579, %v579
          %v677 = vpack.c.bf16 %v583, %v583
          %v678 = vpack.c.bf16 %v587, %v587
          %v679 = vpack.c.bf16 %v591, %v591
          %v680 = vpack.c.bf16 %v595, %v595
          %v681 = vpack.c.bf16 %v599, %v599
          %v682 = vpack.c.bf16 %v603, %v603
          %v683 = vpack.c.bf16 %v607, %v607
          %v684 = vpack.c.bf16 %v611, %v611
          %v685 = vpack.c.bf16 %v615, %v615
          %v686 = vpack.c.bf16 %v619, %v619
          %v687 = vpack.c.bf16 %v623, %v623
          %v688 = vpack.c.bf16 %v627, %v627
          %v689 = vpack.c.bf16 %v631, %v631
          %v690 = vpack.c.bf16 %v635, %v635
          %v691 = vpack.c.bf16 %v639, %v639
          %v692 = vpack.c.bf16 %v643, %v643
          %v693 = vpack.c.bf16 %v647, %v647
          %v694 = vpack.c.bf16 %v651, %v651
          %v695 = vpack.c.bf16 %v655, %v655
          %v696 = vld [vmem:[%s1] sm:$0x3]
          %v697 = vld [vmem:[%s1 + $0x2] sm:$0x3]
          %v698 = vld [vmem:[%s1 + $0x4] sm:$0x3]
          %v699 = vld [vmem:[%s1 + $0x6] sm:$0x3]
          %v700 = vld [vmem:[%s1 + $0x8] sm:$0x3]
          %v701 = vld [vmem:[%s1 + $0xa] sm:$0x3]
          %v702 = vld [vmem:[%s1 + $0xc] sm:$0x3]
          %v703 = vld [vmem:[%s1 + $0xe] sm:$0x3]
          %v704 = vld [vmem:[%s1 + $0x10] sm:$0x3]
          %v705 = vld [vmem:[%s1 + $0x12] sm:$0x3]
          %v706 = vld [vmem:[%s1 + $0x14] sm:$0x3]
          %v707 = vld [vmem:[%s1 + $0x16] sm:$0x3]
          %v708 = vld [vmem:[%s1 + $0x18] sm:$0x3]
          %v709 = vld [vmem:[%s1 + $0x1a] sm:$0x3]
          %v710 = vld [vmem:[%s1 + $0x1c] sm:$0x3]
          %v711 = vld [vmem:[%s1 + $0x1e] sm:$0x3]
          %v712 = vld [vmem:[%s1 + $0x20] sm:$0x3]
          %v713 = vld [vmem:[%s1 + $0x22] sm:$0x3]
          %v714 = vld [vmem:[%s1 + $0x24] sm:$0x3]
          %v715 = vld [vmem:[%s1 + $0x26] sm:$0x3]
          %v716 = vld [vmem:[%s1 + $0x28] sm:$0x3]
          %v717 = vld [vmem:[%s1 + $0x2a] sm:$0x3]
          %v718 = vld [vmem:[%s1 + $0x2c] sm:$0x3]
          %v719 = vld [vmem:[%s1 + $0x2e] sm:$0x3]
          %v720 = vld [vmem:[%s1 + $0x30] sm:$0x3]
          %v721 = vld [vmem:[%s1 + $0x32] sm:$0x3]
          %v722 = vld [vmem:[%s1 + $0x34] sm:$0x3]
          %v723 = vld [vmem:[%s1 + $0x36] sm:$0x3]
          %v724 = vld [vmem:[%s1 + $0x38] sm:$0x3]
          %v725 = vld [vmem:[%s1 + $0x3a] sm:$0x3]
          %v726 = vld [vmem:[%s1 + $0x3c] sm:$0x3]
          %v727 = vld [vmem:[%s1 + $0x3e] sm:$0x3]
          %v728 = vld [vmem:[%s1 + $0x40] sm:$0x3]
          %v729 = vld [vmem:[%s1 + $0x42] sm:$0x3]
          %v730 = vld [vmem:[%s1 + $0x44] sm:$0x3]
          %v731 = vld [vmem:[%s1 + $0x46] sm:$0x3]
          %v732 = vld [vmem:[%s1 + $0x48] sm:$0x3]
          %v733 = vld [vmem:[%s1 + $0x4a] sm:$0x3]
          %v734 = vld [vmem:[%s1 + $0x4c] sm:$0x3]
          %v735 = vld [vmem:[%s1 + $0x4e] sm:$0x3]
          %v736 = vld [vmem:[%s1 + $0x50] sm:$0x3]
          %v737 = vld [vmem:[%s1 + $0x52] sm:$0x3]
          %v738 = vld [vmem:[%s1 + $0x54] sm:$0x3]
          %v739 = vld [vmem:[%s1 + $0x56] sm:$0x3]
          %v740 = vld [vmem:[%s1 + $0x58] sm:$0x3]
          %v741 = vld [vmem:[%s1 + $0x5a] sm:$0x3]
          %v742 = vld [vmem:[%s1 + $0x5c] sm:$0x3]
          %v743 = vld [vmem:[%s1 + $0x5e] sm:$0x3]
          %v744 = vld [vmem:[%s1 + $0x60] sm:$0x3]
          %v745 = vld [vmem:[%s1 + $0x62] sm:$0x3]
          %v746 = vld [vmem:[%s1 + $0x64] sm:$0x3]
          %v747 = vld [vmem:[%s1 + $0x66] sm:$0x3]
          %v748 = vld [vmem:[%s1 + $0x68] sm:$0x3]
          %v749 = vld [vmem:[%s1 + $0x6a] sm:$0x3]
          %v750 = vld [vmem:[%s1 + $0x6c] sm:$0x3]
          %v751 = vld [vmem:[%s1 + $0x6e] sm:$0x3]
          %v752 = vld [vmem:[%s1 + $0x70] sm:$0x3]
          %v753 = vld [vmem:[%s1 + $0x72] sm:$0x3]
          %v754 = vld [vmem:[%s1 + $0x74] sm:$0x3]
          %v755 = vld [vmem:[%s1 + $0x76] sm:$0x3]
          %v756 = vld [vmem:[%s1 + $0x78] sm:$0x3]
          %v757 = vld [vmem:[%s1 + $0x7a] sm:$0x3]
          %v758 = vld [vmem:[%s1 + $0x7c] sm:$0x3]
          %v759 = vld [vmem:[%s1 + $0x7e] sm:$0x3]
          %v760 = vld [vmem:[%s1 + $0x80] sm:$0x3]
          %v761 = vld [vmem:[%s1 + $0x82] sm:$0x3]
          %v762 = vld [vmem:[%s1 + $0x84] sm:$0x3]
          %v763 = vld [vmem:[%s1 + $0x86] sm:$0x3]
          %v764 = vld [vmem:[%s1 + $0x88] sm:$0x3]
          %v765 = vld [vmem:[%s1 + $0x8a] sm:$0x3]
          %v766 = vld [vmem:[%s1 + $0x8c] sm:$0x3]
          %v767 = vld [vmem:[%s1 + $0x8e] sm:$0x3]
          %v768 = vld [vmem:[%s1 + $0x90] sm:$0x3]
          %v769 = vld [vmem:[%s1 + $0x92] sm:$0x3]
          %v770 = vld [vmem:[%s1 + $0x94] sm:$0x3]
          %v771 = vld [vmem:[%s1 + $0x96] sm:$0x3]
          %v772 = vld [vmem:[%s1 + $0x98] sm:$0x3]
          %v773 = vld [vmem:[%s1 + $0x9a] sm:$0x3]
          %v774 = vld [vmem:[%s1 + $0x9c] sm:$0x3]
          %v775 = vld [vmem:[%s1 + $0x9e] sm:$0x3]
          %v776 = vld [vmem:[%s1 + $0xa0] sm:$0x3]
          %v777 = vld [vmem:[%s1 + $0xa2] sm:$0x3]
          %v778 = vld [vmem:[%s1 + $0xa4] sm:$0x3]
          %v779 = vld [vmem:[%s1 + $0xa6] sm:$0x3]
          %v780 = vld [vmem:[%s1 + $0xa8] sm:$0x3]
          %v781 = vld [vmem:[%s1 + $0xaa] sm:$0x3]
          %v782 = vld [vmem:[%s1 + $0xac] sm:$0x3]
          %v783 = vld [vmem:[%s1 + $0xae] sm:$0x3]
          %v784 = vld [vmem:[%s1 + $0xb0] sm:$0x3]
          %v785 = vld [vmem:[%s1 + $0xb2] sm:$0x3]
          %v786 = vld [vmem:[%s1 + $0xb4] sm:$0x3]
          %v787 = vld [vmem:[%s1 + $0xb6] sm:$0x3]
          %v788 = vld [vmem:[%s1 + $0xb8] sm:$0x3]
          %v789 = vld [vmem:[%s1 + $0xba] sm:$0x3]
          %v790 = vld [vmem:[%s1 + $0xbc] sm:$0x3]
          %v791 = vld [vmem:[%s1 + $0xbe] sm:$0x3]
          %v792 = vld [vmem:[%s1 + $0xc0] sm:$0x3]
          %v793 = vld [vmem:[%s1 + $0xc2] sm:$0x3]
          %v794 = vld [vmem:[%s1 + $0xc4] sm:$0x3]
          %v795 = vld [vmem:[%s1 + $0xc6] sm:$0x3]
          %v796 = vld [vmem:[%s1 + $0xc8] sm:$0x3]
          %v797 = vld [vmem:[%s1 + $0xca] sm:$0x3]
          %v798 = vld [vmem:[%s1 + $0xcc] sm:$0x3]
          %v799 = vld [vmem:[%s1 + $0xce] sm:$0x3]
          %v800 = vld [vmem:[%s1 + $0xd0] sm:$0x3]
          %v801 = vld [vmem:[%s1 + $0xd2] sm:$0x3]
          %v802 = vld [vmem:[%s1 + $0xd4] sm:$0x3]
          %v803 = vld [vmem:[%s1 + $0xd6] sm:$0x3]
          %v804 = vld [vmem:[%s1 + $0xd8] sm:$0x3]
          %v805 = vld [vmem:[%s1 + $0xda] sm:$0x3]
          %v806 = vld [vmem:[%s1 + $0xdc] sm:$0x3]
          %v807 = vld [vmem:[%s1 + $0xde] sm:$0x3]
          %v808 = vld [vmem:[%s1 + $0xe0] sm:$0x3]
          %v809 = vld [vmem:[%s1 + $0xe2] sm:$0x3]
          %v810 = vld [vmem:[%s1 + $0xe4] sm:$0x3]
          %v811 = vld [vmem:[%s1 + $0xe6] sm:$0x3]
          %v812 = vld [vmem:[%s1 + $0xe8] sm:$0x3]
          %v813 = vld [vmem:[%s1 + $0xea] sm:$0x3]
          %v814 = vld [vmem:[%s1 + $0xec] sm:$0x3]
          %v815 = vld [vmem:[%s1 + $0xee] sm:$0x3]
          %v816 = vld [vmem:[%s1 + $0xf0] sm:$0x3]
          %v817 = vld [vmem:[%s1 + $0xf2] sm:$0x3]
          %v818 = vld [vmem:[%s1 + $0xf4] sm:$0x3]
          %v819 = vld [vmem:[%s1 + $0xf6] sm:$0x3]
          %v820 = vld [vmem:[%s1 + $0xf8] sm:$0x3]
          %v821 = vld [vmem:[%s1 + $0xfa] sm:$0x3]
          %v822 = vld [vmem:[%s1 + $0xfc] sm:$0x3]
          %v823 = vld [vmem:[%s1 + $0xfe] sm:$0x3]
          %v824 = vld [vmem:[%s1 + $0x100] sm:$0x3]
          %v825 = vld [vmem:[%s1 + $0x102] sm:$0x3]
          %v826 = vld [vmem:[%s1 + $0x104] sm:$0x3]
          %v827 = vld [vmem:[%s1 + $0x106] sm:$0x3]
          %v828 = vld [vmem:[%s1 + $0x108] sm:$0x3]
          %v829 = vld [vmem:[%s1 + $0x10a] sm:$0x3]
          %v830 = vld [vmem:[%s1 + $0x10c] sm:$0x3]
          %v831 = vld [vmem:[%s1 + $0x10e] sm:$0x3]
          %v832 = vld [vmem:[%s1 + $0x110] sm:$0x3]
          %v833 = vld [vmem:[%s1 + $0x112] sm:$0x3]
          %v834 = vld [vmem:[%s1 + $0x114] sm:$0x3]
          %v835 = vld [vmem:[%s1 + $0x116] sm:$0x3]
          %v836 = vld [vmem:[%s1 + $0x118] sm:$0x3]
          %v837 = vld [vmem:[%s1 + $0x11a] sm:$0x3]
          %v838 = vld [vmem:[%s1 + $0x11c] sm:$0x3]
          %v839 = vld [vmem:[%s1 + $0x11e] sm:$0x3]
          %v840 = vld [vmem:[%s1 + $0x120] sm:$0x3]
          %v841 = vld [vmem:[%s1 + $0x122] sm:$0x3]
          %v842 = vld [vmem:[%s1 + $0x124] sm:$0x3]
          %v843 = vld [vmem:[%s1 + $0x126] sm:$0x3]
          %v844 = vld [vmem:[%s1 + $0x128] sm:$0x3]
          %v845 = vld [vmem:[%s1 + $0x12a] sm:$0x3]
          %v846 = vld [vmem:[%s1 + $0x12c] sm:$0x3]
          %v847 = vld [vmem:[%s1 + $0x12e] sm:$0x3]
          %v848 = vld [vmem:[%s1 + $0x130] sm:$0x3]
          %v849 = vld [vmem:[%s1 + $0x132] sm:$0x3]
          %v850 = vld [vmem:[%s1 + $0x134] sm:$0x3]
          %v851 = vld [vmem:[%s1 + $0x136] sm:$0x3]
          %v852 = vld [vmem:[%s1 + $0x138] sm:$0x3]
          %v853 = vld [vmem:[%s1 + $0x13a] sm:$0x3]
          %v854 = vld [vmem:[%s1 + $0x13c] sm:$0x3]
          %v855 = vld [vmem:[%s1 + $0x13e] sm:$0x3]
          %v856 = vld [vmem:[%s1 + $0x140] sm:$0x3]
          %v857 = vld [vmem:[%s1 + $0x142] sm:$0x3]
          %v858 = vld [vmem:[%s1 + $0x144] sm:$0x3]
          %v859 = vld [vmem:[%s1 + $0x146] sm:$0x3]
          %v860 = vld [vmem:[%s1 + $0x148] sm:$0x3]
          %v861 = vld [vmem:[%s1 + $0x14a] sm:$0x3]
          %v862 = vld [vmem:[%s1 + $0x14c] sm:$0x3]
          %v863 = vld [vmem:[%s1 + $0x14e] sm:$0x3]
          %v864 = vld [vmem:[%s1 + $0x150] sm:$0x3]
          %v865 = vld [vmem:[%s1 + $0x152] sm:$0x3]
          %v866 = vld [vmem:[%s1 + $0x154] sm:$0x3]
          %v867 = vld [vmem:[%s1 + $0x156] sm:$0x3]
          %v868 = vld [vmem:[%s1 + $0x158] sm:$0x3]
          %v869 = vld [vmem:[%s1 + $0x15a] sm:$0x3]
          %v870 = vld [vmem:[%s1 + $0x15c] sm:$0x3]
          %v871 = vld [vmem:[%s1 + $0x15e] sm:$0x3]
          %v872 = vld [vmem:[%s1 + $0x160] sm:$0x3]
          %v873 = vld [vmem:[%s1 + $0x162] sm:$0x3]
          %v874 = vld [vmem:[%s1 + $0x164] sm:$0x3]
          %v875 = vld [vmem:[%s1 + $0x166] sm:$0x3]
          %v876 = vld [vmem:[%s1 + $0x168] sm:$0x3]
          %v877 = vld [vmem:[%s1 + $0x16a] sm:$0x3]
          %v878 = vld [vmem:[%s1 + $0x16c] sm:$0x3]
          %v879 = vld [vmem:[%s1 + $0x16e] sm:$0x3]
          %v880 = vld [vmem:[%s1 + $0x170] sm:$0x3]
          %v881 = vld [vmem:[%s1 + $0x172] sm:$0x3]
          %v882 = vld [vmem:[%s1 + $0x174] sm:$0x3]
          %v883 = vld [vmem:[%s1 + $0x176] sm:$0x3]
          %v884 = vld [vmem:[%s1 + $0x178] sm:$0x3]
          %v885 = vld [vmem:[%s1 + $0x17a] sm:$0x3]
          %v886 = vld [vmem:[%s1 + $0x17c] sm:$0x3]
          %v887 = vld [vmem:[%s1 + $0x17e] sm:$0x3]
          %v888 = vld [vmem:[%s1 + $0x180] sm:$0x3]
          %v889 = vld [vmem:[%s1 + $0x182] sm:$0x3]
          %v890 = vld [vmem:[%s1 + $0x184] sm:$0x3]
          %v891 = vld [vmem:[%s1 + $0x186] sm:$0x3]
          %v892 = vld [vmem:[%s1 + $0x188] sm:$0x3]
          %v893 = vld [vmem:[%s1 + $0x18a] sm:$0x3]
          %v894 = vld [vmem:[%s1 + $0x18c] sm:$0x3]
          %v895 = vld [vmem:[%s1 + $0x18e] sm:$0x3]
          %v896 = vld [vmem:[%s1 + $0x190] sm:$0x3]
          %v897 = vld [vmem:[%s1 + $0x192] sm:$0x3]
          %v898 = vld [vmem:[%s1 + $0x194] sm:$0x3]
          %v899 = vld [vmem:[%s1 + $0x196] sm:$0x3]
          %v900 = vld [vmem:[%s1 + $0x198] sm:$0x3]
          %v901 = vld [vmem:[%s1 + $0x19a] sm:$0x3]
          %v902 = vld [vmem:[%s1 + $0x19c] sm:$0x3]
          %v903 = vld [vmem:[%s1 + $0x19e] sm:$0x3]
          %v904 = vld [vmem:[%s1 + $0x1a0] sm:$0x3]
          %v905 = vld [vmem:[%s1 + $0x1a2] sm:$0x3]
          %v906 = vld [vmem:[%s1 + $0x1a4] sm:$0x3]
          %v907 = vld [vmem:[%s1 + $0x1a6] sm:$0x3]
          %v908 = vld [vmem:[%s1 + $0x1a8] sm:$0x3]
          %v909 = vld [vmem:[%s1 + $0x1aa] sm:$0x3]
          %v910 = vld [vmem:[%s1 + $0x1ac] sm:$0x3]
          %v911 = vld [vmem:[%s1 + $0x1ae] sm:$0x3]
          %v912 = vld [vmem:[%s1 + $0x1b0] sm:$0x3]
          %v913 = vld [vmem:[%s1 + $0x1b2] sm:$0x3]
          %v914 = vld [vmem:[%s1 + $0x1b4] sm:$0x3]
          %v915 = vld [vmem:[%s1 + $0x1b6] sm:$0x3]
          %v916 = vld [vmem:[%s1 + $0x1b8] sm:$0x3]
          %v917 = vld [vmem:[%s1 + $0x1ba] sm:$0x3]
          %v918 = vld [vmem:[%s1 + $0x1bc] sm:$0x3]
          %v919 = vld [vmem:[%s1 + $0x1be] sm:$0x3]
          %v920 = vld [vmem:[%s1 + $0x1c0] sm:$0x3]
          %v921 = vld [vmem:[%s1 + $0x1c2] sm:$0x3]
          %v922 = vld [vmem:[%s1 + $0x1c4] sm:$0x3]
          %v923 = vld [vmem:[%s1 + $0x1c6] sm:$0x3]
          %v924 = vld [vmem:[%s1 + $0x1c8] sm:$0x3]
          %v925 = vld [vmem:[%s1 + $0x1ca] sm:$0x3]
          %v926 = vld [vmem:[%s1 + $0x1cc] sm:$0x3]
          %v927 = vld [vmem:[%s1 + $0x1ce] sm:$0x3]
          %v928 = vld [vmem:[%s1 + $0x1d0] sm:$0x3]
          %v929 = vld [vmem:[%s1 + $0x1d2] sm:$0x3]
          %v930 = vld [vmem:[%s1 + $0x1d4] sm:$0x3]
          %v931 = vld [vmem:[%s1 + $0x1d6] sm:$0x3]
          %v932 = vld [vmem:[%s1 + $0x1d8] sm:$0x3]
          %v933 = vld [vmem:[%s1 + $0x1da] sm:$0x3]
          %v934 = vld [vmem:[%s1 + $0x1dc] sm:$0x3]
          %v935 = vld [vmem:[%s1 + $0x1de] sm:$0x3]
          %v936 = vld [vmem:[%s1 + $0x1e0] sm:$0x3]
          %v937 = vld [vmem:[%s1 + $0x1e2] sm:$0x3]
          %v938 = vld [vmem:[%s1 + $0x1e4] sm:$0x3]
          %v939 = vld [vmem:[%s1 + $0x1e6] sm:$0x3]
          %v940 = vld [vmem:[%s1 + $0x1e8] sm:$0x3]
          %v941 = vld [vmem:[%s1 + $0x1ea] sm:$0x3]
          %v942 = vld [vmem:[%s1 + $0x1ec] sm:$0x3]
          %v943 = vld [vmem:[%s1 + $0x1ee] sm:$0x3]
          %v944 = vld [vmem:[%s1 + $0x1f0] sm:$0x3]
          %v945 = vld [vmem:[%s1 + $0x1f2] sm:$0x3]
          %v946 = vld [vmem:[%s1 + $0x1f4] sm:$0x3]
          %v947 = vld [vmem:[%s1 + $0x1f6] sm:$0x3]
          %v948 = vld [vmem:[%s1 + $0x1f8] sm:$0x3]
          %v949 = vld [vmem:[%s1 + $0x1fa] sm:$0x3]
          %v950 = vld [vmem:[%s1 + $0x1fc] sm:$0x3]
          %v951 = vld [vmem:[%s1 + $0x1fe] sm:$0x3]
          %v952 = vld [vmem:[%s1 + $0x200] sm:$0x3]
          %v953 = vld [vmem:[%s1 + $0x202] sm:$0x3]
          %v954 = vld [vmem:[%s1 + $0x204] sm:$0x3]
          %v955 = vld [vmem:[%s1 + $0x206] sm:$0x3]
          %v956 = vld [vmem:[%s1 + $0x208] sm:$0x3]
          %v957 = vld [vmem:[%s1 + $0x20a] sm:$0x3]
          %v958 = vld [vmem:[%s1 + $0x20c] sm:$0x3]
          %v959 = vld [vmem:[%s1 + $0x20e] sm:$0x3]
          %v960 = vld [vmem:[%s1 + $0x210] sm:$0x3]
          %v961 = vld [vmem:[%s1 + $0x212] sm:$0x3]
          %v962 = vld [vmem:[%s1 + $0x214] sm:$0x3]
          %v963 = vld [vmem:[%s1 + $0x216] sm:$0x3]
          %v964 = vld [vmem:[%s1 + $0x218] sm:$0x3]
          %v965 = vld [vmem:[%s1 + $0x21a] sm:$0x3]
          %v966 = vld [vmem:[%s1 + $0x21c] sm:$0x3]
          %v967 = vld [vmem:[%s1 + $0x21e] sm:$0x3]
          %v968 = vld [vmem:[%s1 + $0x220] sm:$0x3]
          %v969 = vld [vmem:[%s1 + $0x222] sm:$0x3]
          %v970 = vld [vmem:[%s1 + $0x224] sm:$0x3]
          %v971 = vld [vmem:[%s1 + $0x226] sm:$0x3]
          %v972 = vld [vmem:[%s1 + $0x228] sm:$0x3]
          %v973 = vld [vmem:[%s1 + $0x22a] sm:$0x3]
          %v974 = vld [vmem:[%s1 + $0x22c] sm:$0x3]
          %v975 = vld [vmem:[%s1 + $0x22e] sm:$0x3]
          %v976 = vld [vmem:[%s1 + $0x230] sm:$0x3]
          %v977 = vld [vmem:[%s1 + $0x232] sm:$0x3]
          %v978 = vld [vmem:[%s1 + $0x234] sm:$0x3]
          %v979 = vld [vmem:[%s1 + $0x236] sm:$0x3]
          %v980 = vld [vmem:[%s1 + $0x238] sm:$0x3]
          %v981 = vld [vmem:[%s1 + $0x23a] sm:$0x3]
          %v982 = vld [vmem:[%s1 + $0x23c] sm:$0x3]
          %v983 = vld [vmem:[%s1 + $0x23e] sm:$0x3]
          %v984 = vld [vmem:[%s1 + $0x240] sm:$0x3]
          %v985 = vld [vmem:[%s1 + $0x242] sm:$0x3]
          %v986 = vld [vmem:[%s1 + $0x244] sm:$0x3]
          %v987 = vld [vmem:[%s1 + $0x246] sm:$0x3]
          %v988 = vld [vmem:[%s1 + $0x248] sm:$0x3]
          %v989 = vld [vmem:[%s1 + $0x24a] sm:$0x3]
          %v990 = vld [vmem:[%s1 + $0x24c] sm:$0x3]
          %v991 = vld [vmem:[%s1 + $0x24e] sm:$0x3]
          %v992 = vld [vmem:[%s1 + $0x250] sm:$0x3]
          %v993 = vld [vmem:[%s1 + $0x252] sm:$0x3]
          %v994 = vld [vmem:[%s1 + $0x254] sm:$0x3]
          %v995 = vld [vmem:[%s1 + $0x256] sm:$0x3]
          %v996 = vld [vmem:[%s1 + $0x258] sm:$0x3]
          %v997 = vld [vmem:[%s1 + $0x25a] sm:$0x3]
          %v998 = vld [vmem:[%s1 + $0x25c] sm:$0x3]
          %v999 = vld [vmem:[%s1 + $0x25e] sm:$0x3]
          %v1000 = vld [vmem:[%s1 + $0x260] sm:$0x3]
          %v1001 = vld [vmem:[%s1 + $0x262] sm:$0x3]
          %v1002 = vld [vmem:[%s1 + $0x264] sm:$0x3]
          %v1003 = vld [vmem:[%s1 + $0x266] sm:$0x3]
          %v1004 = vld [vmem:[%s1 + $0x268] sm:$0x3]
          %v1005 = vld [vmem:[%s1 + $0x26a] sm:$0x3]
          %v1006 = vld [vmem:[%s1 + $0x26c] sm:$0x3]
          %v1007 = vld [vmem:[%s1 + $0x26e] sm:$0x3]
          %v1008 = vld [vmem:[%s1 + $0x270] sm:$0x3]
          %v1009 = vld [vmem:[%s1 + $0x272] sm:$0x3]
          %v1010 = vld [vmem:[%s1 + $0x274] sm:$0x3]
          %v1011 = vld [vmem:[%s1 + $0x276] sm:$0x3]
          %v1012 = vld [vmem:[%s1 + $0x278] sm:$0x3]
          %v1013 = vld [vmem:[%s1 + $0x27a] sm:$0x3]
          %v1014 = vld [vmem:[%s1 + $0x27c] sm:$0x3]
          %v1015 = vunpack.c.l.s8.bf16 %v696
          %v1016 = vunpack.c.l.s8.bf16 %v697
          %v1017 = vunpack.c.l.s8.bf16 %v698
          %v1018 = vunpack.c.l.s8.bf16 %v699
          %v1019 = vunpack.c.l.s8.bf16 %v700
          %v1020 = vunpack.c.l.s8.bf16 %v701
          %v1021 = vunpack.c.l.s8.bf16 %v702
          %v1022 = vunpack.c.l.s8.bf16 %v703
          %v1023 = vunpack.c.l.s8.bf16 %v704
          %v1024 = vunpack.c.l.s8.bf16 %v705
          %v1025 = vunpack.c.l.s8.bf16 %v706
          %v1026 = vunpack.c.l.s8.bf16 %v707
          %v1027 = vunpack.c.l.s8.bf16 %v708
          %v1028 = vunpack.c.l.s8.bf16 %v709
          %v1029 = vunpack.c.l.s8.bf16 %v710
          %v1030 = vunpack.c.l.s8.bf16 %v711
          %v1031 = vunpack.c.l.s8.bf16 %v712
          %v1032 = vunpack.c.l.s8.bf16 %v713
          %v1033 = vunpack.c.l.s8.bf16 %v714
          %v1034 = vunpack.c.l.s8.bf16 %v715
          %v1035 = vunpack.c.l.s8.bf16 %v716
          %v1036 = vunpack.c.l.s8.bf16 %v717
          %v1037 = vunpack.c.l.s8.bf16 %v718
          %v1038 = vunpack.c.l.s8.bf16 %v719
          %v1039 = vunpack.c.l.s8.bf16 %v720
          %v1040 = vunpack.c.l.s8.bf16 %v721
          %v1041 = vunpack.c.l.s8.bf16 %v722
          %v1042 = vunpack.c.l.s8.bf16 %v723
          %v1043 = vunpack.c.l.s8.bf16 %v724
          %v1044 = vunpack.c.l.s8.bf16 %v725
          %v1045 = vunpack.c.l.s8.bf16 %v726
          %v1046 = vunpack.c.l.s8.bf16 %v727
          %v1047 = vunpack.c.l.s8.bf16 %v728
          %v1048 = vunpack.c.l.s8.bf16 %v729
          %v1049 = vunpack.c.l.s8.bf16 %v730
          %v1050 = vunpack.c.l.s8.bf16 %v731
          %v1051 = vunpack.c.l.s8.bf16 %v732
          %v1052 = vunpack.c.l.s8.bf16 %v733
          %v1053 = vunpack.c.l.s8.bf16 %v734
          %v1054 = vunpack.c.l.s8.bf16 %v735
          %v1055 = vunpack.c.l.s8.bf16 %v736
          %v1056 = vunpack.c.l.s8.bf16 %v737
          %v1057 = vunpack.c.l.s8.bf16 %v738
          %v1058 = vunpack.c.l.s8.bf16 %v739
          %v1059 = vunpack.c.l.s8.bf16 %v740
          %v1060 = vunpack.c.l.s8.bf16 %v741
          %v1061 = vunpack.c.l.s8.bf16 %v742
          %v1062 = vunpack.c.l.s8.bf16 %v743
          %v1063 = vunpack.c.l.s8.bf16 %v744
          %v1064 = vunpack.c.l.s8.bf16 %v745
          %v1065 = vunpack.c.l.s8.bf16 %v746
          %v1066 = vunpack.c.l.s8.bf16 %v747
          %v1067 = vunpack.c.l.s8.bf16 %v748
          %v1068 = vunpack.c.l.s8.bf16 %v749
          %v1069 = vunpack.c.l.s8.bf16 %v750
          %v1070 = vunpack.c.l.s8.bf16 %v751
          %v1071 = vunpack.c.l.s8.bf16 %v752
          %v1072 = vunpack.c.l.s8.bf16 %v753
          %v1073 = vunpack.c.l.s8.bf16 %v754
          %v1074 = vunpack.c.l.s8.bf16 %v755
          %v1075 = vunpack.c.l.s8.bf16 %v756
          %v1076 = vunpack.c.l.s8.bf16 %v757
          %v1077 = vunpack.c.l.s8.bf16 %v758
          %v1078 = vunpack.c.l.s8.bf16 %v759
          %v1079 = vunpack.c.l.s8.bf16 %v760
          %v1080 = vunpack.c.l.s8.bf16 %v761
          %v1081 = vunpack.c.l.s8.bf16 %v762
          %v1082 = vunpack.c.l.s8.bf16 %v763
          %v1083 = vunpack.c.l.s8.bf16 %v764
          %v1084 = vunpack.c.l.s8.bf16 %v765
          %v1085 = vunpack.c.l.s8.bf16 %v766
          %v1086 = vunpack.c.l.s8.bf16 %v767
          %v1087 = vunpack.c.l.s8.bf16 %v768
          %v1088 = vunpack.c.l.s8.bf16 %v769
          %v1089 = vunpack.c.l.s8.bf16 %v770
          %v1090 = vunpack.c.l.s8.bf16 %v771
          %v1091 = vunpack.c.l.s8.bf16 %v772
          %v1092 = vunpack.c.l.s8.bf16 %v773
          %v1093 = vunpack.c.l.s8.bf16 %v774
          %v1094 = vunpack.c.l.s8.bf16 %v775
          %v1095 = vunpack.c.l.s8.bf16 %v776
          %v1096 = vunpack.c.l.s8.bf16 %v777
          %v1097 = vunpack.c.l.s8.bf16 %v778
          %v1098 = vunpack.c.l.s8.bf16 %v779
          %v1099 = vunpack.c.l.s8.bf16 %v780
          %v1100 = vunpack.c.l.s8.bf16 %v781
          %v1101 = vunpack.c.l.s8.bf16 %v782
          %v1102 = vunpack.c.l.s8.bf16 %v783
          %v1103 = vunpack.c.l.s8.bf16 %v784
          %v1104 = vunpack.c.l.s8.bf16 %v785
          %v1105 = vunpack.c.l.s8.bf16 %v786
          %v1106 = vunpack.c.l.s8.bf16 %v787
          %v1107 = vunpack.c.l.s8.bf16 %v788
          %v1108 = vunpack.c.l.s8.bf16 %v789
          %v1109 = vunpack.c.l.s8.bf16 %v790
          %v1110 = vunpack.c.l.s8.bf16 %v791
          %v1111 = vunpack.c.l.s8.bf16 %v792
          %v1112 = vunpack.c.l.s8.bf16 %v793
          %v1113 = vunpack.c.l.s8.bf16 %v794
          %v1114 = vunpack.c.l.s8.bf16 %v795
          %v1115 = vunpack.c.l.s8.bf16 %v796
          %v1116 = vunpack.c.l.s8.bf16 %v797
          %v1117 = vunpack.c.l.s8.bf16 %v798
          %v1118 = vunpack.c.l.s8.bf16 %v799
          %v1119 = vunpack.c.l.s8.bf16 %v800
          %v1120 = vunpack.c.l.s8.bf16 %v801
          %v1121 = vunpack.c.l.s8.bf16 %v802
          %v1122 = vunpack.c.l.s8.bf16 %v803
          %v1123 = vunpack.c.l.s8.bf16 %v804
          %v1124 = vunpack.c.l.s8.bf16 %v805
          %v1125 = vunpack.c.l.s8.bf16 %v806
          %v1126 = vunpack.c.l.s8.bf16 %v807
          %v1127 = vunpack.c.l.s8.bf16 %v808
          %v1128 = vunpack.c.l.s8.bf16 %v809
          %v1129 = vunpack.c.l.s8.bf16 %v810
          %v1130 = vunpack.c.l.s8.bf16 %v811
          %v1131 = vunpack.c.l.s8.bf16 %v812
          %v1132 = vunpack.c.l.s8.bf16 %v813
          %v1133 = vunpack.c.l.s8.bf16 %v814
          %v1134 = vunpack.c.l.s8.bf16 %v815
          %v1135 = vunpack.c.l.s8.bf16 %v816
          %v1136 = vunpack.c.l.s8.bf16 %v817
          %v1137 = vunpack.c.l.s8.bf16 %v818
          %v1138 = vunpack.c.l.s8.bf16 %v819
          %v1139 = vunpack.c.l.s8.bf16 %v820
          %v1140 = vunpack.c.l.s8.bf16 %v821
          %v1141 = vunpack.c.l.s8.bf16 %v822
          %v1142 = vunpack.c.l.s8.bf16 %v823
          %v1143 = vunpack.c.l.s8.bf16 %v824
          %v1144 = vunpack.c.l.s8.bf16 %v825
          %v1145 = vunpack.c.l.s8.bf16 %v826
          %v1146 = vunpack.c.l.s8.bf16 %v827
          %v1147 = vunpack.c.l.s8.bf16 %v828
          %v1148 = vunpack.c.l.s8.bf16 %v829
          %v1149 = vunpack.c.l.s8.bf16 %v830
          %v1150 = vunpack.c.l.s8.bf16 %v831
          %v1151 = vunpack.c.l.s8.bf16 %v832
          %v1152 = vunpack.c.l.s8.bf16 %v833
          %v1153 = vunpack.c.l.s8.bf16 %v834
          %v1154 = vunpack.c.l.s8.bf16 %v835
          %v1155 = vunpack.c.l.s8.bf16 %v836
          %v1156 = vunpack.c.l.s8.bf16 %v837
          %v1157 = vunpack.c.l.s8.bf16 %v838
          %v1158 = vunpack.c.l.s8.bf16 %v839
          %v1159 = vunpack.c.l.s8.bf16 %v840
          %v1160 = vunpack.c.l.s8.bf16 %v841
          %v1161 = vunpack.c.l.s8.bf16 %v842
          %v1162 = vunpack.c.l.s8.bf16 %v843
          %v1163 = vunpack.c.l.s8.bf16 %v844
          %v1164 = vunpack.c.l.s8.bf16 %v845
          %v1165 = vunpack.c.l.s8.bf16 %v846
          %v1166 = vunpack.c.l.s8.bf16 %v847
          %v1167 = vunpack.c.l.s8.bf16 %v848
          %v1168 = vunpack.c.l.s8.bf16 %v849
          %v1169 = vunpack.c.l.s8.bf16 %v850
          %v1170 = vunpack.c.l.s8.bf16 %v851
          %v1171 = vunpack.c.l.s8.bf16 %v852
          %v1172 = vunpack.c.l.s8.bf16 %v853
          %v1173 = vunpack.c.l.s8.bf16 %v854
          %v1174 = vunpack.c.l.s8.bf16 %v855
          %v1175 = vunpack.c.l.s8.bf16 %v856
          %v1176 = vunpack.c.l.s8.bf16 %v857
          %v1177 = vunpack.c.l.s8.bf16 %v858
          %v1178 = vunpack.c.l.s8.bf16 %v859
          %v1179 = vunpack.c.l.s8.bf16 %v860
          %v1180 = vunpack.c.l.s8.bf16 %v861
          %v1181 = vunpack.c.l.s8.bf16 %v862
          %v1182 = vunpack.c.l.s8.bf16 %v863
          %v1183 = vunpack.c.l.s8.bf16 %v864
          %v1184 = vunpack.c.l.s8.bf16 %v865
          %v1185 = vunpack.c.l.s8.bf16 %v866
          %v1186 = vunpack.c.l.s8.bf16 %v867
          %v1187 = vunpack.c.l.s8.bf16 %v868
          %v1188 = vunpack.c.l.s8.bf16 %v869
          %v1189 = vunpack.c.l.s8.bf16 %v870
          %v1190 = vunpack.c.l.s8.bf16 %v871
          %v1191 = vunpack.c.l.s8.bf16 %v872
          %v1192 = vunpack.c.l.s8.bf16 %v873
          %v1193 = vunpack.c.l.s8.bf16 %v874
          %v1194 = vunpack.c.l.s8.bf16 %v875
          %v1195 = vunpack.c.l.s8.bf16 %v876
          %v1196 = vunpack.c.l.s8.bf16 %v877
          %v1197 = vunpack.c.l.s8.bf16 %v878
          %v1198 = vunpack.c.l.s8.bf16 %v879
          %v1199 = vunpack.c.l.s8.bf16 %v880
          %v1200 = vunpack.c.l.s8.bf16 %v881
          %v1201 = vunpack.c.l.s8.bf16 %v882
          %v1202 = vunpack.c.l.s8.bf16 %v883
          %v1203 = vunpack.c.l.s8.bf16 %v884
          %v1204 = vunpack.c.l.s8.bf16 %v885
          %v1205 = vunpack.c.l.s8.bf16 %v886
          %v1206 = vunpack.c.l.s8.bf16 %v887
          %v1207 = vunpack.c.l.s8.bf16 %v888
          %v1208 = vunpack.c.l.s8.bf16 %v889
          %v1209 = vunpack.c.l.s8.bf16 %v890
          %v1210 = vunpack.c.l.s8.bf16 %v891
          %v1211 = vunpack.c.l.s8.bf16 %v892
          %v1212 = vunpack.c.l.s8.bf16 %v893
          %v1213 = vunpack.c.l.s8.bf16 %v894
          %v1214 = vunpack.c.l.s8.bf16 %v895
          %v1215 = vunpack.c.l.s8.bf16 %v896
          %v1216 = vunpack.c.l.s8.bf16 %v897
          %v1217 = vunpack.c.l.s8.bf16 %v898
          %v1218 = vunpack.c.l.s8.bf16 %v899
          %v1219 = vunpack.c.l.s8.bf16 %v900
          %v1220 = vunpack.c.l.s8.bf16 %v901
          %v1221 = vunpack.c.l.s8.bf16 %v902
          %v1222 = vunpack.c.l.s8.bf16 %v903
          %v1223 = vunpack.c.l.s8.bf16 %v904
          %v1224 = vunpack.c.l.s8.bf16 %v905
          %v1225 = vunpack.c.l.s8.bf16 %v906
          %v1226 = vunpack.c.l.s8.bf16 %v907
          %v1227 = vunpack.c.l.s8.bf16 %v908
          %v1228 = vunpack.c.l.s8.bf16 %v909
          %v1229 = vunpack.c.l.s8.bf16 %v910
          %v1230 = vunpack.c.l.s8.bf16 %v911
          %v1231 = vunpack.c.l.s8.bf16 %v912
          %v1232 = vunpack.c.l.s8.bf16 %v913
          %v1233 = vunpack.c.l.s8.bf16 %v914
          %v1234 = vunpack.c.l.s8.bf16 %v915
          %v1235 = vunpack.c.l.s8.bf16 %v916
          %v1236 = vunpack.c.l.s8.bf16 %v917
          %v1237 = vunpack.c.l.s8.bf16 %v918
          %v1238 = vunpack.c.l.s8.bf16 %v919
          %v1239 = vunpack.c.l.s8.bf16 %v920
          %v1240 = vunpack.c.l.s8.bf16 %v921
          %v1241 = vunpack.c.l.s8.bf16 %v922
          %v1242 = vunpack.c.l.s8.bf16 %v923
          %v1243 = vunpack.c.l.s8.bf16 %v924
          %v1244 = vunpack.c.l.s8.bf16 %v925
          %v1245 = vunpack.c.l.s8.bf16 %v926
          %v1246 = vunpack.c.l.s8.bf16 %v927
          %v1247 = vunpack.c.l.s8.bf16 %v928
          %v1248 = vunpack.c.l.s8.bf16 %v929
          %v1249 = vunpack.c.l.s8.bf16 %v930
          %v1250 = vunpack.c.l.s8.bf16 %v931
          %v1251 = vunpack.c.l.s8.bf16 %v932
          %v1252 = vunpack.c.l.s8.bf16 %v933
          %v1253 = vunpack.c.l.s8.bf16 %v934
          %v1254 = vunpack.c.l.s8.bf16 %v935
          %v1255 = vunpack.c.l.s8.bf16 %v936
          %v1256 = vunpack.c.l.s8.bf16 %v937
          %v1257 = vunpack.c.l.s8.bf16 %v938
          %v1258 = vunpack.c.l.s8.bf16 %v939
          %v1259 = vunpack.c.l.s8.bf16 %v940
          %v1260 = vunpack.c.l.s8.bf16 %v941
          %v1261 = vunpack.c.l.s8.bf16 %v942
          %v1262 = vunpack.c.l.s8.bf16 %v943
          %v1263 = vunpack.c.l.s8.bf16 %v944
          %v1264 = vunpack.c.l.s8.bf16 %v945
          %v1265 = vunpack.c.l.s8.bf16 %v946
          %v1266 = vunpack.c.l.s8.bf16 %v947
          %v1267 = vunpack.c.l.s8.bf16 %v948
          %v1268 = vunpack.c.l.s8.bf16 %v949
          %v1269 = vunpack.c.l.s8.bf16 %v950
          %v1270 = vunpack.c.l.s8.bf16 %v951
          %v1271 = vunpack.c.l.s8.bf16 %v952
          %v1272 = vunpack.c.l.s8.bf16 %v953
          %v1273 = vunpack.c.l.s8.bf16 %v954
          %v1274 = vunpack.c.l.s8.bf16 %v955
          %v1275 = vunpack.c.l.s8.bf16 %v956
          %v1276 = vunpack.c.l.s8.bf16 %v957
          %v1277 = vunpack.c.l.s8.bf16 %v958
          %v1278 = vunpack.c.l.s8.bf16 %v959
          %v1279 = vunpack.c.l.s8.bf16 %v960
          %v1280 = vunpack.c.l.s8.bf16 %v961
          %v1281 = vunpack.c.l.s8.bf16 %v962
          %v1282 = vunpack.c.l.s8.bf16 %v963
          %v1283 = vunpack.c.l.s8.bf16 %v964
          %v1284 = vunpack.c.l.s8.bf16 %v965
          %v1285 = vunpack.c.l.s8.bf16 %v966
          %v1286 = vunpack.c.l.s8.bf16 %v967
          %v1287 = vunpack.c.l.s8.bf16 %v968
          %v1288 = vunpack.c.l.s8.bf16 %v969
          %v1289 = vunpack.c.l.s8.bf16 %v970
          %v1290 = vunpack.c.l.s8.bf16 %v971
          %v1291 = vunpack.c.l.s8.bf16 %v972
          %v1292 = vunpack.c.l.s8.bf16 %v973
          %v1293 = vunpack.c.l.s8.bf16 %v974
          %v1294 = vunpack.c.l.s8.bf16 %v975
          %v1295 = vunpack.c.l.s8.bf16 %v976
          %v1296 = vunpack.c.l.s8.bf16 %v977
          %v1297 = vunpack.c.l.s8.bf16 %v978
          %v1298 = vunpack.c.l.s8.bf16 %v979
          %v1299 = vunpack.c.l.s8.bf16 %v980
          %v1300 = vunpack.c.l.s8.bf16 %v981
          %v1301 = vunpack.c.l.s8.bf16 %v982
          %v1302 = vunpack.c.l.s8.bf16 %v983
          %v1303 = vunpack.c.l.s8.bf16 %v984
          %v1304 = vunpack.c.l.s8.bf16 %v985
          %v1305 = vunpack.c.l.s8.bf16 %v986
          %v1306 = vunpack.c.l.s8.bf16 %v987
          %v1307 = vunpack.c.l.s8.bf16 %v988
          %v1308 = vunpack.c.l.s8.bf16 %v989
          %v1309 = vunpack.c.l.s8.bf16 %v990
          %v1310 = vunpack.c.l.s8.bf16 %v991
          %v1311 = vunpack.c.l.s8.bf16 %v992
          %v1312 = vunpack.c.l.s8.bf16 %v993
          %v1313 = vunpack.c.l.s8.bf16 %v994
          %v1314 = vunpack.c.l.s8.bf16 %v995
          %v1315 = vunpack.c.l.s8.bf16 %v996
          %v1316 = vunpack.c.l.s8.bf16 %v997
          %v1317 = vunpack.c.l.s8.bf16 %v998
          %v1318 = vunpack.c.l.s8.bf16 %v999
          %v1319 = vunpack.c.l.s8.bf16 %v1000
          %v1320 = vunpack.c.l.s8.bf16 %v1001
          %v1321 = vunpack.c.l.s8.bf16 %v1002
          %v1322 = vunpack.c.l.s8.bf16 %v1003
          %v1323 = vunpack.c.l.s8.bf16 %v1004
          %v1324 = vunpack.c.l.s8.bf16 %v1005
          %v1325 = vunpack.c.l.s8.bf16 %v1006
          %v1326 = vunpack.c.l.s8.bf16 %v1007
          %v1327 = vunpack.c.l.s8.bf16 %v1008
          %v1328 = vunpack.c.l.s8.bf16 %v1009
          %v1329 = vunpack.c.l.s8.bf16 %v1010
          %v1330 = vunpack.c.l.s8.bf16 %v1011
          %v1331 = vunpack.c.l.s8.bf16 %v1012
          %v1332 = vunpack.c.l.s8.bf16 %v1013
          %v1333 = vunpack.c.l.s8.bf16 %v1014
          %v1653 = vunpack.c.l.b16 %v1015
          %v1654 = vunpack.c.l.b16 %v1016
          %v1655 = vunpack.c.l.b16 %v1017
          %v1656 = vunpack.c.l.b16 %v1018
          %v1657 = vunpack.c.l.b16 %v1019
          %v1658 = vunpack.c.l.b16 %v1020
          %v1659 = vunpack.c.l.b16 %v1021
          %v1660 = vunpack.c.l.b16 %v1022
          %v1661 = vunpack.c.l.b16 %v1023
          %v1662 = vunpack.c.l.b16 %v1024
          %v1663 = vunpack.c.l.b16 %v1025
          %v1664 = vunpack.c.l.b16 %v1026
          %v1665 = vunpack.c.l.b16 %v1027
          %v1666 = vunpack.c.l.b16 %v1028
          %v1667 = vunpack.c.l.b16 %v1029
          %v1668 = vunpack.c.l.b16 %v1030
          %v1669 = vunpack.c.l.b16 %v1031
          %v1670 = vunpack.c.l.b16 %v1032
          %v1671 = vunpack.c.l.b16 %v1033
          %v1672 = vunpack.c.l.b16 %v1034
          %v1673 = vunpack.c.l.b16 %v1035
          %v1674 = vunpack.c.l.b16 %v1036
          %v1675 = vunpack.c.l.b16 %v1037
          %v1676 = vunpack.c.l.b16 %v1038
          %v1677 = vunpack.c.l.b16 %v1039
          %v1678 = vunpack.c.l.b16 %v1040
          %v1679 = vunpack.c.l.b16 %v1041
          %v1680 = vunpack.c.l.b16 %v1042
          %v1681 = vunpack.c.l.b16 %v1043
          %v1682 = vunpack.c.l.b16 %v1044
          %v1683 = vunpack.c.l.b16 %v1045
          %v1684 = vunpack.c.l.b16 %v1046
          %v1685 = vunpack.c.l.b16 %v1047
          %v1686 = vunpack.c.l.b16 %v1048
          %v1687 = vunpack.c.l.b16 %v1049
          %v1688 = vunpack.c.l.b16 %v1050
          %v1689 = vunpack.c.l.b16 %v1051
          %v1690 = vunpack.c.l.b16 %v1052
          %v1691 = vunpack.c.l.b16 %v1053
          %v1692 = vunpack.c.l.b16 %v1054
          %v1693 = vunpack.c.l.b16 %v1055
          %v1694 = vunpack.c.l.b16 %v1056
          %v1695 = vunpack.c.l.b16 %v1057
          %v1696 = vunpack.c.l.b16 %v1058
          %v1697 = vunpack.c.l.b16 %v1059
          %v1698 = vunpack.c.l.b16 %v1060
          %v1699 = vunpack.c.l.b16 %v1061
          %v1700 = vunpack.c.l.b16 %v1062
          %v1701 = vunpack.c.l.b16 %v1063
          %v1702 = vunpack.c.l.b16 %v1064
          %v1703 = vunpack.c.l.b16 %v1065
          %v1704 = vunpack.c.l.b16 %v1066
          %v1705 = vunpack.c.l.b16 %v1067
          %v1706 = vunpack.c.l.b16 %v1068
          %v1707 = vunpack.c.l.b16 %v1069
          %v1708 = vunpack.c.l.b16 %v1070
          %v1709 = vunpack.c.l.b16 %v1071
          %v1710 = vunpack.c.l.b16 %v1072
          %v1711 = vunpack.c.l.b16 %v1073
          %v1712 = vunpack.c.l.b16 %v1074
          %v1713 = vunpack.c.l.b16 %v1075
          %v1714 = vunpack.c.l.b16 %v1076
          %v1715 = vunpack.c.l.b16 %v1077
          %v1716 = vunpack.c.l.b16 %v1078
          %v1717 = vunpack.c.l.b16 %v1079
          %v1718 = vunpack.c.l.b16 %v1080
          %v1719 = vunpack.c.l.b16 %v1081
          %v1720 = vunpack.c.l.b16 %v1082
          %v1721 = vunpack.c.l.b16 %v1083
          %v1722 = vunpack.c.l.b16 %v1084
          %v1723 = vunpack.c.l.b16 %v1085
          %v1724 = vunpack.c.l.b16 %v1086
          %v1725 = vunpack.c.l.b16 %v1087
          %v1726 = vunpack.c.l.b16 %v1088
          %v1727 = vunpack.c.l.b16 %v1089
          %v1728 = vunpack.c.l.b16 %v1090
          %v1729 = vunpack.c.l.b16 %v1091
          %v1730 = vunpack.c.l.b16 %v1092
          %v1731 = vunpack.c.l.b16 %v1093
          %v1732 = vunpack.c.l.b16 %v1094
          %v1733 = vunpack.c.l.b16 %v1095
          %v1734 = vunpack.c.l.b16 %v1096
          %v1735 = vunpack.c.l.b16 %v1097
          %v1736 = vunpack.c.l.b16 %v1098
          %v1737 = vunpack.c.l.b16 %v1099
          %v1738 = vunpack.c.l.b16 %v1100
          %v1739 = vunpack.c.l.b16 %v1101
          %v1740 = vunpack.c.l.b16 %v1102
          %v1741 = vunpack.c.l.b16 %v1103
          %v1742 = vunpack.c.l.b16 %v1104
          %v1743 = vunpack.c.l.b16 %v1105
          %v1744 = vunpack.c.l.b16 %v1106
          %v1745 = vunpack.c.l.b16 %v1107
          %v1746 = vunpack.c.l.b16 %v1108
          %v1747 = vunpack.c.l.b16 %v1109
          %v1748 = vunpack.c.l.b16 %v1110
          %v1749 = vunpack.c.l.b16 %v1111
          %v1750 = vunpack.c.l.b16 %v1112
          %v1751 = vunpack.c.l.b16 %v1113
          %v1752 = vunpack.c.l.b16 %v1114
          %v1753 = vunpack.c.l.b16 %v1115
          %v1754 = vunpack.c.l.b16 %v1116
          %v1755 = vunpack.c.l.b16 %v1117
          %v1756 = vunpack.c.l.b16 %v1118
          %v1757 = vunpack.c.l.b16 %v1119
          %v1758 = vunpack.c.l.b16 %v1120
          %v1759 = vunpack.c.l.b16 %v1121
          %v1760 = vunpack.c.l.b16 %v1122
          %v1761 = vunpack.c.l.b16 %v1123
          %v1762 = vunpack.c.l.b16 %v1124
          %v1763 = vunpack.c.l.b16 %v1125
          %v1764 = vunpack.c.l.b16 %v1126
          %v1765 = vunpack.c.l.b16 %v1127
          %v1766 = vunpack.c.l.b16 %v1128
          %v1767 = vunpack.c.l.b16 %v1129
          %v1768 = vunpack.c.l.b16 %v1130
          %v1769 = vunpack.c.l.b16 %v1131
          %v1770 = vunpack.c.l.b16 %v1132
          %v1771 = vunpack.c.l.b16 %v1133
          %v1772 = vunpack.c.l.b16 %v1134
          %v1773 = vunpack.c.l.b16 %v1135
          %v1774 = vunpack.c.l.b16 %v1136
          %v1775 = vunpack.c.l.b16 %v1137
          %v1776 = vunpack.c.l.b16 %v1138
          %v1777 = vunpack.c.l.b16 %v1139
          %v1778 = vunpack.c.l.b16 %v1140
          %v1779 = vunpack.c.l.b16 %v1141
          %v1780 = vunpack.c.l.b16 %v1142
          %v1781 = vunpack.c.l.b16 %v1143
          %v1782 = vunpack.c.l.b16 %v1144
          %v1783 = vunpack.c.l.b16 %v1145
          %v1784 = vunpack.c.l.b16 %v1146
          %v1785 = vunpack.c.l.b16 %v1147
          %v1786 = vunpack.c.l.b16 %v1148
          %v1787 = vunpack.c.l.b16 %v1149
          %v1788 = vunpack.c.l.b16 %v1150
          %v1789 = vunpack.c.l.b16 %v1151
          %v1790 = vunpack.c.l.b16 %v1152
          %v1791 = vunpack.c.l.b16 %v1153
          %v1792 = vunpack.c.l.b16 %v1154
          %v1793 = vunpack.c.l.b16 %v1155
          %v1794 = vunpack.c.l.b16 %v1156
          %v1795 = vunpack.c.l.b16 %v1157
          %v1796 = vunpack.c.l.b16 %v1158
          %v1797 = vunpack.c.l.b16 %v1159
          %v1798 = vunpack.c.l.b16 %v1160
          %v1799 = vunpack.c.l.b16 %v1161
          %v1800 = vunpack.c.l.b16 %v1162
          %v1801 = vunpack.c.l.b16 %v1163
          %v1802 = vunpack.c.l.b16 %v1164
          %v1803 = vunpack.c.l.b16 %v1165
          %v1804 = vunpack.c.l.b16 %v1166
          %v1805 = vunpack.c.l.b16 %v1167
          %v1806 = vunpack.c.l.b16 %v1168
          %v1807 = vunpack.c.l.b16 %v1169
          %v1808 = vunpack.c.l.b16 %v1170
          %v1809 = vunpack.c.l.b16 %v1171
          %v1810 = vunpack.c.l.b16 %v1172
          %v1811 = vunpack.c.l.b16 %v1173
          %v1812 = vunpack.c.l.b16 %v1174
          %v1813 = vunpack.c.l.b16 %v1175
          %v1814 = vunpack.c.l.b16 %v1176
          %v1815 = vunpack.c.l.b16 %v1177
          %v1816 = vunpack.c.l.b16 %v1178
          %v1817 = vunpack.c.l.b16 %v1179
          %v1818 = vunpack.c.l.b16 %v1180
          %v1819 = vunpack.c.l.b16 %v1181
          %v1820 = vunpack.c.l.b16 %v1182
          %v1821 = vunpack.c.l.b16 %v1183
          %v1822 = vunpack.c.l.b16 %v1184
          %v1823 = vunpack.c.l.b16 %v1185
          %v1824 = vunpack.c.l.b16 %v1186
          %v1825 = vunpack.c.l.b16 %v1187
          %v1826 = vunpack.c.l.b16 %v1188
          %v1827 = vunpack.c.l.b16 %v1189
          %v1828 = vunpack.c.l.b16 %v1190
          %v1829 = vunpack.c.l.b16 %v1191
          %v1830 = vunpack.c.l.b16 %v1192
          %v1831 = vunpack.c.l.b16 %v1193
          %v1832 = vunpack.c.l.b16 %v1194
          %v1833 = vunpack.c.l.b16 %v1195
          %v1834 = vunpack.c.l.b16 %v1196
          %v1835 = vunpack.c.l.b16 %v1197
          %v1836 = vunpack.c.l.b16 %v1198
          %v1837 = vunpack.c.l.b16 %v1199
          %v1838 = vunpack.c.l.b16 %v1200
          %v1839 = vunpack.c.l.b16 %v1201
          %v1840 = vunpack.c.l.b16 %v1202
          %v1841 = vunpack.c.l.b16 %v1203
          %v1842 = vunpack.c.l.b16 %v1204
          %v1843 = vunpack.c.l.b16 %v1205
          %v1844 = vunpack.c.l.b16 %v1206
          %v1845 = vunpack.c.l.b16 %v1207
          %v1846 = vunpack.c.l.b16 %v1208
          %v1847 = vunpack.c.l.b16 %v1209
          %v1848 = vunpack.c.l.b16 %v1210
          %v1849 = vunpack.c.l.b16 %v1211
          %v1850 = vunpack.c.l.b16 %v1212
          %v1851 = vunpack.c.l.b16 %v1213
          %v1852 = vunpack.c.l.b16 %v1214
          %v1853 = vunpack.c.l.b16 %v1215
          %v1854 = vunpack.c.l.b16 %v1216
          %v1855 = vunpack.c.l.b16 %v1217
          %v1856 = vunpack.c.l.b16 %v1218
          %v1857 = vunpack.c.l.b16 %v1219
          %v1858 = vunpack.c.l.b16 %v1220
          %v1859 = vunpack.c.l.b16 %v1221
          %v1860 = vunpack.c.l.b16 %v1222
          %v1861 = vunpack.c.l.b16 %v1223
          %v1862 = vunpack.c.l.b16 %v1224
          %v1863 = vunpack.c.l.b16 %v1225
          %v1864 = vunpack.c.l.b16 %v1226
          %v1865 = vunpack.c.l.b16 %v1227
          %v1866 = vunpack.c.l.b16 %v1228
          %v1867 = vunpack.c.l.b16 %v1229
          %v1868 = vunpack.c.l.b16 %v1230
          %v1869 = vunpack.c.l.b16 %v1231
          %v1870 = vunpack.c.l.b16 %v1232
          %v1871 = vunpack.c.l.b16 %v1233
          %v1872 = vunpack.c.l.b16 %v1234
          %v1873 = vunpack.c.l.b16 %v1235
          %v1874 = vunpack.c.l.b16 %v1236
          %v1875 = vunpack.c.l.b16 %v1237
          %v1876 = vunpack.c.l.b16 %v1238
          %v1877 = vunpack.c.l.b16 %v1239
          %v1878 = vunpack.c.l.b16 %v1240
          %v1879 = vunpack.c.l.b16 %v1241
          %v1880 = vunpack.c.l.b16 %v1242
          %v1881 = vunpack.c.l.b16 %v1243
          %v1882 = vunpack.c.l.b16 %v1244
          %v1883 = vunpack.c.l.b16 %v1245
          %v1884 = vunpack.c.l.b16 %v1246
          %v1885 = vunpack.c.l.b16 %v1247
          %v1886 = vunpack.c.l.b16 %v1248
          %v1887 = vunpack.c.l.b16 %v1249
          %v1888 = vunpack.c.l.b16 %v1250
          %v1889 = vunpack.c.l.b16 %v1251
          %v1890 = vunpack.c.l.b16 %v1252
          %v1891 = vunpack.c.l.b16 %v1253
          %v1892 = vunpack.c.l.b16 %v1254
          %v1893 = vunpack.c.l.b16 %v1255
          %v1894 = vunpack.c.l.b16 %v1256
          %v1895 = vunpack.c.l.b16 %v1257
          %v1896 = vunpack.c.l.b16 %v1258
          %v1897 = vunpack.c.l.b16 %v1259
          %v1898 = vunpack.c.l.b16 %v1260
          %v1899 = vunpack.c.l.b16 %v1261
          %v1900 = vunpack.c.l.b16 %v1262
          %v1901 = vunpack.c.l.b16 %v1263
          %v1902 = vunpack.c.l.b16 %v1264
          %v1903 = vunpack.c.l.b16 %v1265
          %v1904 = vunpack.c.l.b16 %v1266
          %v1905 = vunpack.c.l.b16 %v1267
          %v1906 = vunpack.c.l.b16 %v1268
          %v1907 = vunpack.c.l.b16 %v1269
          %v1908 = vunpack.c.l.b16 %v1270
          %v1909 = vunpack.c.l.b16 %v1271
          %v1910 = vunpack.c.l.b16 %v1272
          %v1911 = vunpack.c.l.b16 %v1273
          %v1912 = vunpack.c.l.b16 %v1274
          %v1913 = vunpack.c.l.b16 %v1275
          %v1914 = vunpack.c.l.b16 %v1276
          %v1915 = vunpack.c.l.b16 %v1277
          %v1916 = vunpack.c.l.b16 %v1278
          %v1917 = vunpack.c.l.b16 %v1279
          %v1918 = vunpack.c.l.b16 %v1280
          %v1919 = vunpack.c.l.b16 %v1281
          %v1920 = vunpack.c.l.b16 %v1282
          %v1921 = vunpack.c.l.b16 %v1283
          %v1922 = vunpack.c.l.b16 %v1284
          %v1923 = vunpack.c.l.b16 %v1285
          %v1924 = vunpack.c.l.b16 %v1286
          %v1925 = vunpack.c.l.b16 %v1287
          %v1926 = vunpack.c.l.b16 %v1288
          %v1927 = vunpack.c.l.b16 %v1289
          %v1928 = vunpack.c.l.b16 %v1290
          %v1929 = vunpack.c.l.b16 %v1291
          %v1930 = vunpack.c.l.b16 %v1292
          %v1931 = vunpack.c.l.b16 %v1293
          %v1932 = vunpack.c.l.b16 %v1294
          %v1933 = vunpack.c.l.b16 %v1295
          %v1934 = vunpack.c.l.b16 %v1296
          %v1935 = vunpack.c.l.b16 %v1297
          %v1936 = vunpack.c.l.b16 %v1298
          %v1937 = vunpack.c.l.b16 %v1299
          %v1938 = vunpack.c.l.b16 %v1300
          %v1939 = vunpack.c.l.b16 %v1301
          %v1940 = vunpack.c.l.b16 %v1302
          %v1941 = vunpack.c.l.b16 %v1303
          %v1942 = vunpack.c.l.b16 %v1304
          %v1943 = vunpack.c.l.b16 %v1305
          %v1944 = vunpack.c.l.b16 %v1306
          %v1945 = vunpack.c.l.b16 %v1307
          %v1946 = vunpack.c.l.b16 %v1308
          %v1947 = vunpack.c.l.b16 %v1309
          %v1948 = vunpack.c.l.b16 %v1310
          %v1949 = vunpack.c.l.b16 %v1311
          %v1950 = vunpack.c.l.b16 %v1312
          %v1951 = vunpack.c.l.b16 %v1313
          %v1952 = vunpack.c.l.b16 %v1314
          %v1953 = vunpack.c.l.b16 %v1315
          %v1954 = vunpack.c.l.b16 %v1316
          %v1955 = vunpack.c.l.b16 %v1317
          %v1956 = vunpack.c.l.b16 %v1318
          %v1957 = vunpack.c.l.b16 %v1319
          %v1958 = vunpack.c.l.b16 %v1320
          %v1959 = vunpack.c.l.b16 %v1321
          %v1960 = vunpack.c.l.b16 %v1322
          %v1961 = vunpack.c.l.b16 %v1323
          %v1962 = vunpack.c.l.b16 %v1324
          %v1963 = vunpack.c.l.b16 %v1325
          %v1964 = vunpack.c.l.b16 %v1326
          %v1965 = vunpack.c.l.b16 %v1327
          %v1966 = vunpack.c.l.b16 %v1328
          %v1967 = vunpack.c.l.b16 %v1329
          %v1968 = vunpack.c.l.b16 %v1330
          %v1969 = vunpack.c.l.b16 %v1331
          %v1970 = vunpack.c.l.b16 %v1332
          %v1971 = vunpack.c.l.b16 %v1333
          %v1972 = vpack.c.b16 %v1654, %v1653
          %v1973 = vpack.c.b16 %v1656, %v1655
          %v1974 = vpack.c.b16 %v1658, %v1657
          %v1975 = vpack.c.b16 %v1660, %v1659
          %v1976 = vpack.c.b16 %v1662, %v1661
          %v1977 = vpack.c.b16 %v1664, %v1663
          %v1978 = vpack.c.b16 %v1666, %v1665
          %v1979 = vpack.c.b16 %v1668, %v1667
          %v1980 = vpack.c.b16 %v1670, %v1669
          %v1981 = vpack.c.b16 %v1672, %v1671
          %v1982 = vpack.c.b16 %v1674, %v1673
          %v1983 = vpack.c.b16 %v1676, %v1675
          %v1984 = vpack.c.b16 %v1678, %v1677
          %v1985 = vpack.c.b16 %v1680, %v1679
          %v1986 = vpack.c.b16 %v1682, %v1681
          %v1987 = vpack.c.b16 %v1684, %v1683
          %v1988 = vpack.c.b16 %v1686, %v1685
          %v1989 = vpack.c.b16 %v1688, %v1687
          %v1990 = vpack.c.b16 %v1690, %v1689
          %v1991 = vpack.c.b16 %v1692, %v1691
          %v1992 = vpack.c.b16 %v1694, %v1693
          %v1993 = vpack.c.b16 %v1696, %v1695
          %v1994 = vpack.c.b16 %v1698, %v1697
          %v1995 = vpack.c.b16 %v1700, %v1699
          %v1996 = vpack.c.b16 %v1702, %v1701
          %v1997 = vpack.c.b16 %v1704, %v1703
          %v1998 = vpack.c.b16 %v1706, %v1705
          %v1999 = vpack.c.b16 %v1708, %v1707
          %v2000 = vpack.c.b16 %v1710, %v1709
          %v2001 = vpack.c.b16 %v1712, %v1711
          %v2002 = vpack.c.b16 %v1714, %v1713
          %v2003 = vpack.c.b16 %v1716, %v1715
          %v2004 = vpack.c.b16 %v1718, %v1717
          %v2005 = vpack.c.b16 %v1720, %v1719
          %v2006 = vpack.c.b16 %v1722, %v1721
          %v2007 = vpack.c.b16 %v1724, %v1723
          %v2008 = vpack.c.b16 %v1726, %v1725
          %v2009 = vpack.c.b16 %v1728, %v1727
          %v2010 = vpack.c.b16 %v1730, %v1729
          %v2011 = vpack.c.b16 %v1732, %v1731
          %v2012 = vpack.c.b16 %v1734, %v1733
          %v2013 = vpack.c.b16 %v1736, %v1735
          %v2014 = vpack.c.b16 %v1738, %v1737
          %v2015 = vpack.c.b16 %v1740, %v1739
          %v2016 = vpack.c.b16 %v1742, %v1741
          %v2017 = vpack.c.b16 %v1744, %v1743
          %v2018 = vpack.c.b16 %v1746, %v1745
          %v2019 = vpack.c.b16 %v1748, %v1747
          %v2020 = vpack.c.b16 %v1750, %v1749
          %v2021 = vpack.c.b16 %v1752, %v1751
          %v2022 = vpack.c.b16 %v1754, %v1753
          %v2023 = vpack.c.b16 %v1756, %v1755
          %v2024 = vpack.c.b16 %v1758, %v1757
          %v2025 = vpack.c.b16 %v1760, %v1759
          %v2026 = vpack.c.b16 %v1762, %v1761
          %v2027 = vpack.c.b16 %v1764, %v1763
          %v2028 = vpack.c.b16 %v1766, %v1765
          %v2029 = vpack.c.b16 %v1768, %v1767
          %v2030 = vpack.c.b16 %v1770, %v1769
          %v2031 = vpack.c.b16 %v1772, %v1771
          %v2032 = vpack.c.b16 %v1774, %v1773
          %v2033 = vpack.c.b16 %v1776, %v1775
          %v2034 = vpack.c.b16 %v1778, %v1777
          %v2035 = vpack.c.b16 %v1780, %v1779
          %v2036 = vpack.c.b16 %v1782, %v1781
          %v2037 = vpack.c.b16 %v1784, %v1783
          %v2038 = vpack.c.b16 %v1786, %v1785
          %v2039 = vpack.c.b16 %v1788, %v1787
          %v2040 = vpack.c.b16 %v1790, %v1789
          %v2041 = vpack.c.b16 %v1792, %v1791
          %v2042 = vpack.c.b16 %v1794, %v1793
          %v2043 = vpack.c.b16 %v1796, %v1795
          %v2044 = vpack.c.b16 %v1798, %v1797
          %v2045 = vpack.c.b16 %v1800, %v1799
          %v2046 = vpack.c.b16 %v1802, %v1801
          %v2047 = vpack.c.b16 %v1804, %v1803
          %v2048 = vpack.c.b16 %v1806, %v1805
          %v2049 = vpack.c.b16 %v1808, %v1807
          %v2050 = vpack.c.b16 %v1810, %v1809
          %v2051 = vpack.c.b16 %v1812, %v1811
          %v2052 = vpack.c.b16 %v1814, %v1813
          %v2053 = vpack.c.b16 %v1816, %v1815
          %v2054 = vpack.c.b16 %v1818, %v1817
          %v2055 = vpack.c.b16 %v1820, %v1819
          %v2056 = vpack.c.b16 %v1822, %v1821
          %v2057 = vpack.c.b16 %v1824, %v1823
          %v2058 = vpack.c.b16 %v1826, %v1825
          %v2059 = vpack.c.b16 %v1828, %v1827
          %v2060 = vpack.c.b16 %v1830, %v1829
          %v2061 = vpack.c.b16 %v1832, %v1831
          %v2062 = vpack.c.b16 %v1834, %v1833
          %v2063 = vpack.c.b16 %v1836, %v1835
          %v2064 = vpack.c.b16 %v1838, %v1837
          %v2065 = vpack.c.b16 %v1840, %v1839
          %v2066 = vpack.c.b16 %v1842, %v1841
          %v2067 = vpack.c.b16 %v1844, %v1843
          %v2068 = vpack.c.b16 %v1846, %v1845
          %v2069 = vpack.c.b16 %v1848, %v1847
          %v2070 = vpack.c.b16 %v1850, %v1849
          %v2071 = vpack.c.b16 %v1852, %v1851
          %v2072 = vpack.c.b16 %v1854, %v1853
          %v2073 = vpack.c.b16 %v1856, %v1855
          %v2074 = vpack.c.b16 %v1858, %v1857
          %v2075 = vpack.c.b16 %v1860, %v1859
          %v2076 = vpack.c.b16 %v1862, %v1861
          %v2077 = vpack.c.b16 %v1864, %v1863
          %v2078 = vpack.c.b16 %v1866, %v1865
          %v2079 = vpack.c.b16 %v1868, %v1867
          %v2080 = vpack.c.b16 %v1870, %v1869
          %v2081 = vpack.c.b16 %v1872, %v1871
          %v2082 = vpack.c.b16 %v1874, %v1873
          %v2083 = vpack.c.b16 %v1876, %v1875
          %v2084 = vpack.c.b16 %v1878, %v1877
          %v2085 = vpack.c.b16 %v1880, %v1879
          %v2086 = vpack.c.b16 %v1882, %v1881
          %v2087 = vpack.c.b16 %v1884, %v1883
          %v2088 = vpack.c.b16 %v1886, %v1885
          %v2089 = vpack.c.b16 %v1888, %v1887
          %v2090 = vpack.c.b16 %v1890, %v1889
          %v2091 = vpack.c.b16 %v1892, %v1891
          %v2092 = vpack.c.b16 %v1894, %v1893
          %v2093 = vpack.c.b16 %v1896, %v1895
          %v2094 = vpack.c.b16 %v1898, %v1897
          %v2095 = vpack.c.b16 %v1900, %v1899
          %v2096 = vpack.c.b16 %v1902, %v1901
          %v2097 = vpack.c.b16 %v1904, %v1903
          %v2098 = vpack.c.b16 %v1906, %v1905
          %v2099 = vpack.c.b16 %v1908, %v1907
          %v2100 = vpack.c.b16 %v1910, %v1909
          %v2101 = vpack.c.b16 %v1912, %v1911
          %v2102 = vpack.c.b16 %v1914, %v1913
          %v2103 = vpack.c.b16 %v1916, %v1915
          %v2104 = vpack.c.b16 %v1918, %v1917
          %v2105 = vpack.c.b16 %v1920, %v1919
          %v2106 = vpack.c.b16 %v1922, %v1921
          %v2107 = vpack.c.b16 %v1924, %v1923
          %v2108 = vpack.c.b16 %v1926, %v1925
          %v2109 = vpack.c.b16 %v1928, %v1927
          %v2110 = vpack.c.b16 %v1930, %v1929
          %v2111 = vpack.c.b16 %v1932, %v1931
          %v2112 = vpack.c.b16 %v1934, %v1933
          %v2113 = vpack.c.b16 %v1936, %v1935
          %v2114 = vpack.c.b16 %v1938, %v1937
          %v2115 = vpack.c.b16 %v1940, %v1939
          %v2116 = vpack.c.b16 %v1942, %v1941
          %v2117 = vpack.c.b16 %v1944, %v1943
          %v2118 = vpack.c.b16 %v1946, %v1945
          %v2119 = vpack.c.b16 %v1948, %v1947
          %v2120 = vpack.c.b16 %v1950, %v1949
          %v2121 = vpack.c.b16 %v1952, %v1951
          %v2122 = vpack.c.b16 %v1954, %v1953
          %v2123 = vpack.c.b16 %v1956, %v1955
          %v2124 = vpack.c.b16 %v1958, %v1957
          %v2125 = vpack.c.b16 %v1960, %v1959
          %v2126 = vpack.c.b16 %v1962, %v1961
          %v2127 = vpack.c.b16 %v1964, %v1963
          %v2128 = vpack.c.b16 %v1966, %v1965
          %v2129 = vpack.c.b16 %v1968, %v1967
          %v2130 = vpack.c.b16 %v1970, %v1969
          %v2131 = vpack.c.b16 %v1971, %v1971
          %vm2291 = vcmask 965632
          %v2293 = vsel %vm2291, %v695, 0
          %vm2295 = vcmask 1042432
          %v2297 = vsel %vm2295, %v2131, 0
          %2299 = vmatprep.subr.bf16.mxu0 0
          %2300 = vmatpush1.bf16.msra.mxu0 %v1972
          %2301 = vmatprep.subr.bf16.mxu0 0
          %2302 = vmatpush1.bf16.msra.mxu0 %v1973
          %2303 = vmatprep.subr.bf16.mxu0 0
          %2304 = vmatpush1.bf16.msra.mxu0 %v1974
          %2305 = vmatprep.subr.bf16.mxu0 0
          %2306 = vmatpush1.bf16.msra.mxu0 %v1975
          %2307 = vmatprep.subr.bf16.mxu0 0
          %2308 = vmatpush1.bf16.msra.mxu0 %v1976
          %2309 = vmatprep.subr.bf16.mxu0 0
          %2310 = vmatpush1.bf16.msra.mxu0 %v1977
          %2311 = vmatprep.subr.bf16.mxu0 0
          %2312 = vmatpush1.bf16.msra.mxu0 %v1978
          %2313 = vmatprep.subr.bf16.mxu0 0
          %2314 = vmatpush1.bf16.msra.mxu0 %v1979
          %2315 = vmatprep.subr.bf16.mxu0 0
          %2316 = vmatpush1.bf16.msra.mxu0 %v1980
          %2317 = vmatprep.subr.bf16.mxu0 0
          %2318 = vmatpush1.bf16.msra.mxu0 %v1981
          %2319 = vmatprep.subr.bf16.mxu0 0
          %2320 = vmatpush1.bf16.msra.mxu0 %v1982
          %2321 = vmatprep.subr.bf16.mxu0 0
          %2322 = vmatpush1.bf16.msra.mxu0 %v1983
          %2323 = vmatprep.subr.bf16.mxu0 0
          %2324 = vmatpush1.bf16.msra.mxu0 %v1984
          %2325 = vmatprep.subr.bf16.mxu0 0
          %2326 = vmatpush1.bf16.msra.mxu0 %v1985
          %2327 = vmatprep.subr.bf16.mxu0 0
          %2328 = vmatpush1.bf16.msra.mxu0 %v1986
          %2329 = vmatprep.subr.bf16.mxu0 0
          %2330 = vmatpush1.bf16.msra.mxu0 %v1987
          %2331 = vmatprep.mubr.bf16.mxu0 %v677
          %2332 = vmatmul.mubr.bf16.gmra.mrb[0].mxu0 %v676
          %v2333 = vpop.f32.mrb[0].mxu0
          %v2334 = vadd.f32 0.0, %v2333
          %v2335 = vpop.f32.mrb[0].mxu0
          %v2336 = vpop.f32.mrb[0].mxu0
          %v2337 = vpop.f32.mrb[0].mxu0
          %2338 = vdwg.mxu0
          %2339 = vmatprep.subr.bf16.mxu0 0
          %2340 = vmatpush1.bf16.msra.mxu0 %v1988
          %2341 = vmatprep.subr.bf16.mxu0 0
          %2342 = vmatpush1.bf16.msra.mxu0 %v1989
          %2343 = vmatprep.subr.bf16.mxu0 0
          %2344 = vmatpush1.bf16.msra.mxu0 %v1990
          %2345 = vmatprep.subr.bf16.mxu0 0
          %2346 = vmatpush1.bf16.msra.mxu0 %v1991
          %2347 = vmatprep.subr.bf16.mxu0 0
          %2348 = vmatpush1.bf16.msra.mxu0 %v1992
          %2349 = vmatprep.subr.bf16.mxu0 0
          %2350 = vmatpush1.bf16.msra.mxu0 %v1993
          %2351 = vmatprep.subr.bf16.mxu0 0
          %2352 = vmatpush1.bf16.msra.mxu0 %v1994
          %2353 = vmatprep.subr.bf16.mxu0 0
          %2354 = vmatpush1.bf16.msra.mxu0 %v1995
          %2355 = vmatprep.subr.bf16.mxu0 0
          %2356 = vmatpush1.bf16.msra.mxu0 %v1996
          %2357 = vmatprep.subr.bf16.mxu0 0
          %2358 = vmatpush1.bf16.msra.mxu0 %v1997
          %2359 = vmatprep.subr.bf16.mxu0 0
          %2360 = vmatpush1.bf16.msra.mxu0 %v1998
          %2361 = vmatprep.subr.bf16.mxu0 0
          %2362 = vmatpush1.bf16.msra.mxu0 %v1999
          %2363 = vmatprep.subr.bf16.mxu0 0
          %2364 = vmatpush1.bf16.msra.mxu0 %v2000
          %2365 = vmatprep.subr.bf16.mxu0 0
          %2366 = vmatpush1.bf16.msra.mxu0 %v2001
          %2367 = vmatprep.subr.bf16.mxu0 0
          %2368 = vmatpush1.bf16.msra.mxu0 %v2002
          %2369 = vmatprep.subr.bf16.mxu0 0
          %2370 = vmatpush1.bf16.msra.mxu0 %v2003
          %2371 = vmatprep.mubr.bf16.mxu0 %v679
          %2372 = vmatmul.mubr.bf16.gmra.mrb[0].mxu0 %v678
          %v2373 = vpop.f32.mrb[0].mxu0
          %v2374 = vadd.f32 %v2334, %v2373
          %v2375 = vpop.f32.mrb[0].mxu0
          %v2376 = vpop.f32.mrb[0].mxu0
          %v2377 = vpop.f32.mrb[0].mxu0
          %2378 = vdwg.mxu0
          %2379 = vmatprep.subr.bf16.mxu0 0
          %2380 = vmatpush1.bf16.msra.mxu0 %v2004
          %2381 = vmatprep.subr.bf16.mxu0 0
          %2382 = vmatpush1.bf16.msra.mxu0 %v2005
          %2383 = vmatprep.subr.bf16.mxu0 0
          %2384 = vmatpush1.bf16.msra.mxu0 %v2006
          %2385 = vmatprep.subr.bf16.mxu0 0
          %2386 = vmatpush1.bf16.msra.mxu0 %v2007
          %2387 = vmatprep.subr.bf16.mxu0 0
          %2388 = vmatpush1.bf16.msra.mxu0 %v2008
          %2389 = vmatprep.subr.bf16.mxu0 0
          %2390 = vmatpush1.bf16.msra.mxu0 %v2009
          %2391 = vmatprep.subr.bf16.mxu0 0
          %2392 = vmatpush1.bf16.msra.mxu0 %v2010
          %2393 = vmatprep.subr.bf16.mxu0 0
          %2394 = vmatpush1.bf16.msra.mxu0 %v2011
          %2395 = vmatprep.subr.bf16.mxu0 0
          %2396 = vmatpush1.bf16.msra.mxu0 %v2012
          %2397 = vmatprep.subr.bf16.mxu0 0
          %2398 = vmatpush1.bf16.msra.mxu0 %v2013
          %2399 = vmatprep.subr.bf16.mxu0 0
          %2400 = vmatpush1.bf16.msra.mxu0 %v2014
          %2401 = vmatprep.subr.bf16.mxu0 0
          %2402 = vmatpush1.bf16.msra.mxu0 %v2015
          %2403 = vmatprep.subr.bf16.mxu0 0
          %2404 = vmatpush1.bf16.msra.mxu0 %v2016
          %2405 = vmatprep.subr.bf16.mxu0 0
          %2406 = vmatpush1.bf16.msra.mxu0 %v2017
          %2407 = vmatprep.subr.bf16.mxu0 0
          %2408 = vmatpush1.bf16.msra.mxu0 %v2018
          %2409 = vmatprep.subr.bf16.mxu0 0
          %2410 = vmatpush1.bf16.msra.mxu0 %v2019
          %2411 = vmatprep.mubr.bf16.mxu0 %v681
          %2412 = vmatmul.mubr.bf16.gmra.mrb[0].mxu0 %v680
          %v2413 = vpop.f32.mrb[0].mxu0
          %v2414 = vadd.f32 %v2374, %v2413
          %v2415 = vpop.f32.mrb[0].mxu0
          %v2416 = vpop.f32.mrb[0].mxu0
          %v2417 = vpop.f32.mrb[0].mxu0
          %2418 = vdwg.mxu0
          %2419 = vmatprep.subr.bf16.mxu0 0
          %2420 = vmatpush1.bf16.msra.mxu0 %v2020
          %2421 = vmatprep.subr.bf16.mxu0 0
          %2422 = vmatpush1.bf16.msra.mxu0 %v2021
          %2423 = vmatprep.subr.bf16.mxu0 0
          %2424 = vmatpush1.bf16.msra.mxu0 %v2022
          %2425 = vmatprep.subr.bf16.mxu0 0
          %2426 = vmatpush1.bf16.msra.mxu0 %v2023
          %2427 = vmatprep.subr.bf16.mxu0 0
          %2428 = vmatpush1.bf16.msra.mxu0 %v2024
          %2429 = vmatprep.subr.bf16.mxu0 0
          %2430 = vmatpush1.bf16.msra.mxu0 %v2025
          %2431 = vmatprep.subr.bf16.mxu0 0
          %2432 = vmatpush1.bf16.msra.mxu0 %v2026
          %2433 = vmatprep.subr.bf16.mxu0 0
          %2434 = vmatpush1.bf16.msra.mxu0 %v2027
          %2435 = vmatprep.subr.bf16.mxu0 0
          %2436 = vmatpush1.bf16.msra.mxu0 %v2028
          %2437 = vmatprep.subr.bf16.mxu0 0
          %2438 = vmatpush1.bf16.msra.mxu0 %v2029
          %2439 = vmatprep.subr.bf16.mxu0 0
          %2440 = vmatpush1.bf16.msra.mxu0 %v2030
          %2441 = vmatprep.subr.bf16.mxu0 0
          %2442 = vmatpush1.bf16.msra.mxu0 %v2031
          %2443 = vmatprep.subr.bf16.mxu0 0
          %2444 = vmatpush1.bf16.msra.mxu0 %v2032
          %2445 = vmatprep.subr.bf16.mxu0 0
          %2446 = vmatpush1.bf16.msra.mxu0 %v2033
          %2447 = vmatprep.subr.bf16.mxu0 0
          %2448 = vmatpush1.bf16.msra.mxu0 %v2034
          %2449 = vmatprep.subr.bf16.mxu0 0
          %2450 = vmatpush1.bf16.msra.mxu0 %v2035
          %2451 = vmatprep.mubr.bf16.mxu0 %v683
          %2452 = vmatmul.mubr.bf16.gmra.mrb[0].mxu0 %v682
          %v2453 = vpop.f32.mrb[0].mxu0
          %v2454 = vadd.f32 %v2414, %v2453
          %v2455 = vpop.f32.mrb[0].mxu0
          %v2456 = vpop.f32.mrb[0].mxu0
          %v2457 = vpop.f32.mrb[0].mxu0
          %2458 = vdwg.mxu0
          %2459 = vmatprep.subr.bf16.mxu0 0
          %2460 = vmatpush1.bf16.msra.mxu0 %v2036
          %2461 = vmatprep.subr.bf16.mxu0 0
          %2462 = vmatpush1.bf16.msra.mxu0 %v2037
          %2463 = vmatprep.subr.bf16.mxu0 0
          %2464 = vmatpush1.bf16.msra.mxu0 %v2038
          %2465 = vmatprep.subr.bf16.mxu0 0
          %2466 = vmatpush1.bf16.msra.mxu0 %v2039
          %2467 = vmatprep.subr.bf16.mxu0 0
          %2468 = vmatpush1.bf16.msra.mxu0 %v2040
          %2469 = vmatprep.subr.bf16.mxu0 0
          %2470 = vmatpush1.bf16.msra.mxu0 %v2041
          %2471 = vmatprep.subr.bf16.mxu0 0
          %2472 = vmatpush1.bf16.msra.mxu0 %v2042
          %2473 = vmatprep.subr.bf16.mxu0 0
          %2474 = vmatpush1.bf16.msra.mxu0 %v2043
          %2475 = vmatprep.subr.bf16.mxu0 0
          %2476 = vmatpush1.bf16.msra.mxu0 %v2044
          %2477 = vmatprep.subr.bf16.mxu0 0
          %2478 = vmatpush1.bf16.msra.mxu0 %v2045
          %2479 = vmatprep.subr.bf16.mxu0 0
          %2480 = vmatpush1.bf16.msra.mxu0 %v2046
          %2481 = vmatprep.subr.bf16.mxu0 0
          %2482 = vmatpush1.bf16.msra.mxu0 %v2047
          %2483 = vmatprep.subr.bf16.mxu0 0
          %2484 = vmatpush1.bf16.msra.mxu0 %v2048
          %2485 = vmatprep.subr.bf16.mxu0 0
          %2486 = vmatpush1.bf16.msra.mxu0 %v2049
          %2487 = vmatprep.subr.bf16.mxu0 0
          %2488 = vmatpush1.bf16.msra.mxu0 %v2050
          %2489 = vmatprep.subr.bf16.mxu0 0
          %2490 = vmatpush1.bf16.msra.mxu0 %v2051
          %2491 = vmatprep.mubr.bf16.mxu0 %v685
          %2492 = vmatmul.mubr.bf16.gmra.mrb[0].mxu0 %v684
          %v2493 = vpop.f32.mrb[0].mxu0
          %v2494 = vadd.f32 %v2454, %v2493
          %v2495 = vpop.f32.mrb[0].mxu0
          %v2496 = vpop.f32.mrb[0].mxu0
          %v2497 = vpop.f32.mrb[0].mxu0
          %2498 = vdwg.mxu0
          %2499 = vmatprep.subr.bf16.mxu0 0
          %2500 = vmatpush1.bf16.msra.mxu0 %v2052
          %2501 = vmatprep.subr.bf16.mxu0 0
          %2502 = vmatpush1.bf16.msra.mxu0 %v2053
          %2503 = vmatprep.subr.bf16.mxu0 0
          %2504 = vmatpush1.bf16.msra.mxu0 %v2054
          %2505 = vmatprep.subr.bf16.mxu0 0
          %2506 = vmatpush1.bf16.msra.mxu0 %v2055
          %2507 = vmatprep.subr.bf16.mxu0 0
          %2508 = vmatpush1.bf16.msra.mxu0 %v2056
          %2509 = vmatprep.subr.bf16.mxu0 0
          %2510 = vmatpush1.bf16.msra.mxu0 %v2057
          %2511 = vmatprep.subr.bf16.mxu0 0
          %2512 = vmatpush1.bf16.msra.mxu0 %v2058
          %2513 = vmatprep.subr.bf16.mxu0 0
          %2514 = vmatpush1.bf16.msra.mxu0 %v2059
          %2515 = vmatprep.subr.bf16.mxu0 0
          %2516 = vmatpush1.bf16.msra.mxu0 %v2060
          %2517 = vmatprep.subr.bf16.mxu0 0
          %2518 = vmatpush1.bf16.msra.mxu0 %v2061
          %2519 = vmatprep.subr.bf16.mxu0 0
          %2520 = vmatpush1.bf16.msra.mxu0 %v2062
          %2521 = vmatprep.subr.bf16.mxu0 0
          %2522 = vmatpush1.bf16.msra.mxu0 %v2063
          %2523 = vmatprep.subr.bf16.mxu0 0
          %2524 = vmatpush1.bf16.msra.mxu0 %v2064
          %2525 = vmatprep.subr.bf16.mxu0 0
          %2526 = vmatpush1.bf16.msra.mxu0 %v2065
          %2527 = vmatprep.subr.bf16.mxu0 0
          %2528 = vmatpush1.bf16.msra.mxu0 %v2066
          %2529 = vmatprep.subr.bf16.mxu0 0
          %2530 = vmatpush1.bf16.msra.mxu0 %v2067
          %2531 = vmatprep.mubr.bf16.mxu0 %v687
          %2532 = vmatmul.mubr.bf16.gmra.mrb[0].mxu0 %v686
          %v2533 = vpop.f32.mrb[0].mxu0
          %v2534 = vadd.f32 %v2494, %v2533
          %v2535 = vpop.f32.mrb[0].mxu0
          %v2536 = vpop.f32.mrb[0].mxu0
          %v2537 = vpop.f32.mrb[0].mxu0
          %2538 = vdwg.mxu0
          %2539 = vmatprep.subr.bf16.mxu0 0
          %2540 = vmatpush1.bf16.msra.mxu0 %v2068
          %2541 = vmatprep.subr.bf16.mxu0 0
          %2542 = vmatpush1.bf16.msra.mxu0 %v2069
          %2543 = vmatprep.subr.bf16.mxu0 0
          %2544 = vmatpush1.bf16.msra.mxu0 %v2070
          %2545 = vmatprep.subr.bf16.mxu0 0
          %2546 = vmatpush1.bf16.msra.mxu0 %v2071
          %2547 = vmatprep.subr.bf16.mxu0 0
          %2548 = vmatpush1.bf16.msra.mxu0 %v2072
          %2549 = vmatprep.subr.bf16.mxu0 0
          %2550 = vmatpush1.bf16.msra.mxu0 %v2073
          %2551 = vmatprep.subr.bf16.mxu0 0
          %2552 = vmatpush1.bf16.msra.mxu0 %v2074
          %2553 = vmatprep.subr.bf16.mxu0 0
          %2554 = vmatpush1.bf16.msra.mxu0 %v2075
          %2555 = vmatprep.subr.bf16.mxu0 0
          %2556 = vmatpush1.bf16.msra.mxu0 %v2076
          %2557 = vmatprep.subr.bf16.mxu0 0
          %2558 = vmatpush1.bf16.msra.mxu0 %v2077
          %2559 = vmatprep.subr.bf16.mxu0 0
          %2560 = vmatpush1.bf16.msra.mxu0 %v2078
          %2561 = vmatprep.subr.bf16.mxu0 0
          %2562 = vmatpush1.bf16.msra.mxu0 %v2079
          %2563 = vmatprep.subr.bf16.mxu0 0
          %2564 = vmatpush1.bf16.msra.mxu0 %v2080
          %2565 = vmatprep.subr.bf16.mxu0 0
          %2566 = vmatpush1.bf16.msra.mxu0 %v2081
          %2567 = vmatprep.subr.bf16.mxu0 0
          %2568 = vmatpush1.bf16.msra.mxu0 %v2082
          %2569 = vmatprep.subr.bf16.mxu0 0
          %2570 = vmatpush1.bf16.msra.mxu0 %v2083
          %2571 = vmatprep.mubr.bf16.mxu0 %v689
          %2572 = vmatmul.mubr.bf16.gmra.mrb[0].mxu0 %v688
          %v2573 = vpop.f32.mrb[0].mxu0
          %v2574 = vadd.f32 %v2534, %v2573
          %v2575 = vpop.f32.mrb[0].mxu0
          %v2576 = vpop.f32.mrb[0].mxu0
          %v2577 = vpop.f32.mrb[0].mxu0
          %2578 = vdwg.mxu0
          %2579 = vmatprep.subr.bf16.mxu0 0
          %2580 = vmatpush1.bf16.msra.mxu0 %v2084
          %2581 = vmatprep.subr.bf16.mxu0 0
          %2582 = vmatpush1.bf16.msra.mxu0 %v2085
          %2583 = vmatprep.subr.bf16.mxu0 0
          %2584 = vmatpush1.bf16.msra.mxu0 %v2086
          %2585 = vmatprep.subr.bf16.mxu0 0
          %2586 = vmatpush1.bf16.msra.mxu0 %v2087
          %2587 = vmatprep.subr.bf16.mxu0 0
          %2588 = vmatpush1.bf16.msra.mxu0 %v2088
          %2589 = vmatprep.subr.bf16.mxu0 0
          %2590 = vmatpush1.bf16.msra.mxu0 %v2089
          %2591 = vmatprep.subr.bf16.mxu0 0
          %2592 = vmatpush1.bf16.msra.mxu0 %v2090
          %2593 = vmatprep.subr.bf16.mxu0 0
          %2594 = vmatpush1.bf16.msra.mxu0 %v2091
          %2595 = vmatprep.subr.bf16.mxu0 0
          %2596 = vmatpush1.bf16.msra.mxu0 %v2092
          %2597 = vmatprep.subr.bf16.mxu0 0
          %2598 = vmatpush1.bf16.msra.mxu0 %v2093
          %2599 = vmatprep.subr.bf16.mxu0 0
          %2600 = vmatpush1.bf16.msra.mxu0 %v2094
          %2601 = vmatprep.subr.bf16.mxu0 0
          %2602 = vmatpush1.bf16.msra.mxu0 %v2095
          %2603 = vmatprep.subr.bf16.mxu0 0
          %2604 = vmatpush1.bf16.msra.mxu0 %v2096
          %2605 = vmatprep.subr.bf16.mxu0 0
          %2606 = vmatpush1.bf16.msra.mxu0 %v2097
          %2607 = vmatprep.subr.bf16.mxu0 0
          %2608 = vmatpush1.bf16.msra.mxu0 %v2098
          %2609 = vmatprep.subr.bf16.mxu0 0
          %2610 = vmatpush1.bf16.msra.mxu0 %v2099
          %2611 = vmatprep.mubr.bf16.mxu0 %v691
          %2612 = vmatmul.mubr.bf16.gmra.mrb[0].mxu0 %v690
          %v2613 = vpop.f32.mrb[0].mxu0
          %v2614 = vadd.f32 %v2574, %v2613
          %v2615 = vpop.f32.mrb[0].mxu0
          %v2616 = vpop.f32.mrb[0].mxu0
          %v2617 = vpop.f32.mrb[0].mxu0
          %2618 = vdwg.mxu0
          %2619 = vmatprep.subr.bf16.mxu0 0
          %2620 = vmatpush1.bf16.msra.mxu0 %v2100
          %2621 = vmatprep.subr.bf16.mxu0 0
          %2622 = vmatpush1.bf16.msra.mxu0 %v2101
          %2623 = vmatprep.subr.bf16.mxu0 0
          %2624 = vmatpush1.bf16.msra.mxu0 %v2102
          %2625 = vmatprep.subr.bf16.mxu0 0
          %2626 = vmatpush1.bf16.msra.mxu0 %v2103
          %2627 = vmatprep.subr.bf16.mxu0 0
          %2628 = vmatpush1.bf16.msra.mxu0 %v2104
          %2629 = vmatprep.subr.bf16.mxu0 0
          %2630 = vmatpush1.bf16.msra.mxu0 %v2105
          %2631 = vmatprep.subr.bf16.mxu0 0
          %2632 = vmatpush1.bf16.msra.mxu0 %v2106
          %2633 = vmatprep.subr.bf16.mxu0 0
          %2634 = vmatpush1.bf16.msra.mxu0 %v2107
          %2635 = vmatprep.subr.bf16.mxu0 0
          %2636 = vmatpush1.bf16.msra.mxu0 %v2108
          %2637 = vmatprep.subr.bf16.mxu0 0
          %2638 = vmatpush1.bf16.msra.mxu0 %v2109
          %2639 = vmatprep.subr.bf16.mxu0 0
          %2640 = vmatpush1.bf16.msra.mxu0 %v2110
          %2641 = vmatprep.subr.bf16.mxu0 0
          %2642 = vmatpush1.bf16.msra.mxu0 %v2111
          %2643 = vmatprep.subr.bf16.mxu0 0
          %2644 = vmatpush1.bf16.msra.mxu0 %v2112
          %2645 = vmatprep.subr.bf16.mxu0 0
          %2646 = vmatpush1.bf16.msra.mxu0 %v2113
          %2647 = vmatprep.subr.bf16.mxu0 0
          %2648 = vmatpush1.bf16.msra.mxu0 %v2114
          %2649 = vmatprep.subr.bf16.mxu0 0
          %2650 = vmatpush1.bf16.msra.mxu0 %v2115
          %2651 = vmatprep.mubr.bf16.mxu0 %v693
          %2652 = vmatmul.mubr.bf16.gmra.mrb[0].mxu0 %v692
          %v2653 = vpop.f32.mrb[0].mxu0
          %v2654 = vadd.f32 %v2614, %v2653
          %v2655 = vpop.f32.mrb[0].mxu0
          %v2656 = vpop.f32.mrb[0].mxu0
          %v2657 = vpop.f32.mrb[0].mxu0
          %2658 = vdwg.mxu0
          %2659 = vmatprep.subr.bf16.mxu0 0
          %2660 = vmatpush1.bf16.msra.mxu0 %v2116
          %2661 = vmatprep.subr.bf16.mxu0 0
          %2662 = vmatpush1.bf16.msra.mxu0 %v2117
          %2663 = vmatprep.subr.bf16.mxu0 0
          %2664 = vmatpush1.bf16.msra.mxu0 %v2118
          %2665 = vmatprep.subr.bf16.mxu0 0
          %2666 = vmatpush1.bf16.msra.mxu0 %v2119
          %2667 = vmatprep.subr.bf16.mxu0 0
          %2668 = vmatpush1.bf16.msra.mxu0 %v2120
          %2669 = vmatprep.subr.bf16.mxu0 0
          %2670 = vmatpush1.bf16.msra.mxu0 %v2121
          %2671 = vmatprep.subr.bf16.mxu0 0
          %2672 = vmatpush1.bf16.msra.mxu0 %v2122
          %2673 = vmatprep.subr.bf16.mxu0 0
          %2674 = vmatpush1.bf16.msra.mxu0 %v2123
          %2675 = vmatprep.subr.bf16.mxu0 0
          %2676 = vmatpush1.bf16.msra.mxu0 %v2124
          %2677 = vmatprep.subr.bf16.mxu0 0
          %2678 = vmatpush1.bf16.msra.mxu0 %v2125
          %2679 = vmatprep.subr.bf16.mxu0 0
          %2680 = vmatpush1.bf16.msra.mxu0 %v2126
          %2681 = vmatprep.subr.bf16.mxu0 0
          %2682 = vmatpush1.bf16.msra.mxu0 %v2127
          %2683 = vmatprep.subr.bf16.mxu0 0
          %2684 = vmatpush1.bf16.msra.mxu0 %v2128
          %2685 = vmatprep.subr.bf16.mxu0 0
          %2686 = vmatpush1.bf16.msra.mxu0 %v2129
          %2687 = vmatprep.subr.bf16.mxu0 0
          %2688 = vmatpush1.bf16.msra.mxu0 %v2130
          %2689 = vmatprep.subr.bf16.mxu0 0
          %2690 = vmatpush1.bf16.msra.mxu0 %v2297
          %2691 = vmatprep.mubr.bf16.mxu0 %v2293
          %2692 = vmatmul.mubr.bf16.gmra.mrb[0].mxu0 %v694
          %v2693 = vpop.f32.mrb[0].mxu0
          %v2694 = vadd.f32 %v2654, %v2693
          %v2695 = vpop.f32.mrb[0].mxu0
          %v2696 = vpop.f32.mrb[0].mxu0
          %v2697 = vpop.f32.mrb[0].mxu0
          %2698 = vdwg.mxu0
          %v2699 = vld [vmem:[%s2] sm:$0x1]
          %v2700 = vmul.f32 %v2694, %v2699
          %v2701 = vld [vmem:[%s3] sm:$0x1]
          %v2702 = vadd.f32 %v2700, %v2701
          %v2703 = vmax.f32 %v2702, 0.0
          %v2704 = vand.u32 2147483647, %v2702
          %v2705 = vsub.f32 0.0, %v2704
          %v2706 = vmul.f32 %v2705, 1.442695
          %v2707 = vpow.pop %v2706
          %v2708 = vadd.f32 %v2707, 1.0
          %v2709 = vlog2.pop %v2708
          %v2710 = vmul.f32 %v2709, 0.6931472
          %v2711 = vmul.f32 -0.5, %v2707
          %v2712 = vadd.f32 %v2711, 1.0
          %v2713 = vmul.f32 %v2712, %v2707
          %v2714 = vand.u32 2147483647, %v2707
          %vm2715 = vcmp.lt.f32.partialorder %v2714, 0.0004427343
          %v2716 = vsel %vm2715, %v2713, %v2710
          %v2717 = vadd.f32 %v2703, %v2716
          %v2718 = vpack.c.bf16 %v2717, %v2717
          %v2719 = vld [vmem:[%s4] sm:$0xf]
          %v2720 = vld [vmem:[%s4 + $0x4] sm:$0xf]
          %v2721 = vld [vmem:[%s4 + $0x8] sm:$0xf]
          %v2722 = vld [vmem:[%s4 + $0xc] sm:$0xf]
          %v2723 = vld [vmem:[%s4 + $0x10] sm:$0xf]
          %v2724 = vld [vmem:[%s4 + $0x14] sm:$0xf]
          %v2725 = vld [vmem:[%s4 + $0x18] sm:$0xf]
          %v2726 = vld [vmem:[%s4 + $0x1c] sm:$0xf]
          %v2727 = vld [vmem:[%s4 + $0x20] sm:$0xf]
          %v2728 = vld [vmem:[%s4 + $0x24] sm:$0xf]
          %v2729 = vld [vmem:[%s4 + $0x28] sm:$0xf]
          %v2730 = vld [vmem:[%s4 + $0x2c] sm:$0xf]
          %v2731 = vld [vmem:[%s4 + $0x30] sm:$0xf]
          %v2732 = vld [vmem:[%s4 + $0x34] sm:$0xf]
          %v2733 = vld [vmem:[%s4 + $0x38] sm:$0xf]
          %v2734 = vld [vmem:[%s4 + $0x3c] sm:$0xf]
          %v2735 = vld [vmem:[%s5] sm:$0x1]
          %v2752 = vunpack.c.l.b16 %v2719
          %v2753 = vunpack.c.l.b16 %v2720
          %v2754 = vunpack.c.l.b16 %v2721
          %v2755 = vunpack.c.l.b16 %v2722
          %v2756 = vunpack.c.l.b16 %v2723
          %v2757 = vunpack.c.l.b16 %v2724
          %v2758 = vunpack.c.l.b16 %v2725
          %v2759 = vunpack.c.l.b16 %v2726
          %v2760 = vunpack.c.l.b16 %v2727
          %v2761 = vunpack.c.l.b16 %v2728
          %v2762 = vunpack.c.l.b16 %v2729
          %v2763 = vunpack.c.l.b16 %v2730
          %v2764 = vunpack.c.l.b16 %v2731
          %v2765 = vunpack.c.l.b16 %v2732
          %v2766 = vunpack.c.l.b16 %v2733
          %v2767 = vunpack.c.l.b16 %v2734
          %v2768 = vpack.c.b16 %v2753, %v2752
          %v2769 = vpack.c.b16 %v2755, %v2754
          %v2770 = vpack.c.b16 %v2757, %v2756
          %v2771 = vpack.c.b16 %v2759, %v2758
          %v2772 = vpack.c.b16 %v2761, %v2760
          %v2773 = vpack.c.b16 %v2763, %v2762
          %v2774 = vpack.c.b16 %v2765, %v2764
          %v2775 = vpack.c.b16 %v2767, %v2766
          %2784 = vmatprep.subr.bf16.mxu0 0
          %2785 = vmatpush1.bf16.msra.mxu0 %v2768
          %2786 = vmatprep.subr.bf16.mxu0 0
          %2787 = vmatpush1.bf16.msra.mxu0 %v2769
          %2788 = vmatprep.subr.bf16.mxu0 0
          %2789 = vmatpush1.bf16.msra.mxu0 %v2770
          %2790 = vmatprep.subr.bf16.mxu0 0
          %2791 = vmatpush1.bf16.msra.mxu0 %v2771
          %2792 = vmatprep.subr.bf16.mxu0 0
          %2793 = vmatpush1.bf16.msra.mxu0 %v2772
          %2794 = vmatprep.subr.bf16.mxu0 0
          %2795 = vmatpush1.bf16.msra.mxu0 %v2773
          %2796 = vmatprep.subr.bf16.mxu0 0
          %2797 = vmatpush1.bf16.msra.mxu0 %v2774
          %2798 = vmatprep.subr.bf16.mxu0 0
          %2799 = vmatpush1.bf16.msra.mxu0 %v2775
          %2800 = vmatprep.subr.bf16.mxu0 0
          %2801 = vmatpush1.bf16.msra.mxu0 0
          %2802 = vmatprep.subr.bf16.mxu0 0
          %2803 = vmatpush1.bf16.msra.mxu0 0
          %2804 = vmatprep.subr.bf16.mxu0 0
          %2805 = vmatpush1.bf16.msra.mxu0 0
          %2806 = vmatprep.subr.bf16.mxu0 0
          %2807 = vmatpush1.bf16.msra.mxu0 0
          %2808 = vmatprep.subr.bf16.mxu0 0
          %2809 = vmatpush1.bf16.msra.mxu0 0
          %2810 = vmatprep.subr.bf16.mxu0 0
          %2811 = vmatpush1.bf16.msra.mxu0 0
          %2812 = vmatprep.subr.bf16.mxu0 0
          %2813 = vmatpush1.bf16.msra.mxu0 0
          %2814 = vmatprep.subr.bf16.mxu0 0
          %2815 = vmatpush1.bf16.msra.mxu0 0
          %2816 = vmatprep.mubr.bf16.mxu0 0
          %2817 = vmatmul.mubr.bf16.gmra.mrb[0].mxu0 %v2718
          %v2818 = vpop.f32.mrb[0].mxu0
          %v2819 = vadd.f32 %v2735, %v2818
          %v2820 = vpop.f32.mrb[0].mxu0
          %v2821 = vpop.f32.mrb[0].mxu0
          %v2822 = vpop.f32.mrb[0].mxu0
          %2823 = vdwg.mxu0
          %v2824 = vmax.f32 %v2819, 0.0
          %v2825 = vand.u32 2147483647, %v2819
          %v2826 = vsub.f32 0.0, %v2825
          %v2827 = vmul.f32 %v2826, 1.442695
          %v2828 = vpow.pop %v2827
          %v2829 = vadd.f32 %v2828, 1.0
          %v2830 = vlog2.pop %v2829
          %v2831 = vmul.f32 %v2830, 0.6931472
          %v2832 = vmul.f32 -0.5, %v2828
          %v2833 = vadd.f32 %v2832, 1.0
          %v2834 = vmul.f32 %v2833, %v2828
          %v2835 = vand.u32 2147483647, %v2828
          %vm2836 = vcmp.lt.f32.partialorder %v2835, 0.0004427343
          %v2837 = vsel %vm2836, %v2834, %v2831
          %v2838 = vadd.f32 %v2824, %v2837
          %v2839 = vpack.c.bf16 %v2838, %v2838
          %v2840 = vld [vmem:[%s6] sm:$0xf]
          %v2841 = vld [vmem:[%s6 + $0x4] sm:$0xf]
          %v2842 = vld [vmem:[%s6 + $0x8] sm:$0xf]
          %v2843 = vld [vmem:[%s6 + $0xc] sm:$0xf]
          %v2844 = vld [vmem:[%s6 + $0x10] sm:$0xf]
          %v2845 = vld [vmem:[%s6 + $0x14] sm:$0xf]
          %v2846 = vld [vmem:[%s6 + $0x18] sm:$0xf]
          %v2847 = vld [vmem:[%s6 + $0x1c] sm:$0xf]
          %v2848 = vld [vmem:[%s6 + $0x20] sm:$0xf]
          %v2849 = vld [vmem:[%s6 + $0x24] sm:$0xf]
          %v2850 = vld [vmem:[%s6 + $0x28] sm:$0xf]
          %v2851 = vld [vmem:[%s6 + $0x2c] sm:$0xf]
          %v2852 = vld [vmem:[%s6 + $0x30] sm:$0xf]
          %v2853 = vld [vmem:[%s6 + $0x34] sm:$0xf]
          %v2854 = vld [vmem:[%s6 + $0x38] sm:$0xf]
          %v2855 = vld [vmem:[%s6 + $0x3c] sm:$0xf]
          %v2856 = vld [vmem:[%s7] sm:$0x1]
          %v2873 = vunpack.c.l.b16 %v2840
          %v2874 = vunpack.c.l.b16 %v2841
          %v2875 = vunpack.c.l.b16 %v2842
          %v2876 = vunpack.c.l.b16 %v2843
          %v2877 = vunpack.c.l.b16 %v2844
          %v2878 = vunpack.c.l.b16 %v2845
          %v2879 = vunpack.c.l.b16 %v2846
          %v2880 = vunpack.c.l.b16 %v2847
          %v2881 = vunpack.c.l.b16 %v2848
          %v2882 = vunpack.c.l.b16 %v2849
          %v2883 = vunpack.c.l.b16 %v2850
          %v2884 = vunpack.c.l.b16 %v2851
          %v2885 = vunpack.c.l.b16 %v2852
          %v2886 = vunpack.c.l.b16 %v2853
          %v2887 = vunpack.c.l.b16 %v2854
          %v2888 = vunpack.c.l.b16 %v2855
          %v2889 = vpack.c.b16 %v2874, %v2873
          %v2890 = vpack.c.b16 %v2876, %v2875
          %v2891 = vpack.c.b16 %v2878, %v2877
          %v2892 = vpack.c.b16 %v2880, %v2879
          %v2893 = vpack.c.b16 %v2882, %v2881
          %v2894 = vpack.c.b16 %v2884, %v2883
          %v2895 = vpack.c.b16 %v2886, %v2885
          %v2896 = vpack.c.b16 %v2888, %v2887
          %2905 = vmatprep.subr.bf16.mxu0 0
          %2906 = vmatpush1.bf16.msra.mxu0 %v2889
          %2907 = vmatprep.subr.bf16.mxu0 0
          %2908 = vmatpush1.bf16.msra.mxu0 %v2890
          %2909 = vmatprep.subr.bf16.mxu0 0
          %2910 = vmatpush1.bf16.msra.mxu0 %v2891
          %2911 = vmatprep.subr.bf16.mxu0 0
          %2912 = vmatpush1.bf16.msra.mxu0 %v2892
          %2913 = vmatprep.subr.bf16.mxu0 0
          %2914 = vmatpush1.bf16.msra.mxu0 %v2893
          %2915 = vmatprep.subr.bf16.mxu0 0
          %2916 = vmatpush1.bf16.msra.mxu0 %v2894
          %2917 = vmatprep.subr.bf16.mxu0 0
          %2918 = vmatpush1.bf16.msra.mxu0 %v2895
          %2919 = vmatprep.subr.bf16.mxu0 0
          %2920 = vmatpush1.bf16.msra.mxu0 %v2896
          %2921 = vmatprep.subr.bf16.mxu0 0
          %2922 = vmatpush1.bf16.msra.mxu0 0
          %2923 = vmatprep.subr.bf16.mxu0 0
          %2924 = vmatpush1.bf16.msra.mxu0 0
          %2925 = vmatprep.subr.bf16.mxu0 0
          %2926 = vmatpush1.bf16.msra.mxu0 0
          %2927 = vmatprep.subr.bf16.mxu0 0
          %2928 = vmatpush1.bf16.msra.mxu0 0
          %2929 = vmatprep.subr.bf16.mxu0 0
          %2930 = vmatpush1.bf16.msra.mxu0 0
          %2931 = vmatprep.subr.bf16.mxu0 0
          %2932 = vmatpush1.bf16.msra.mxu0 0
          %2933 = vmatprep.subr.bf16.mxu0 0
          %2934 = vmatpush1.bf16.msra.mxu0 0
          %2935 = vmatprep.subr.bf16.mxu0 0
          %2936 = vmatpush1.bf16.msra.mxu0 0
          %2937 = vmatprep.mubr.bf16.mxu0 0
          %2938 = vmatmul.mubr.bf16.gmra.mrb[0].mxu0 %v2839
          %v2939 = vpop.f32.mrb[0].mxu0
          %v2940 = vadd.f32 %v2856, %v2939
          %v2941 = vpop.f32.mrb[0].mxu0
          %v2942 = vpop.f32.mrb[0].mxu0
          %v2943 = vpop.f32.mrb[0].mxu0
          %2944 = vdwg.mxu0
          %v2945 = vtanh.pop %v2940
          %v2946 = vsub.f32 %v2940, %v2945
          %v2947 = vld [vmem:[%s8] sm:$0x1]
          %v2948 = vmul.f32 %v2946, %v2947
          %vm2949 = vcmask 516096
          %v2950 = vsel %vm2949, %v2948, 0.0
          %2951 = vadd.xlane.f32.xlu0 %v2950
          %v2952 = vpop.xlane.xlu0 %2951
          %v2953 = vld [vmem:[#allocation3] sm:$0x1]
          %v2954 = vadd.f32 %v2952, %v2953
          %v2955 = vand.u32 2147483647, %v2954
          %v2956 = vsub.f32 0.0, %v2955
          %v2957 = vmul.f32 %v2956, 1.442695
          %v2958 = vpow.pop %v2957
          %vm2959 = vcmp.ge.f32.partialorder %v2954, 0.0
          %v2960 = vadd.f32 %v2958, 1.0
          %v2961 = vrcp.pop %v2960
          %v2962 = vmul.f32 1.0, %v2961
          %v2963 = vmul.f32 %v2958, %v2961
          %v2964 = vsel %vm2959, %v2962, %v2963
          %vm2965 = vcmask 0
          %2966 = vst.msk [vmem:[#allocation4] sm:$0x1] %vm2965, %v2964
          %v2967 = vld [vmem:[%s10] sm:$0xff]
          %v2968 = vld [vmem:[%s10 + $0x8] sm:$0xff]
          %v2969 = vld [vmem:[%s10 + $0x10] sm:$0xff]
          %v2970 = vld [vmem:[%s10 + $0x18] sm:$0xff]
          %v2971 = vld [vmem:[%s10 + $0x20] sm:$0xff]
          %v2972 = vld [vmem:[%s10 + $0x28] sm:$0xff]
          %v2973 = vld [vmem:[%s10 + $0x30] sm:$0xff]
          %v2974 = vld [vmem:[%s10 + $0x38] sm:$0xff]
          %v2975 = vld [vmem:[%s10 + $0x40] sm:$0xff]
          %v2976 = vld [vmem:[%s10 + $0x48] sm:$0xff]
          %v2977 = vld [vmem:[%s10 + $0x50] sm:$0xff]
          %v2978 = vld [vmem:[%s10 + $0x58] sm:$0xff]
          %v2979 = vld [vmem:[%s10 + $0x60] sm:$0xff]
          %v2980 = vld [vmem:[%s10 + $0x68] sm:$0xff]
          %v2981 = vld [vmem:[%s10 + $0x70] sm:$0xff]
          %v2982 = vld [vmem:[%s10 + $0x78] sm:$0xff]
          %v2983 = vld [vmem:[%s11] sm:$0x3]
          %v3000 = vunpack.c.l.b16 %v2967
          %v3001 = vunpack.c.h.b16 %v2967
          %v3002 = vunpack.c.l.b16 %v2968
          %v3003 = vunpack.c.h.b16 %v2968
          %v3004 = vunpack.c.l.b16 %v2969
          %v3005 = vunpack.c.h.b16 %v2969
          %v3006 = vunpack.c.l.b16 %v2970
          %v3007 = vunpack.c.h.b16 %v2970
          %v3008 = vunpack.c.l.b16 %v2971
          %v3009 = vunpack.c.h.b16 %v2971
          %v3010 = vunpack.c.l.b16 %v2972
          %v3011 = vunpack.c.h.b16 %v2972
          %v3012 = vunpack.c.l.b16 %v2973
          %v3013 = vunpack.c.h.b16 %v2973
          %v3014 = vunpack.c.l.b16 %v2974
          %v3015 = vunpack.c.h.b16 %v2974
          %v3016 = vunpack.c.l.b16 %v2975
          %v3017 = vunpack.c.h.b16 %v2975
          %v3018 = vunpack.c.l.b16 %v2976
          %v3019 = vunpack.c.h.b16 %v2976
          %v3020 = vunpack.c.l.b16 %v2977
          %v3021 = vunpack.c.h.b16 %v2977
          %v3022 = vunpack.c.l.b16 %v2978
          %v3023 = vunpack.c.h.b16 %v2978
          %v3024 = vunpack.c.l.b16 %v2979
          %v3025 = vunpack.c.h.b16 %v2979
          %v3026 = vunpack.c.l.b16 %v2980
          %v3027 = vunpack.c.h.b16 %v2980
          %v3028 = vunpack.c.l.b16 %v2981
          %v3029 = vunpack.c.h.b16 %v2981
          %v3030 = vunpack.c.l.b16 %v2982
          %v3031 = vunpack.c.h.b16 %v2982
          %v3032 = vpack.c.b16 %v3002, %v3000
          %v3033 = vpack.c.b16 %v3003, %v3001
          %v3034 = vpack.c.b16 %v3006, %v3004
          %v3035 = vpack.c.b16 %v3007, %v3005
          %v3036 = vpack.c.b16 %v3010, %v3008
          %v3037 = vpack.c.b16 %v3011, %v3009
          %v3038 = vpack.c.b16 %v3014, %v3012
          %v3039 = vpack.c.b16 %v3015, %v3013
          %v3040 = vpack.c.b16 %v3018, %v3016
          %v3041 = vpack.c.b16 %v3019, %v3017
          %v3042 = vpack.c.b16 %v3022, %v3020
          %v3043 = vpack.c.b16 %v3023, %v3021
          %v3044 = vpack.c.b16 %v3026, %v3024
          %v3045 = vpack.c.b16 %v3027, %v3025
          %v3046 = vpack.c.b16 %v3030, %v3028
          %v3047 = vpack.c.b16 %v3031, %v3029
          %v3065 = vlaneseq
          %v3066 = vshrl.u32 %v3065, 7
          %v3067 = vsub.s32 0, %v3066
          %v3068 = vrot.slane %v2983, %v3067
          %v3069 = vlaneseq
          %v3070 = vshrl.u32 %v3069, 7
          %v3071 = vsub.s32 1, %v3070
          %v3072 = vrot.slane %v2983, %v3071
          %3075 = vmatprep.subr.bf16.mxu0 %v3033
          %3076 = vmatpush1.bf16.msra.mxu0 %v3032
          %3077 = vmatprep.subr.bf16.mxu0 %v3035
          %3078 = vmatpush1.bf16.msra.mxu0 %v3034
          %3079 = vmatprep.subr.bf16.mxu0 %v3037
          %3080 = vmatpush1.bf16.msra.mxu0 %v3036
          %3081 = vmatprep.subr.bf16.mxu0 %v3039
          %3082 = vmatpush1.bf16.msra.mxu0 %v3038
          %3083 = vmatprep.subr.bf16.mxu0 %v3041
          %3084 = vmatpush1.bf16.msra.mxu0 %v3040
          %3085 = vmatprep.subr.bf16.mxu0 %v3043
          %3086 = vmatpush1.bf16.msra.mxu0 %v3042
          %3087 = vmatprep.subr.bf16.mxu0 %v3045
          %3088 = vmatpush1.bf16.msra.mxu0 %v3044
          %3089 = vmatprep.subr.bf16.mxu0 %v3047
          %3090 = vmatpush1.bf16.msra.mxu0 %v3046
          %3091 = vmatprep.subr.bf16.mxu0 0
          %3092 = vmatpush1.bf16.msra.mxu0 0
          %3093 = vmatprep.subr.bf16.mxu0 0
          %3094 = vmatpush1.bf16.msra.mxu0 0
          %3095 = vmatprep.subr.bf16.mxu0 0
          %3096 = vmatpush1.bf16.msra.mxu0 0
          %3097 = vmatprep.subr.bf16.mxu0 0
          %3098 = vmatpush1.bf16.msra.mxu0 0
          %3099 = vmatprep.subr.bf16.mxu0 0
          %3100 = vmatpush1.bf16.msra.mxu0 0
          %3101 = vmatprep.subr.bf16.mxu0 0
          %3102 = vmatpush1.bf16.msra.mxu0 0
          %3103 = vmatprep.subr.bf16.mxu0 0
          %3104 = vmatpush1.bf16.msra.mxu0 0
          %3105 = vmatprep.subr.bf16.mxu0 0
          %3106 = vmatpush1.bf16.msra.mxu0 0
          %3107 = vmatprep.mubr.bf16.mxu0 0
          %3108 = vmatmul.mubr.bf16.gmra.mrb[0].mxu0 %v2839
          %v3109 = vpop.f32.mrb[0].mxu0
          %v3110 = vadd.f32 %v3068, %v3109
          %v3111 = vpop.f32.mrb[0].mxu0
          %v3112 = vadd.f32 %v3072, %v3111
          %v3113 = vpop.f32.mrb[0].mxu0
          %v3114 = vpop.f32.mrb[0].mxu0
          %3115 = vdwg.mxu0
          %v3116 = vmax.f32 %v3110, 0.0
          %v3117 = vmax.f32 %v3112, 0.0
          %v3118 = vand.u32 2147483647, %v3110
          %v3119 = vand.u32 2147483647, %v3112
          %v3120 = vsub.f32 0.0, %v3118
          %v3121 = vsub.f32 0.0, %v3119
          %v3122 = vmul.f32 %v3120, 1.442695
          %v3123 = vpow.pop %v3122
          %v3124 = vmul.f32 %v3121, 1.442695
          %v3125 = vpow.pop %v3124
          %v3126 = vadd.f32 %v3123, 1.0
          %v3127 = vlog2.pop %v3126
          %v3128 = vmul.f32 %v3127, 0.6931472
          %v3129 = vmul.f32 -0.5, %v3123
          %v3130 = vadd.f32 %v3129, 1.0
          %v3131 = vmul.f32 %v3130, %v3123
          %v3132 = vand.u32 2147483647, %v3123
          %vm3133 = vcmp.lt.f32.partialorder %v3132, 0.0004427343
          %v3134 = vsel %vm3133, %v3131, %v3128
          %v3135 = vadd.f32 %v3125, 1.0
          %v3136 = vlog2.pop %v3135
          %v3137 = vmul.f32 %v3136, 0.6931472
          %v3138 = vmul.f32 -0.5, %v3125
          %v3139 = vadd.f32 %v3138, 1.0
          %v3140 = vmul.f32 %v3139, %v3125
          %v3141 = vand.u32 2147483647, %v3125
          %vm3142 = vcmp.lt.f32.partialorder %v3141, 0.0004427343
          %v3143 = vsel %vm3142, %v3140, %v3137
          %v3144 = vadd.f32 %v3116, %v3134
          %v3145 = vadd.f32 %v3117, %v3143
          %v3146 = vpack.c.bf16 %v3144, %v3144
          %v3147 = vpack.c.bf16 %v3145, %v3145
          %v3150 = vcombine.low %v3146, %v3147
          %v3152 = vunpack.c.l.s4 1966171168
          %v3153 = vunpack.c.0.s8 %v3152
          %v3154 = vlaneseq
          %v3155 = vshrl.u32 %v3154, 7
          %v3156 = vsub.s32 %v3153, %v3155
          %v3157 = vrot.slane %v3150, %v3156
          %v3159 = vunpack.c.l.s4 1966171168
          %v3160 = vunpack.c.0.s8 %v3159
          %v3161 = vlaneseq
          %v3162 = vshrl.u32 %v3161, 7
          %v3163 = vsub.s32 %v3160, %v3162
          %v3164 = vrot.slane %v3157, %v3163
          %vm3166 = vcmask 1040384
          %vm3167 = vsmask.f32 256
          %vm3168 = vmand %vm3166, %vm3167
          %vm3169 = vcmask 1041409
          %vm3170 = vsmask.f32 1280
          %vm3171 = vmand %vm3169, %vm3170
          %vm3172 = vmor %vm3171, %vm3168
          %v3173 = vld [vmem:[#allocation2] sm:$0x3]
          %v3174 = vsel %vm3172, %v3164, %v3173
          %3175 = vst [vmem:[#allocation2] sm:$0x3] %v3174
        $region84: #{energy_50_rl_forward.1} parent=79 // pred_fallthru
          _
        %v3176 = vld [vmem:[#allocation2] sm:$0x3]
        %v3177 = vld [vmem:[%s548] sm:$0xff]
        %v3178 = vld [vmem:[%s548 + $0x8] sm:$0xff]
        %v3179 = vld [vmem:[%s548 + $0x10] sm:$0xff]
        %v3180 = vld [vmem:[%s548 + $0x18] sm:$0xff]
        %v3181 = vld [vmem:[%s548 + $0x20] sm:$0xff]
        %v3182 = vld [vmem:[%s548 + $0x28] sm:$0xff]
        %v3183 = vld [vmem:[%s548 + $0x30] sm:$0xff]
        %v3184 = vld [vmem:[%s548 + $0x38] sm:$0xff]
        %v3185 = vld [vmem:[%s548 + $0x40] sm:$0xff]
        %v3186 = vld [vmem:[%s548 + $0x48] sm:$0xff]
        %v3187 = vld [vmem:[%s548 + $0x50] sm:$0xff]
        %v3188 = vld [vmem:[%s548 + $0x58] sm:$0xff]
        %v3189 = vld [vmem:[%s548 + $0x60] sm:$0xff]
        %v3190 = vld [vmem:[%s548 + $0x68] sm:$0xff]
        %v3191 = vld [vmem:[%s548 + $0x70] sm:$0xff]
        %v3192 = vld [vmem:[%s548 + $0x78] sm:$0xff]
        %v3193 = vld [vmem:[%s548 + $0x80] sm:$0xff]
        %v3194 = vld [vmem:[%s548 + $0x88] sm:$0xff]
        %v3195 = vld [vmem:[%s548 + $0x90] sm:$0xff]
        %v3196 = vld [vmem:[%s548 + $0x98] sm:$0xff]
        %v3197 = vld [vmem:[%s548 + $0xa0] sm:$0xff]
        %v3198 = vld [vmem:[%s548 + $0xa8] sm:$0xff]
        %v3199 = vld [vmem:[%s548 + $0xb0] sm:$0xff]
        %v3200 = vld [vmem:[%s548 + $0xb8] sm:$0xff]
        %v3201 = vld [vmem:[%s548 + $0xc0] sm:$0xff]
        %v3202 = vld [vmem:[%s548 + $0xc8] sm:$0xff]
        %v3203 = vld [vmem:[%s548 + $0xd0] sm:$0xff]
        %v3204 = vld [vmem:[%s548 + $0xd8] sm:$0xff]
        %v3205 = vld [vmem:[%s548 + $0xe0] sm:$0xff]
        %v3206 = vld [vmem:[%s548 + $0xe8] sm:$0xff]
        %v3207 = vld [vmem:[%s548 + $0xf0] sm:$0xff]
        %v3208 = vld [vmem:[%s548 + $0xf8] sm:$0xff]
        %v3209 = vld [vmem:[%s548 + $0x100] sm:$0xff]
        %v3210 = vld [vmem:[%s548 + $0x108] sm:$0xff]
        %v3211 = vld [vmem:[%s548 + $0x110] sm:$0xff]
        %v3212 = vld [vmem:[%s548 + $0x118] sm:$0xff]
        %v3213 = vld [vmem:[%s548 + $0x120] sm:$0xff]
        %v3214 = vld [vmem:[%s548 + $0x128] sm:$0xff]
        %v3215 = vld [vmem:[%s548 + $0x130] sm:$0xff]
        %v3216 = vld [vmem:[%s548 + $0x138] sm:$0xff]
        %v3217 = vld [vmem:[%s548 + $0x140] sm:$0xff]
        %v3218 = vld [vmem:[%s548 + $0x148] sm:$0xff]
        %v3219 = vld [vmem:[%s548 + $0x150] sm:$0xff]
        %v3220 = vld [vmem:[%s548 + $0x158] sm:$0xff]
        %v3221 = vld [vmem:[%s548 + $0x160] sm:$0xff]
        %v3222 = vld [vmem:[%s548 + $0x168] sm:$0xff]
        %v3223 = vld [vmem:[%s548 + $0x170] sm:$0xff]
        %v3224 = vld [vmem:[%s548 + $0x178] sm:$0xff]
        %v3225 = vld [vmem:[%s548 + $0x180] sm:$0xff]
        %v3226 = vld [vmem:[%s548 + $0x188] sm:$0xff]
        %v3227 = vld [vmem:[%s548 + $0x190] sm:$0xff]
        %v3228 = vld [vmem:[%s548 + $0x198] sm:$0xff]
        %v3229 = vld [vmem:[%s548 + $0x1a0] sm:$0xff]
        %v3230 = vld [vmem:[%s548 + $0x1a8] sm:$0xff]
        %v3231 = vld [vmem:[%s548 + $0x1b0] sm:$0xff]
        %v3232 = vld [vmem:[%s548 + $0x1b8] sm:$0xff]
        %v3233 = vld [vmem:[%s548 + $0x1c0] sm:$0xff]
        %v3234 = vld [vmem:[%s548 + $0x1c8] sm:$0xff]
        %v3235 = vld [vmem:[%s548 + $0x1d0] sm:$0xff]
        %v3236 = vld [vmem:[%s548 + $0x1d8] sm:$0xff]
        %v3237 = vld [vmem:[%s548 + $0x1e0] sm:$0xff]
        %v3238 = vld [vmem:[%s548 + $0x1e8] sm:$0xff]
        %v3239 = vld [vmem:[%s548 + $0x1f0] sm:$0xff]
        %v3240 = vld [vmem:[%s548 + $0x1f8] sm:$0xff]
        %v3241 = vld [vmem:[%s548 + $0x200] sm:$0xff]
        %v3242 = vld [vmem:[%s548 + $0x208] sm:$0xff]
        %v3243 = vld [vmem:[%s548 + $0x210] sm:$0xff]
        %v3244 = vld [vmem:[%s548 + $0x218] sm:$0xff]
        %v3245 = vld [vmem:[%s548 + $0x220] sm:$0xff]
        %v3246 = vld [vmem:[%s548 + $0x228] sm:$0xff]
        %v3247 = vld [vmem:[%s548 + $0x230] sm:$0xff]
        %v3248 = vld [vmem:[%s548 + $0x238] sm:$0xff]
        %v3249 = vld [vmem:[%s548 + $0x240] sm:$0xff]
        %v3250 = vld [vmem:[%s548 + $0x248] sm:$0xff]
        %v3251 = vld [vmem:[%s548 + $0x250] sm:$0xff]
        %v3252 = vld [vmem:[%s548 + $0x258] sm:$0xff]
        %v3253 = vld [vmem:[%s548 + $0x260] sm:$0xff]
        %v3254 = vld [vmem:[%s548 + $0x268] sm:$0xff]
        %v3255 = vld [vmem:[%s548 + $0x270] sm:$0xff]
        %v3256 = vld [vmem:[%s548 + $0x278] sm:$0xff]
        %v3257 = vld [vmem:[%s548 + $0x280] sm:$0xff]
        %v3258 = vld [vmem:[%s548 + $0x288] sm:$0xff]
        %v3259 = vld [vmem:[%s548 + $0x290] sm:$0xff]
        %v3260 = vld [vmem:[%s548 + $0x298] sm:$0xff]
        %v3261 = vld [vmem:[%s548 + $0x2a0] sm:$0xff]
        %v3262 = vld [vmem:[%s548 + $0x2a8] sm:$0xff]
        %v3263 = vld [vmem:[%s548 + $0x2b0] sm:$0xff]
        %v3264 = vld [vmem:[%s548 + $0x2b8] sm:$0xff]
        %v3265 = vld [vmem:[%s548 + $0x2c0] sm:$0xff]
        %v3266 = vld [vmem:[%s548 + $0x2c8] sm:$0xff]
        %v3267 = vld [vmem:[%s548 + $0x2d0] sm:$0xff]
        %v3268 = vld [vmem:[%s548 + $0x2d8] sm:$0xff]
        %v3269 = vld [vmem:[%s548 + $0x2e0] sm:$0xff]
        %v3270 = vld [vmem:[%s548 + $0x2e8] sm:$0xff]
        %v3271 = vld [vmem:[%s548 + $0x2f0] sm:$0xff]
        %v3272 = vld [vmem:[%s548 + $0x2f8] sm:$0xff]
        %v3273 = vld [vmem:[%s548 + $0x300] sm:$0xff]
        %v3274 = vld [vmem:[%s548 + $0x308] sm:$0xff]
        %v3275 = vld [vmem:[%s548 + $0x310] sm:$0xff]
        %v3276 = vld [vmem:[%s548 + $0x318] sm:$0xff]
        %v3277 = vld [vmem:[%s548 + $0x320] sm:$0xff]
        %v3278 = vld [vmem:[%s548 + $0x328] sm:$0xff]
        %v3279 = vld [vmem:[%s548 + $0x330] sm:$0xff]
        %v3280 = vld [vmem:[%s548 + $0x338] sm:$0xff]
        %v3281 = vld [vmem:[%s548 + $0x340] sm:$0xff]
        %v3282 = vld [vmem:[%s548 + $0x348] sm:$0xff]
        %v3283 = vld [vmem:[%s548 + $0x350] sm:$0xff]
        %v3284 = vld [vmem:[%s548 + $0x358] sm:$0xff]
        %v3285 = vld [vmem:[%s548 + $0x360] sm:$0xff]
        %v3286 = vld [vmem:[%s548 + $0x368] sm:$0xff]
        %v3287 = vld [vmem:[%s548 + $0x370] sm:$0xff]
        %v3288 = vld [vmem:[%s548 + $0x378] sm:$0xff]
        %v3289 = vld [vmem:[%s548 + $0x380] sm:$0xff]
        %v3290 = vld [vmem:[%s548 + $0x388] sm:$0xff]
        %v3291 = vld [vmem:[%s548 + $0x390] sm:$0xff]
        %v3292 = vld [vmem:[%s548 + $0x398] sm:$0xff]
        %v3293 = vld [vmem:[%s548 + $0x3a0] sm:$0xff]
        %v3294 = vld [vmem:[%s548 + $0x3a8] sm:$0xff]
        %v3295 = vld [vmem:[%s548 + $0x3b0] sm:$0xff]
        %v3296 = vld [vmem:[%s548 + $0x3b8] sm:$0xff]
        %v3297 = vld [vmem:[%s548 + $0x3c0] sm:$0xff]
        %v3298 = vld [vmem:[%s548 + $0x3c8] sm:$0xff]
        %v3299 = vld [vmem:[%s548 + $0x3d0] sm:$0xff]
        %v3300 = vld [vmem:[%s548 + $0x3d8] sm:$0xff]
        %v3301 = vld [vmem:[%s548 + $0x3e0] sm:$0xff]
        %v3302 = vld [vmem:[%s548 + $0x3e8] sm:$0xff]
        %v3303 = vld [vmem:[%s548 + $0x3f0] sm:$0xff]
        %v3304 = vld [vmem:[%s548 + $0x3f8] sm:$0xff]
        %v3305 = vld [vmem:[%s548 + $0x400] sm:$0xff]
        %v3306 = vld [vmem:[%s548 + $0x408] sm:$0xff]
        %v3307 = vld [vmem:[%s548 + $0x410] sm:$0xff]
        %v3308 = vld [vmem:[%s548 + $0x418] sm:$0xff]
        %v3309 = vld [vmem:[%s548 + $0x420] sm:$0xff]
        %v3310 = vld [vmem:[%s548 + $0x428] sm:$0xff]
        %v3311 = vld [vmem:[%s548 + $0x430] sm:$0xff]
        %v3312 = vld [vmem:[%s548 + $0x438] sm:$0xff]
        %v3313 = vld [vmem:[%s548 + $0x440] sm:$0xff]
        %v3314 = vld [vmem:[%s548 + $0x448] sm:$0xff]
        %v3315 = vld [vmem:[%s548 + $0x450] sm:$0xff]
        %v3316 = vld [vmem:[%s548 + $0x458] sm:$0xff]
        %v3317 = vld [vmem:[%s548 + $0x460] sm:$0xff]
        %v3318 = vld [vmem:[%s548 + $0x468] sm:$0xff]
        %v3319 = vld [vmem:[%s548 + $0x470] sm:$0xff]
        %v3320 = vld [vmem:[%s548 + $0x478] sm:$0xff]
        %v3321 = vld [vmem:[%s548 + $0x480] sm:$0xff]
        %v3322 = vld [vmem:[%s548 + $0x488] sm:$0xff]
        %v3323 = vld [vmem:[%s548 + $0x490] sm:$0xff]
        %v3324 = vld [vmem:[%s548 + $0x498] sm:$0xff]
        %v3325 = vld [vmem:[%s548 + $0x4a0] sm:$0xff]
        %v3326 = vld [vmem:[%s548 + $0x4a8] sm:$0xff]
        %v3327 = vld [vmem:[%s548 + $0x4b0] sm:$0xff]
        %v3328 = vld [vmem:[%s548 + $0x4b8] sm:$0xff]
        %v3329 = vld [vmem:[%s548 + $0x4c0] sm:$0xff]
        %v3330 = vld [vmem:[%s548 + $0x4c8] sm:$0xff]
        %v3331 = vld [vmem:[%s548 + $0x4d0] sm:$0xff]
        %v3332 = vld [vmem:[%s548 + $0x4d8] sm:$0xff]
        %v3333 = vld [vmem:[%s548 + $0x4e0] sm:$0xff]
        %v3334 = vld [vmem:[%s548 + $0x4e8] sm:$0xff]
        %v3335 = vld [vmem:[%s548 + $0x4f0] sm:$0xff]
        %v3336 = vld [vmem:[%s548 + $0x4f8] sm:$0xff]
        %v3337 = vld [vmem:[%s548 + $0x500] sm:$0xff]
        %v3338 = vld [vmem:[%s548 + $0x508] sm:$0xff]
        %v3339 = vld [vmem:[%s548 + $0x510] sm:$0xff]
        %v3340 = vld [vmem:[%s548 + $0x518] sm:$0xff]
        %v3341 = vld [vmem:[%s548 + $0x520] sm:$0xff]
        %v3342 = vld [vmem:[%s548 + $0x528] sm:$0xff]
        %v3343 = vld [vmem:[%s548 + $0x530] sm:$0xff]
        %v3344 = vld [vmem:[%s548 + $0x538] sm:$0xff]
        %v3345 = vld [vmem:[%s548 + $0x540] sm:$0xff]
        %v3346 = vld [vmem:[%s548 + $0x548] sm:$0xff]
        %v3347 = vld [vmem:[%s548 + $0x550] sm:$0xff]
        %v3348 = vld [vmem:[%s548 + $0x558] sm:$0xff]
        %v3349 = vld [vmem:[%s548 + $0x560] sm:$0xff]
        %v3350 = vld [vmem:[%s548 + $0x568] sm:$0xff]
        %v3351 = vld [vmem:[%s548 + $0x570] sm:$0xff]
        %v3352 = vld [vmem:[%s548 + $0x578] sm:$0xff]
        %v3353 = vld [vmem:[%s548 + $0x580] sm:$0xff]
        %v3354 = vld [vmem:[%s548 + $0x588] sm:$0xff]
        %v3355 = vld [vmem:[%s548 + $0x590] sm:$0xff]
        %v3356 = vld [vmem:[%s548 + $0x598] sm:$0xff]
        %v3357 = vld [vmem:[%s548 + $0x5a0] sm:$0xff]
        %v3358 = vld [vmem:[%s548 + $0x5a8] sm:$0xff]
        %v3359 = vld [vmem:[%s548 + $0x5b0] sm:$0xff]
        %v3360 = vld [vmem:[%s548 + $0x5b8] sm:$0xff]
        %v3361 = vld [vmem:[%s548 + $0x5c0] sm:$0xff]
        %v3362 = vld [vmem:[%s548 + $0x5c8] sm:$0xff]
        %v3363 = vld [vmem:[%s548 + $0x5d0] sm:$0xff]
        %v3364 = vld [vmem:[%s548 + $0x5d8] sm:$0xff]
        %v3365 = vld [vmem:[%s548 + $0x5e0] sm:$0xff]
        %v3366 = vld [vmem:[%s548 + $0x5e8] sm:$0xff]
        %v3367 = vld [vmem:[%s548 + $0x5f0] sm:$0xff]
        %v3368 = vld [vmem:[%s548 + $0x5f8] sm:$0xff]
        %v3369 = vld [vmem:[%s548 + $0x600] sm:$0xff]
        %v3370 = vld [vmem:[%s548 + $0x608] sm:$0xff]
        %v3371 = vld [vmem:[%s548 + $0x610] sm:$0xff]
        %v3372 = vld [vmem:[%s548 + $0x618] sm:$0xff]
        %v3373 = vld [vmem:[%s548 + $0x620] sm:$0xff]
        %v3374 = vld [vmem:[%s548 + $0x628] sm:$0xff]
        %v3375 = vld [vmem:[%s548 + $0x630] sm:$0xff]
        %v3376 = vld [vmem:[%s548 + $0x638] sm:$0xff]
        %v3377 = vunpack.c.l.s8.bf16 %v3177
        %v3378 = vunpack.c.h.s8.bf16 %v3177
        %v3379 = vunpack.c.l.s8.bf16 %v3178
        %v3380 = vunpack.c.h.s8.bf16 %v3178
        %v3381 = vunpack.c.l.s8.bf16 %v3179
        %v3382 = vunpack.c.h.s8.bf16 %v3179
        %v3383 = vunpack.c.l.s8.bf16 %v3180
        %v3384 = vunpack.c.h.s8.bf16 %v3180
        %v3385 = vunpack.c.l.s8.bf16 %v3181
        %v3386 = vunpack.c.h.s8.bf16 %v3181
        %v3387 = vunpack.c.l.s8.bf16 %v3182
        %v3388 = vunpack.c.h.s8.bf16 %v3182
        %v3389 = vunpack.c.l.s8.bf16 %v3183
        %v3390 = vunpack.c.h.s8.bf16 %v3183
        %v3391 = vunpack.c.l.s8.bf16 %v3184
        %v3392 = vunpack.c.h.s8.bf16 %v3184
        %v3393 = vunpack.c.l.s8.bf16 %v3185
        %v3394 = vunpack.c.h.s8.bf16 %v3185
        %v3395 = vunpack.c.l.s8.bf16 %v3186
        %v3396 = vunpack.c.h.s8.bf16 %v3186
        %v3397 = vunpack.c.l.s8.bf16 %v3187
        %v3398 = vunpack.c.h.s8.bf16 %v3187
        %v3399 = vunpack.c.l.s8.bf16 %v3188
        %v3400 = vunpack.c.h.s8.bf16 %v3188
        %v3401 = vunpack.c.l.s8.bf16 %v3189
        %v3402 = vunpack.c.h.s8.bf16 %v3189
        %v3403 = vunpack.c.l.s8.bf16 %v3190
        %v3404 = vunpack.c.h.s8.bf16 %v3190
        %v3405 = vunpack.c.l.s8.bf16 %v3191
        %v3406 = vunpack.c.h.s8.bf16 %v3191
        %v3407 = vunpack.c.l.s8.bf16 %v3192
        %v3408 = vunpack.c.h.s8.bf16 %v3192
        %v3409 = vunpack.c.l.s8.bf16 %v3193
        %v3410 = vunpack.c.h.s8.bf16 %v3193
        %v3411 = vunpack.c.l.s8.bf16 %v3194
        %v3412 = vunpack.c.h.s8.bf16 %v3194
        %v3413 = vunpack.c.l.s8.bf16 %v3195
        %v3414 = vunpack.c.h.s8.bf16 %v3195
        %v3415 = vunpack.c.l.s8.bf16 %v3196
        %v3416 = vunpack.c.h.s8.bf16 %v3196
        %v3417 = vunpack.c.l.s8.bf16 %v3197
        %v3418 = vunpack.c.h.s8.bf16 %v3197
        %v3419 = vunpack.c.l.s8.bf16 %v3198
        %v3420 = vunpack.c.h.s8.bf16 %v3198
        %v3421 = vunpack.c.l.s8.bf16 %v3199
        %v3422 = vunpack.c.h.s8.bf16 %v3199
        %v3423 = vunpack.c.l.s8.bf16 %v3200
        %v3424 = vunpack.c.h.s8.bf16 %v3200
        %v3425 = vunpack.c.l.s8.bf16 %v3201
        %v3426 = vunpack.c.h.s8.bf16 %v3201
        %v3427 = vunpack.c.l.s8.bf16 %v3202
        %v3428 = vunpack.c.h.s8.bf16 %v3202
        %v3429 = vunpack.c.l.s8.bf16 %v3203
        %v3430 = vunpack.c.h.s8.bf16 %v3203
        %v3431 = vunpack.c.l.s8.bf16 %v3204
        %v3432 = vunpack.c.h.s8.bf16 %v3204
        %v3433 = vunpack.c.l.s8.bf16 %v3205
        %v3434 = vunpack.c.h.s8.bf16 %v3205
        %v3435 = vunpack.c.l.s8.bf16 %v3206
        %v3436 = vunpack.c.h.s8.bf16 %v3206
        %v3437 = vunpack.c.l.s8.bf16 %v3207
        %v3438 = vunpack.c.h.s8.bf16 %v3207
        %v3439 = vunpack.c.l.s8.bf16 %v3208
        %v3440 = vunpack.c.h.s8.bf16 %v3208
        %v3441 = vunpack.c.l.s8.bf16 %v3209
        %v3442 = vunpack.c.h.s8.bf16 %v3209
        %v3443 = vunpack.c.l.s8.bf16 %v3210
        %v3444 = vunpack.c.h.s8.bf16 %v3210
        %v3445 = vunpack.c.l.s8.bf16 %v3211
        %v3446 = vunpack.c.h.s8.bf16 %v3211
        %v3447 = vunpack.c.l.s8.bf16 %v3212
        %v3448 = vunpack.c.h.s8.bf16 %v3212
        %v3449 = vunpack.c.l.s8.bf16 %v3213
        %v3450 = vunpack.c.h.s8.bf16 %v3213
        %v3451 = vunpack.c.l.s8.bf16 %v3214
        %v3452 = vunpack.c.h.s8.bf16 %v3214
        %v3453 = vunpack.c.l.s8.bf16 %v3215
        %v3454 = vunpack.c.h.s8.bf16 %v3215
        %v3455 = vunpack.c.l.s8.bf16 %v3216
        %v3456 = vunpack.c.h.s8.bf16 %v3216
        %v3457 = vunpack.c.l.s8.bf16 %v3217
        %v3458 = vunpack.c.h.s8.bf16 %v3217
        %v3459 = vunpack.c.l.s8.bf16 %v3218
        %v3460 = vunpack.c.h.s8.bf16 %v3218
        %v3461 = vunpack.c.l.s8.bf16 %v3219
        %v3462 = vunpack.c.h.s8.bf16 %v3219
        %v3463 = vunpack.c.l.s8.bf16 %v3220
        %v3464 = vunpack.c.h.s8.bf16 %v3220
        %v3465 = vunpack.c.l.s8.bf16 %v3221
        %v3466 = vunpack.c.h.s8.bf16 %v3221
        %v3467 = vunpack.c.l.s8.bf16 %v3222
        %v3468 = vunpack.c.h.s8.bf16 %v3222
        %v3469 = vunpack.c.l.s8.bf16 %v3223
        %v3470 = vunpack.c.h.s8.bf16 %v3223
        %v3471 = vunpack.c.l.s8.bf16 %v3224
        %v3472 = vunpack.c.h.s8.bf16 %v3224
        %v3473 = vunpack.c.l.s8.bf16 %v3225
        %v3474 = vunpack.c.h.s8.bf16 %v3225
        %v3475 = vunpack.c.l.s8.bf16 %v3226
        %v3476 = vunpack.c.h.s8.bf16 %v3226
        %v3477 = vunpack.c.l.s8.bf16 %v3227
        %v3478 = vunpack.c.h.s8.bf16 %v3227
        %v3479 = vunpack.c.l.s8.bf16 %v3228
        %v3480 = vunpack.c.h.s8.bf16 %v3228
        %v3481 = vunpack.c.l.s8.bf16 %v3229
        %v3482 = vunpack.c.h.s8.bf16 %v3229
        %v3483 = vunpack.c.l.s8.bf16 %v3230
        %v3484 = vunpack.c.h.s8.bf16 %v3230
        %v3485 = vunpack.c.l.s8.bf16 %v3231
        %v3486 = vunpack.c.h.s8.bf16 %v3231
        %v3487 = vunpack.c.l.s8.bf16 %v3232
        %v3488 = vunpack.c.h.s8.bf16 %v3232
        %v3489 = vunpack.c.l.s8.bf16 %v3233
        %v3490 = vunpack.c.h.s8.bf16 %v3233
        %v3491 = vunpack.c.l.s8.bf16 %v3234
        %v3492 = vunpack.c.h.s8.bf16 %v3234
        %v3493 = vunpack.c.l.s8.bf16 %v3235
        %v3494 = vunpack.c.h.s8.bf16 %v3235
        %v3495 = vunpack.c.l.s8.bf16 %v3236
        %v3496 = vunpack.c.h.s8.bf16 %v3236
        %v3497 = vunpack.c.l.s8.bf16 %v3237
        %v3498 = vunpack.c.h.s8.bf16 %v3237
        %v3499 = vunpack.c.l.s8.bf16 %v3238
        %v3500 = vunpack.c.h.s8.bf16 %v3238
        %v3501 = vunpack.c.l.s8.bf16 %v3239
        %v3502 = vunpack.c.h.s8.bf16 %v3239
        %v3503 = vunpack.c.l.s8.bf16 %v3240
        %v3504 = vunpack.c.h.s8.bf16 %v3240
        %v3505 = vunpack.c.l.s8.bf16 %v3241
        %v3506 = vunpack.c.h.s8.bf16 %v3241
        %v3507 = vunpack.c.l.s8.bf16 %v3242
        %v3508 = vunpack.c.h.s8.bf16 %v3242
        %v3509 = vunpack.c.l.s8.bf16 %v3243
        %v3510 = vunpack.c.h.s8.bf16 %v3243
        %v3511 = vunpack.c.l.s8.bf16 %v3244
        %v3512 = vunpack.c.h.s8.bf16 %v3244
        %v3513 = vunpack.c.l.s8.bf16 %v3245
        %v3514 = vunpack.c.h.s8.bf16 %v3245
        %v3515 = vunpack.c.l.s8.bf16 %v3246
        %v3516 = vunpack.c.h.s8.bf16 %v3246
        %v3517 = vunpack.c.l.s8.bf16 %v3247
        %v3518 = vunpack.c.h.s8.bf16 %v3247
        %v3519 = vunpack.c.l.s8.bf16 %v3248
        %v3520 = vunpack.c.h.s8.bf16 %v3248
        %v3521 = vunpack.c.l.s8.bf16 %v3249
        %v3522 = vunpack.c.h.s8.bf16 %v3249
        %v3523 = vunpack.c.l.s8.bf16 %v3250
        %v3524 = vunpack.c.h.s8.bf16 %v3250
        %v3525 = vunpack.c.l.s8.bf16 %v3251
        %v3526 = vunpack.c.h.s8.bf16 %v3251
        %v3527 = vunpack.c.l.s8.bf16 %v3252
        %v3528 = vunpack.c.h.s8.bf16 %v3252
        %v3529 = vunpack.c.l.s8.bf16 %v3253
        %v3530 = vunpack.c.h.s8.bf16 %v3253
        %v3531 = vunpack.c.l.s8.bf16 %v3254
        %v3532 = vunpack.c.h.s8.bf16 %v3254
        %v3533 = vunpack.c.l.s8.bf16 %v3255
        %v3534 = vunpack.c.h.s8.bf16 %v3255
        %v3535 = vunpack.c.l.s8.bf16 %v3256
        %v3536 = vunpack.c.h.s8.bf16 %v3256
        %v3537 = vunpack.c.l.s8.bf16 %v3257
        %v3538 = vunpack.c.h.s8.bf16 %v3257
        %v3539 = vunpack.c.l.s8.bf16 %v3258
        %v3540 = vunpack.c.h.s8.bf16 %v3258
        %v3541 = vunpack.c.l.s8.bf16 %v3259
        %v3542 = vunpack.c.h.s8.bf16 %v3259
        %v3543 = vunpack.c.l.s8.bf16 %v3260
        %v3544 = vunpack.c.h.s8.bf16 %v3260
        %v3545 = vunpack.c.l.s8.bf16 %v3261
        %v3546 = vunpack.c.h.s8.bf16 %v3261
        %v3547 = vunpack.c.l.s8.bf16 %v3262
        %v3548 = vunpack.c.h.s8.bf16 %v3262
        %v3549 = vunpack.c.l.s8.bf16 %v3263
        %v3550 = vunpack.c.h.s8.bf16 %v3263
        %v3551 = vunpack.c.l.s8.bf16 %v3264
        %v3552 = vunpack.c.h.s8.bf16 %v3264
        %v3553 = vunpack.c.l.s8.bf16 %v3265
        %v3554 = vunpack.c.h.s8.bf16 %v3265
        %v3555 = vunpack.c.l.s8.bf16 %v3266
        %v3556 = vunpack.c.h.s8.bf16 %v3266
        %v3557 = vunpack.c.l.s8.bf16 %v3267
        %v3558 = vunpack.c.h.s8.bf16 %v3267
        %v3559 = vunpack.c.l.s8.bf16 %v3268
        %v3560 = vunpack.c.h.s8.bf16 %v3268
        %v3561 = vunpack.c.l.s8.bf16 %v3269
        %v3562 = vunpack.c.h.s8.bf16 %v3269
        %v3563 = vunpack.c.l.s8.bf16 %v3270
        %v3564 = vunpack.c.h.s8.bf16 %v3270
        %v3565 = vunpack.c.l.s8.bf16 %v3271
        %v3566 = vunpack.c.h.s8.bf16 %v3271
        %v3567 = vunpack.c.l.s8.bf16 %v3272
        %v3568 = vunpack.c.h.s8.bf16 %v3272
        %v3569 = vunpack.c.l.s8.bf16 %v3273
        %v3570 = vunpack.c.h.s8.bf16 %v3273
        %v3571 = vunpack.c.l.s8.bf16 %v3274
        %v3572 = vunpack.c.h.s8.bf16 %v3274
        %v3573 = vunpack.c.l.s8.bf16 %v3275
        %v3574 = vunpack.c.h.s8.bf16 %v3275
        %v3575 = vunpack.c.l.s8.bf16 %v3276
        %v3576 = vunpack.c.h.s8.bf16 %v3276
        %v3577 = vunpack.c.l.s8.bf16 %v3277
        %v3578 = vunpack.c.h.s8.bf16 %v3277
        %v3579 = vunpack.c.l.s8.bf16 %v3278
        %v3580 = vunpack.c.h.s8.bf16 %v3278
        %v3581 = vunpack.c.l.s8.bf16 %v3279
        %v3582 = vunpack.c.h.s8.bf16 %v3279
        %v3583 = vunpack.c.l.s8.bf16 %v3280
        %v3584 = vunpack.c.h.s8.bf16 %v3280
        %v3585 = vunpack.c.l.s8.bf16 %v3281
        %v3586 = vunpack.c.h.s8.bf16 %v3281
        %v3587 = vunpack.c.l.s8.bf16 %v3282
        %v3588 = vunpack.c.h.s8.bf16 %v3282
        %v3589 = vunpack.c.l.s8.bf16 %v3283
        %v3590 = vunpack.c.h.s8.bf16 %v3283
        %v3591 = vunpack.c.l.s8.bf16 %v3284
        %v3592 = vunpack.c.h.s8.bf16 %v3284
        %v3593 = vunpack.c.l.s8.bf16 %v3285
        %v3594 = vunpack.c.h.s8.bf16 %v3285
        %v3595 = vunpack.c.l.s8.bf16 %v3286
        %v3596 = vunpack.c.h.s8.bf16 %v3286
        %v3597 = vunpack.c.l.s8.bf16 %v3287
        %v3598 = vunpack.c.h.s8.bf16 %v3287
        %v3599 = vunpack.c.l.s8.bf16 %v3288
        %v3600 = vunpack.c.h.s8.bf16 %v3288
        %v3601 = vunpack.c.l.s8.bf16 %v3289
        %v3602 = vunpack.c.h.s8.bf16 %v3289
        %v3603 = vunpack.c.l.s8.bf16 %v3290
        %v3604 = vunpack.c.h.s8.bf16 %v3290
        %v3605 = vunpack.c.l.s8.bf16 %v3291
        %v3606 = vunpack.c.h.s8.bf16 %v3291
        %v3607 = vunpack.c.l.s8.bf16 %v3292
        %v3608 = vunpack.c.h.s8.bf16 %v3292
        %v3609 = vunpack.c.l.s8.bf16 %v3293
        %v3610 = vunpack.c.h.s8.bf16 %v3293
        %v3611 = vunpack.c.l.s8.bf16 %v3294
        %v3612 = vunpack.c.h.s8.bf16 %v3294
        %v3613 = vunpack.c.l.s8.bf16 %v3295
        %v3614 = vunpack.c.h.s8.bf16 %v3295
        %v3615 = vunpack.c.l.s8.bf16 %v3296
        %v3616 = vunpack.c.h.s8.bf16 %v3296
        %v3617 = vunpack.c.l.s8.bf16 %v3297
        %v3618 = vunpack.c.h.s8.bf16 %v3297
        %v3619 = vunpack.c.l.s8.bf16 %v3298
        %v3620 = vunpack.c.h.s8.bf16 %v3298
        %v3621 = vunpack.c.l.s8.bf16 %v3299
        %v3622 = vunpack.c.h.s8.bf16 %v3299
        %v3623 = vunpack.c.l.s8.bf16 %v3300
        %v3624 = vunpack.c.h.s8.bf16 %v3300
        %v3625 = vunpack.c.l.s8.bf16 %v3301
        %v3626 = vunpack.c.h.s8.bf16 %v3301
        %v3627 = vunpack.c.l.s8.bf16 %v3302
        %v3628 = vunpack.c.h.s8.bf16 %v3302
        %v3629 = vunpack.c.l.s8.bf16 %v3303
        %v3630 = vunpack.c.h.s8.bf16 %v3303
        %v3631 = vunpack.c.l.s8.bf16 %v3304
        %v3632 = vunpack.c.h.s8.bf16 %v3304
        %v3633 = vunpack.c.l.s8.bf16 %v3305
        %v3634 = vunpack.c.h.s8.bf16 %v3305
        %v3635 = vunpack.c.l.s8.bf16 %v3306
        %v3636 = vunpack.c.h.s8.bf16 %v3306
        %v3637 = vunpack.c.l.s8.bf16 %v3307
        %v3638 = vunpack.c.h.s8.bf16 %v3307
        %v3639 = vunpack.c.l.s8.bf16 %v3308
        %v3640 = vunpack.c.h.s8.bf16 %v3308
        %v3641 = vunpack.c.l.s8.bf16 %v3309
        %v3642 = vunpack.c.h.s8.bf16 %v3309
        %v3643 = vunpack.c.l.s8.bf16 %v3310
        %v3644 = vunpack.c.h.s8.bf16 %v3310
        %v3645 = vunpack.c.l.s8.bf16 %v3311
        %v3646 = vunpack.c.h.s8.bf16 %v3311
        %v3647 = vunpack.c.l.s8.bf16 %v3312
        %v3648 = vunpack.c.h.s8.bf16 %v3312
        %v3649 = vunpack.c.l.s8.bf16 %v3313
        %v3650 = vunpack.c.h.s8.bf16 %v3313
        %v3651 = vunpack.c.l.s8.bf16 %v3314
        %v3652 = vunpack.c.h.s8.bf16 %v3314
        %v3653 = vunpack.c.l.s8.bf16 %v3315
        %v3654 = vunpack.c.h.s8.bf16 %v3315
        %v3655 = vunpack.c.l.s8.bf16 %v3316
        %v3656 = vunpack.c.h.s8.bf16 %v3316
        %v3657 = vunpack.c.l.s8.bf16 %v3317
        %v3658 = vunpack.c.h.s8.bf16 %v3317
        %v3659 = vunpack.c.l.s8.bf16 %v3318
        %v3660 = vunpack.c.h.s8.bf16 %v3318
        %v3661 = vunpack.c.l.s8.bf16 %v3319
        %v3662 = vunpack.c.h.s8.bf16 %v3319
        %v3663 = vunpack.c.l.s8.bf16 %v3320
        %v3664 = vunpack.c.h.s8.bf16 %v3320
        %v3665 = vunpack.c.l.s8.bf16 %v3321
        %v3666 = vunpack.c.h.s8.bf16 %v3321
        %v3667 = vunpack.c.l.s8.bf16 %v3322
        %v3668 = vunpack.c.h.s8.bf16 %v3322
        %v3669 = vunpack.c.l.s8.bf16 %v3323
        %v3670 = vunpack.c.h.s8.bf16 %v3323
        %v3671 = vunpack.c.l.s8.bf16 %v3324
        %v3672 = vunpack.c.h.s8.bf16 %v3324
        %v3673 = vunpack.c.l.s8.bf16 %v3325
        %v3674 = vunpack.c.h.s8.bf16 %v3325
        %v3675 = vunpack.c.l.s8.bf16 %v3326
        %v3676 = vunpack.c.h.s8.bf16 %v3326
        %v3677 = vunpack.c.l.s8.bf16 %v3327
        %v3678 = vunpack.c.h.s8.bf16 %v3327
        %v3679 = vunpack.c.l.s8.bf16 %v3328
        %v3680 = vunpack.c.h.s8.bf16 %v3328
        %v3681 = vunpack.c.l.s8.bf16 %v3329
        %v3682 = vunpack.c.h.s8.bf16 %v3329
        %v3683 = vunpack.c.l.s8.bf16 %v3330
        %v3684 = vunpack.c.h.s8.bf16 %v3330
        %v3685 = vunpack.c.l.s8.bf16 %v3331
        %v3686 = vunpack.c.h.s8.bf16 %v3331
        %v3687 = vunpack.c.l.s8.bf16 %v3332
        %v3688 = vunpack.c.h.s8.bf16 %v3332
        %v3689 = vunpack.c.l.s8.bf16 %v3333
        %v3690 = vunpack.c.h.s8.bf16 %v3333
        %v3691 = vunpack.c.l.s8.bf16 %v3334
        %v3692 = vunpack.c.h.s8.bf16 %v3334
        %v3693 = vunpack.c.l.s8.bf16 %v3335
        %v3694 = vunpack.c.h.s8.bf16 %v3335
        %v3695 = vunpack.c.l.s8.bf16 %v3336
        %v3696 = vunpack.c.h.s8.bf16 %v3336
        %v3697 = vunpack.c.l.s8.bf16 %v3337
        %v3698 = vunpack.c.h.s8.bf16 %v3337
        %v3699 = vunpack.c.l.s8.bf16 %v3338
        %v3700 = vunpack.c.h.s8.bf16 %v3338
        %v3701 = vunpack.c.l.s8.bf16 %v3339
        %v3702 = vunpack.c.h.s8.bf16 %v3339
        %v3703 = vunpack.c.l.s8.bf16 %v3340
        %v3704 = vunpack.c.h.s8.bf16 %v3340
        %v3705 = vunpack.c.l.s8.bf16 %v3341
        %v3706 = vunpack.c.h.s8.bf16 %v3341
        %v3707 = vunpack.c.l.s8.bf16 %v3342
        %v3708 = vunpack.c.h.s8.bf16 %v3342
        %v3709 = vunpack.c.l.s8.bf16 %v3343
        %v3710 = vunpack.c.h.s8.bf16 %v3343
        %v3711 = vunpack.c.l.s8.bf16 %v3344
        %v3712 = vunpack.c.h.s8.bf16 %v3344
        %v3713 = vunpack.c.l.s8.bf16 %v3345
        %v3714 = vunpack.c.h.s8.bf16 %v3345
        %v3715 = vunpack.c.l.s8.bf16 %v3346
        %v3716 = vunpack.c.h.s8.bf16 %v3346
        %v3717 = vunpack.c.l.s8.bf16 %v3347
        %v3718 = vunpack.c.h.s8.bf16 %v3347
        %v3719 = vunpack.c.l.s8.bf16 %v3348
        %v3720 = vunpack.c.h.s8.bf16 %v3348
        %v3721 = vunpack.c.l.s8.bf16 %v3349
        %v3722 = vunpack.c.h.s8.bf16 %v3349
        %v3723 = vunpack.c.l.s8.bf16 %v3350
        %v3724 = vunpack.c.h.s8.bf16 %v3350
        %v3725 = vunpack.c.l.s8.bf16 %v3351
        %v3726 = vunpack.c.h.s8.bf16 %v3351
        %v3727 = vunpack.c.l.s8.bf16 %v3352
        %v3728 = vunpack.c.h.s8.bf16 %v3352
        %v3729 = vunpack.c.l.s8.bf16 %v3353
        %v3730 = vunpack.c.h.s8.bf16 %v3353
        %v3731 = vunpack.c.l.s8.bf16 %v3354
        %v3732 = vunpack.c.h.s8.bf16 %v3354
        %v3733 = vunpack.c.l.s8.bf16 %v3355
        %v3734 = vunpack.c.h.s8.bf16 %v3355
        %v3735 = vunpack.c.l.s8.bf16 %v3356
        %v3736 = vunpack.c.h.s8.bf16 %v3356
        %v3737 = vunpack.c.l.s8.bf16 %v3357
        %v3738 = vunpack.c.h.s8.bf16 %v3357
        %v3739 = vunpack.c.l.s8.bf16 %v3358
        %v3740 = vunpack.c.h.s8.bf16 %v3358
        %v3741 = vunpack.c.l.s8.bf16 %v3359
        %v3742 = vunpack.c.h.s8.bf16 %v3359
        %v3743 = vunpack.c.l.s8.bf16 %v3360
        %v3744 = vunpack.c.h.s8.bf16 %v3360
        %v3745 = vunpack.c.l.s8.bf16 %v3361
        %v3746 = vunpack.c.h.s8.bf16 %v3361
        %v3747 = vunpack.c.l.s8.bf16 %v3362
        %v3748 = vunpack.c.h.s8.bf16 %v3362
        %v3749 = vunpack.c.l.s8.bf16 %v3363
        %v3750 = vunpack.c.h.s8.bf16 %v3363
        %v3751 = vunpack.c.l.s8.bf16 %v3364
        %v3752 = vunpack.c.h.s8.bf16 %v3364
        %v3753 = vunpack.c.l.s8.bf16 %v3365
        %v3754 = vunpack.c.h.s8.bf16 %v3365
        %v3755 = vunpack.c.l.s8.bf16 %v3366
        %v3756 = vunpack.c.h.s8.bf16 %v3366
        %v3757 = vunpack.c.l.s8.bf16 %v3367
        %v3758 = vunpack.c.h.s8.bf16 %v3367
        %v3759 = vunpack.c.l.s8.bf16 %v3368
        %v3760 = vunpack.c.h.s8.bf16 %v3368
        %v3761 = vunpack.c.l.s8.bf16 %v3369
        %v3762 = vunpack.c.h.s8.bf16 %v3369
        %v3763 = vunpack.c.l.s8.bf16 %v3370
        %v3764 = vunpack.c.h.s8.bf16 %v3370
        %v3765 = vunpack.c.l.s8.bf16 %v3371
        %v3766 = vunpack.c.h.s8.bf16 %v3371
        %v3767 = vunpack.c.l.s8.bf16 %v3372
        %v3768 = vunpack.c.h.s8.bf16 %v3372
        %v3769 = vunpack.c.l.s8.bf16 %v3373
        %v3770 = vunpack.c.h.s8.bf16 %v3373
        %v3771 = vunpack.c.l.s8.bf16 %v3374
        %v3772 = vunpack.c.h.s8.bf16 %v3374
        %v3773 = vunpack.c.l.s8.bf16 %v3375
        %v3774 = vunpack.c.h.s8.bf16 %v3375
        %v3775 = vunpack.c.l.s8.bf16 %v3376
        %v3776 = vunpack.c.h.s8.bf16 %v3376
        %v3779 = vunpack.c.l.s4 1966171168
        %v3780 = vunpack.c.0.s8 %v3779
        %v3781 = vlaneseq
        %v3782 = vshrl.u32 %v3781, 7
        %v3783 = vsub.s32 %v3780, %v3782
        %v3784 = vrot.slane %v3176, %v3783
        %v3785 = vcombine.high %v3784, %v3784
        %v3787 = vunpack.c.l.s4 1966171168
        %v3788 = vunpack.c.0.s8 %v3787
        %v3789 = vlaneseq
        %v3790 = vshrl.u32 %v3789, 7
        %v3791 = vsub.s32 %v3788, %v3790
        %v3792 = vrot.slane %v3784, %v3791
        %v3794 = vunpack.c.l.s4 1966171168
        %v3795 = vunpack.c.0.s8 %v3794
        %v3796 = vlaneseq
        %v3797 = vshrl.u32 %v3796, 7
        %v3798 = vsub.s32 %v3795, %v3797
        %v3799 = vrot.slane %v3785, %v3798
        %3802 = vmatprep.subr.bf16.mxu0 0
        %3803 = vmatpush1.bf16.msra.mxu0 %v3377
        %3804 = vmatprep.subr.bf16.mxu0 0
        %3805 = vmatpush1.bf16.msra.mxu0 %v3378
        %3806 = vmatprep.subr.bf16.mxu0 0
        %3807 = vmatpush1.bf16.msra.mxu0 %v3379
        %3808 = vmatprep.subr.bf16.mxu0 0
        %3809 = vmatpush1.bf16.msra.mxu0 %v3380
        %3810 = vmatprep.subr.bf16.mxu0 0
        %3811 = vmatpush1.bf16.msra.mxu0 %v3381
        %3812 = vmatprep.subr.bf16.mxu0 0
        %3813 = vmatpush1.bf16.msra.mxu0 %v3382
        %3814 = vmatprep.subr.bf16.mxu0 0
        %3815 = vmatpush1.bf16.msra.mxu0 %v3383
        %3816 = vmatprep.subr.bf16.mxu0 0
        %3817 = vmatpush1.bf16.msra.mxu0 %v3384
        %3818 = vmatprep.subr.bf16.mxu0 0
        %3819 = vmatpush1.bf16.msra.mxu0 %v3385
        %3820 = vmatprep.subr.bf16.mxu0 0
        %3821 = vmatpush1.bf16.msra.mxu0 %v3386
        %3822 = vmatprep.subr.bf16.mxu0 0
        %3823 = vmatpush1.bf16.msra.mxu0 %v3387
        %3824 = vmatprep.subr.bf16.mxu0 0
        %3825 = vmatpush1.bf16.msra.mxu0 %v3388
        %3826 = vmatprep.subr.bf16.mxu0 0
        %3827 = vmatpush1.bf16.msra.mxu0 %v3389
        %3828 = vmatprep.subr.bf16.mxu0 0
        %3829 = vmatpush1.bf16.msra.mxu0 %v3390
        %3830 = vmatprep.subr.bf16.mxu0 0
        %3831 = vmatpush1.bf16.msra.mxu0 %v3391
        %3832 = vmatprep.subr.bf16.mxu0 0
        %3833 = vmatpush1.bf16.msra.mxu0 %v3392
        %3834 = vmatprep.mubr.bf16.mxu0 %v3799
        %3835 = vmatmul.mubr.bf16.gmra.mrb[0].mxu0 %v3792
        %v3836 = vpop.f32.mrb[0].mxu0
        %v3837 = vadd.f32 0.0, %v3836
        %v3838 = vpop.f32.mrb[0].mxu0
        %v3839 = vpop.f32.mrb[0].mxu0
        %v3840 = vpop.f32.mrb[0].mxu0
        %3841 = vdwg.mxu0
        %3842 = vmatprep.subr.bf16.mxu0 0
        %3843 = vmatpush1.bf16.msra.mxu0 %v3393
        %3844 = vmatprep.subr.bf16.mxu0 0
        %3845 = vmatpush1.bf16.msra.mxu0 %v3394
        %3846 = vmatprep.subr.bf16.mxu0 0
        %3847 = vmatpush1.bf16.msra.mxu0 %v3395
        %3848 = vmatprep.subr.bf16.mxu0 0
        %3849 = vmatpush1.bf16.msra.mxu0 %v3396
        %3850 = vmatprep.subr.bf16.mxu0 0
        %3851 = vmatpush1.bf16.msra.mxu0 %v3397
        %3852 = vmatprep.subr.bf16.mxu0 0
        %3853 = vmatpush1.bf16.msra.mxu0 %v3398
        %3854 = vmatprep.subr.bf16.mxu0 0
        %3855 = vmatpush1.bf16.msra.mxu0 %v3399
        %3856 = vmatprep.subr.bf16.mxu0 0
        %3857 = vmatpush1.bf16.msra.mxu0 %v3400
        %3858 = vmatprep.subr.bf16.mxu0 0
        %3859 = vmatpush1.bf16.msra.mxu0 %v3401
        %3860 = vmatprep.subr.bf16.mxu0 0
        %3861 = vmatpush1.bf16.msra.mxu0 %v3402
        %3862 = vmatprep.subr.bf16.mxu0 0
        %3863 = vmatpush1.bf16.msra.mxu0 %v3403
        %3864 = vmatprep.subr.bf16.mxu0 0
        %3865 = vmatpush1.bf16.msra.mxu0 %v3404
        %3866 = vmatprep.subr.bf16.mxu0 0
        %3867 = vmatpush1.bf16.msra.mxu0 %v3405
        %3868 = vmatprep.subr.bf16.mxu0 0
        %3869 = vmatpush1.bf16.msra.mxu0 %v3406
        %3870 = vmatprep.subr.bf16.mxu0 0
        %3871 = vmatpush1.bf16.msra.mxu0 %v3407
        %3872 = vmatprep.subr.bf16.mxu0 0
        %3873 = vmatpush1.bf16.msra.mxu0 %v3408
        %3874 = vmatprep.mubr.bf16.mxu0 %v3799
        %3875 = vmatmul.mubr.bf16.gmra.mrb[0].mxu0 %v3792
        %v3876 = vpop.f32.mrb[0].mxu0
        %v3877 = vadd.f32 0.0, %v3876
        %v3878 = vpop.f32.mrb[0].mxu0
        %v3879 = vpop.f32.mrb[0].mxu0
        %v3880 = vpop.f32.mrb[0].mxu0
        %3881 = vdwg.mxu0
        %3882 = vmatprep.subr.bf16.mxu0 0
        %3883 = vmatpush1.bf16.msra.mxu0 %v3409
        %3884 = vmatprep.subr.bf16.mxu0 0
        %3885 = vmatpush1.bf16.msra.mxu0 %v3410
        %3886 = vmatprep.subr.bf16.mxu0 0
        %3887 = vmatpush1.bf16.msra.mxu0 %v3411
        %3888 = vmatprep.subr.bf16.mxu0 0
        %3889 = vmatpush1.bf16.msra.mxu0 %v3412
        %3890 = vmatprep.subr.bf16.mxu0 0
        %3891 = vmatpush1.bf16.msra.mxu0 %v3413
        %3892 = vmatprep.subr.bf16.mxu0 0
        %3893 = vmatpush1.bf16.msra.mxu0 %v3414
        %3894 = vmatprep.subr.bf16.mxu0 0
        %3895 = vmatpush1.bf16.msra.mxu0 %v3415
        %3896 = vmatprep.subr.bf16.mxu0 0
        %3897 = vmatpush1.bf16.msra.mxu0 %v3416
        %3898 = vmatprep.subr.bf16.mxu0 0
        %3899 = vmatpush1.bf16.msra.mxu0 %v3417
        %3900 = vmatprep.subr.bf16.mxu0 0
        %3901 = vmatpush1.bf16.msra.mxu0 %v3418
        %3902 = vmatprep.subr.bf16.mxu0 0
        %3903 = vmatpush1.bf16.msra.mxu0 %v3419
        %3904 = vmatprep.subr.bf16.mxu0 0
        %3905 = vmatpush1.bf16.msra.mxu0 %v3420
        %3906 = vmatprep.subr.bf16.mxu0 0
        %3907 = vmatpush1.bf16.msra.mxu0 %v3421
        %3908 = vmatprep.subr.bf16.mxu0 0
        %3909 = vmatpush1.bf16.msra.mxu0 %v3422
        %3910 = vmatprep.subr.bf16.mxu0 0
        %3911 = vmatpush1.bf16.msra.mxu0 %v3423
        %3912 = vmatprep.subr.bf16.mxu0 0
        %3913 = vmatpush1.bf16.msra.mxu0 %v3424
        %3914 = vmatprep.mubr.bf16.mxu0 %v3799
        %3915 = vmatmul.mubr.bf16.gmra.mrb[0].mxu0 %v3792
        %v3916 = vpop.f32.mrb[0].mxu0
        %v3917 = vadd.f32 0.0, %v3916
        %v3918 = vpop.f32.mrb[0].mxu0
        %v3919 = vpop.f32.mrb[0].mxu0
        %v3920 = vpop.f32.mrb[0].mxu0
        %3921 = vdwg.mxu0
        %3922 = vmatprep.subr.bf16.mxu0 0
        %3923 = vmatpush1.bf16.msra.mxu0 %v3425
        %3924 = vmatprep.subr.bf16.mxu0 0
        %3925 = vmatpush1.bf16.msra.mxu0 %v3426
        %3926 = vmatprep.subr.bf16.mxu0 0
        %3927 = vmatpush1.bf16.msra.mxu0 %v3427
        %3928 = vmatprep.subr.bf16.mxu0 0
        %3929 = vmatpush1.bf16.msra.mxu0 %v3428
        %3930 = vmatprep.subr.bf16.mxu0 0
        %3931 = vmatpush1.bf16.msra.mxu0 %v3429
        %3932 = vmatprep.subr.bf16.mxu0 0
        %3933 = vmatpush1.bf16.msra.mxu0 %v3430
        %3934 = vmatprep.subr.bf16.mxu0 0
        %3935 = vmatpush1.bf16.msra.mxu0 %v3431
        %3936 = vmatprep.subr.bf16.mxu0 0
        %3937 = vmatpush1.bf16.msra.mxu0 %v3432
        %3938 = vmatprep.subr.bf16.mxu0 0
        %3939 = vmatpush1.bf16.msra.mxu0 %v3433
        %3940 = vmatprep.subr.bf16.mxu0 0
        %3941 = vmatpush1.bf16.msra.mxu0 %v3434
        %3942 = vmatprep.subr.bf16.mxu0 0
        %3943 = vmatpush1.bf16.msra.mxu0 %v3435
        %3944 = vmatprep.subr.bf16.mxu0 0
        %3945 = vmatpush1.bf16.msra.mxu0 %v3436
        %3946 = vmatprep.subr.bf16.mxu0 0
        %3947 = vmatpush1.bf16.msra.mxu0 %v3437
        %3948 = vmatprep.subr.bf16.mxu0 0
        %3949 = vmatpush1.bf16.msra.mxu0 %v3438
        %3950 = vmatprep.subr.bf16.mxu0 0
        %3951 = vmatpush1.bf16.msra.mxu0 %v3439
        %3952 = vmatprep.subr.bf16.mxu0 0
        %3953 = vmatpush1.bf16.msra.mxu0 %v3440
        %3954 = vmatprep.mubr.bf16.mxu0 %v3799
        %3955 = vmatmul.mubr.bf16.gmra.mrb[0].mxu0 %v3792
        %v3956 = vpop.f32.mrb[0].mxu0
        %v3957 = vadd.f32 0.0, %v3956
        %v3958 = vpop.f32.mrb[0].mxu0
        %v3959 = vpop.f32.mrb[0].mxu0
        %v3960 = vpop.f32.mrb[0].mxu0
        %3961 = vdwg.mxu0
        %3962 = vmatprep.subr.bf16.mxu0 0
        %3963 = vmatpush1.bf16.msra.mxu0 %v3441
        %3964 = vmatprep.subr.bf16.mxu0 0
        %3965 = vmatpush1.bf16.msra.mxu0 %v3442
        %3966 = vmatprep.subr.bf16.mxu0 0
        %3967 = vmatpush1.bf16.msra.mxu0 %v3443
        %3968 = vmatprep.subr.bf16.mxu0 0
        %3969 = vmatpush1.bf16.msra.mxu0 %v3444
        %3970 = vmatprep.subr.bf16.mxu0 0
        %3971 = vmatpush1.bf16.msra.mxu0 %v3445
        %3972 = vmatprep.subr.bf16.mxu0 0
        %3973 = vmatpush1.bf16.msra.mxu0 %v3446
        %3974 = vmatprep.subr.bf16.mxu0 0
        %3975 = vmatpush1.bf16.msra.mxu0 %v3447
        %3976 = vmatprep.subr.bf16.mxu0 0
        %3977 = vmatpush1.bf16.msra.mxu0 %v3448
        %3978 = vmatprep.subr.bf16.mxu0 0
        %3979 = vmatpush1.bf16.msra.mxu0 %v3449
        %3980 = vmatprep.subr.bf16.mxu0 0
        %3981 = vmatpush1.bf16.msra.mxu0 %v3450
        %3982 = vmatprep.subr.bf16.mxu0 0
        %3983 = vmatpush1.bf16.msra.mxu0 %v3451
        %3984 = vmatprep.subr.bf16.mxu0 0
        %3985 = vmatpush1.bf16.msra.mxu0 %v3452
        %3986 = vmatprep.subr.bf16.mxu0 0
        %3987 = vmatpush1.bf16.msra.mxu0 %v3453
        %3988 = vmatprep.subr.bf16.mxu0 0
        %3989 = vmatpush1.bf16.msra.mxu0 %v3454
        %3990 = vmatprep.subr.bf16.mxu0 0
        %3991 = vmatpush1.bf16.msra.mxu0 %v3455
        %3992 = vmatprep.subr.bf16.mxu0 0
        %3993 = vmatpush1.bf16.msra.mxu0 %v3456
        %3994 = vmatprep.mubr.bf16.mxu0 %v3799
        %3995 = vmatmul.mubr.bf16.gmra.mrb[0].mxu0 %v3792
        %v3996 = vpop.f32.mrb[0].mxu0
        %v3997 = vadd.f32 0.0, %v3996
        %v3998 = vpop.f32.mrb[0].mxu0
        %v3999 = vpop.f32.mrb[0].mxu0
        %v4000 = vpop.f32.mrb[0].mxu0
        %4001 = vdwg.mxu0
        %4002 = vmatprep.subr.bf16.mxu0 0
        %4003 = vmatpush1.bf16.msra.mxu0 %v3457
        %4004 = vmatprep.subr.bf16.mxu0 0
        %4005 = vmatpush1.bf16.msra.mxu0 %v3458
        %4006 = vmatprep.subr.bf16.mxu0 0
        %4007 = vmatpush1.bf16.msra.mxu0 %v3459
        %4008 = vmatprep.subr.bf16.mxu0 0
        %4009 = vmatpush1.bf16.msra.mxu0 %v3460
        %4010 = vmatprep.subr.bf16.mxu0 0
        %4011 = vmatpush1.bf16.msra.mxu0 %v3461
        %4012 = vmatprep.subr.bf16.mxu0 0
        %4013 = vmatpush1.bf16.msra.mxu0 %v3462
        %4014 = vmatprep.subr.bf16.mxu0 0
        %4015 = vmatpush1.bf16.msra.mxu0 %v3463
        %4016 = vmatprep.subr.bf16.mxu0 0
        %4017 = vmatpush1.bf16.msra.mxu0 %v3464
        %4018 = vmatprep.subr.bf16.mxu0 0
        %4019 = vmatpush1.bf16.msra.mxu0 %v3465
        %4020 = vmatprep.subr.bf16.mxu0 0
        %4021 = vmatpush1.bf16.msra.mxu0 %v3466
        %4022 = vmatprep.subr.bf16.mxu0 0
        %4023 = vmatpush1.bf16.msra.mxu0 %v3467
        %4024 = vmatprep.subr.bf16.mxu0 0
        %4025 = vmatpush1.bf16.msra.mxu0 %v3468
        %4026 = vmatprep.subr.bf16.mxu0 0
        %4027 = vmatpush1.bf16.msra.mxu0 %v3469
        %4028 = vmatprep.subr.bf16.mxu0 0
        %4029 = vmatpush1.bf16.msra.mxu0 %v3470
        %4030 = vmatprep.subr.bf16.mxu0 0
        %4031 = vmatpush1.bf16.msra.mxu0 %v3471
        %4032 = vmatprep.subr.bf16.mxu0 0
        %4033 = vmatpush1.bf16.msra.mxu0 %v3472
        %4034 = vmatprep.mubr.bf16.mxu0 %v3799
        %4035 = vmatmul.mubr.bf16.gmra.mrb[0].mxu0 %v3792
        %v4036 = vpop.f32.mrb[0].mxu0
        %v4037 = vadd.f32 0.0, %v4036
        %v4038 = vpop.f32.mrb[0].mxu0
        %v4039 = vpop.f32.mrb[0].mxu0
        %v4040 = vpop.f32.mrb[0].mxu0
        %4041 = vdwg.mxu0
        %4042 = vmatprep.subr.bf16.mxu0 0
        %4043 = vmatpush1.bf16.msra.mxu0 %v3473
        %4044 = vmatprep.subr.bf16.mxu0 0
        %4045 = vmatpush1.bf16.msra.mxu0 %v3474
        %4046 = vmatprep.subr.bf16.mxu0 0
        %4047 = vmatpush1.bf16.msra.mxu0 %v3475
        %4048 = vmatprep.subr.bf16.mxu0 0
        %4049 = vmatpush1.bf16.msra.mxu0 %v3476
        %4050 = vmatprep.subr.bf16.mxu0 0
        %4051 = vmatpush1.bf16.msra.mxu0 %v3477
        %4052 = vmatprep.subr.bf16.mxu0 0
        %4053 = vmatpush1.bf16.msra.mxu0 %v3478
        %4054 = vmatprep.subr.bf16.mxu0 0
        %4055 = vmatpush1.bf16.msra.mxu0 %v3479
        %4056 = vmatprep.subr.bf16.mxu0 0
        %4057 = vmatpush1.bf16.msra.mxu0 %v3480
        %4058 = vmatprep.subr.bf16.mxu0 0
        %4059 = vmatpush1.bf16.msra.mxu0 %v3481
        %4060 = vmatprep.subr.bf16.mxu0 0
        %4061 = vmatpush1.bf16.msra.mxu0 %v3482
        %4062 = vmatprep.subr.bf16.mxu0 0
        %4063 = vmatpush1.bf16.msra.mxu0 %v3483
        %4064 = vmatprep.subr.bf16.mxu0 0
        %4065 = vmatpush1.bf16.msra.mxu0 %v3484
        %4066 = vmatprep.subr.bf16.mxu0 0
        %4067 = vmatpush1.bf16.msra.mxu0 %v3485
        %4068 = vmatprep.subr.bf16.mxu0 0
        %4069 = vmatpush1.bf16.msra.mxu0 %v3486
        %4070 = vmatprep.subr.bf16.mxu0 0
        %4071 = vmatpush1.bf16.msra.mxu0 %v3487
        %4072 = vmatprep.subr.bf16.mxu0 0
        %4073 = vmatpush1.bf16.msra.mxu0 %v3488
        %4074 = vmatprep.mubr.bf16.mxu0 %v3799
        %4075 = vmatmul.mubr.bf16.gmra.mrb[0].mxu0 %v3792
        %v4076 = vpop.f32.mrb[0].mxu0
        %v4077 = vadd.f32 0.0, %v4076
        %v4078 = vpop.f32.mrb[0].mxu0
        %v4079 = vpop.f32.mrb[0].mxu0
        %v4080 = vpop.f32.mrb[0].mxu0
        %4081 = vdwg.mxu0
        %4082 = vmatprep.subr.bf16.mxu0 0
        %4083 = vmatpush1.bf16.msra.mxu0 %v3489
        %4084 = vmatprep.subr.bf16.mxu0 0
        %4085 = vmatpush1.bf16.msra.mxu0 %v3490
        %4086 = vmatprep.subr.bf16.mxu0 0
        %4087 = vmatpush1.bf16.msra.mxu0 %v3491
        %4088 = vmatprep.subr.bf16.mxu0 0
        %4089 = vmatpush1.bf16.msra.mxu0 %v3492
        %4090 = vmatprep.subr.bf16.mxu0 0
        %4091 = vmatpush1.bf16.msra.mxu0 %v3493
        %4092 = vmatprep.subr.bf16.mxu0 0
        %4093 = vmatpush1.bf16.msra.mxu0 %v3494
        %4094 = vmatprep.subr.bf16.mxu0 0
        %4095 = vmatpush1.bf16.msra.mxu0 %v3495
        %4096 = vmatprep.subr.bf16.mxu0 0
        %4097 = vmatpush1.bf16.msra.mxu0 %v3496
        %4098 = vmatprep.subr.bf16.mxu0 0
        %4099 = vmatpush1.bf16.msra.mxu0 %v3497
        %4100 = vmatprep.subr.bf16.mxu0 0
        %4101 = vmatpush1.bf16.msra.mxu0 %v3498
        %4102 = vmatprep.subr.bf16.mxu0 0
        %4103 = vmatpush1.bf16.msra.mxu0 %v3499
        %4104 = vmatprep.subr.bf16.mxu0 0
        %4105 = vmatpush1.bf16.msra.mxu0 %v3500
        %4106 = vmatprep.subr.bf16.mxu0 0
        %4107 = vmatpush1.bf16.msra.mxu0 %v3501
        %4108 = vmatprep.subr.bf16.mxu0 0
        %4109 = vmatpush1.bf16.msra.mxu0 %v3502
        %4110 = vmatprep.subr.bf16.mxu0 0
        %4111 = vmatpush1.bf16.msra.mxu0 %v3503
        %4112 = vmatprep.subr.bf16.mxu0 0
        %4113 = vmatpush1.bf16.msra.mxu0 %v3504
        %4114 = vmatprep.mubr.bf16.mxu0 %v3799
        %4115 = vmatmul.mubr.bf16.gmra.mrb[0].mxu0 %v3792
        %v4116 = vpop.f32.mrb[0].mxu0
        %v4117 = vadd.f32 0.0, %v4116
        %v4118 = vpop.f32.mrb[0].mxu0
        %v4119 = vpop.f32.mrb[0].mxu0
        %v4120 = vpop.f32.mrb[0].mxu0
        %4121 = vdwg.mxu0
        %4122 = vmatprep.subr.bf16.mxu0 0
        %4123 = vmatpush1.bf16.msra.mxu0 %v3505
        %4124 = vmatprep.subr.bf16.mxu0 0
        %4125 = vmatpush1.bf16.msra.mxu0 %v3506
        %4126 = vmatprep.subr.bf16.mxu0 0
        %4127 = vmatpush1.bf16.msra.mxu0 %v3507
        %4128 = vmatprep.subr.bf16.mxu0 0
        %4129 = vmatpush1.bf16.msra.mxu0 %v3508
        %4130 = vmatprep.subr.bf16.mxu0 0
        %4131 = vmatpush1.bf16.msra.mxu0 %v3509
        %4132 = vmatprep.subr.bf16.mxu0 0
        %4133 = vmatpush1.bf16.msra.mxu0 %v3510
        %4134 = vmatprep.subr.bf16.mxu0 0
        %4135 = vmatpush1.bf16.msra.mxu0 %v3511
        %4136 = vmatprep.subr.bf16.mxu0 0
        %4137 = vmatpush1.bf16.msra.mxu0 %v3512
        %4138 = vmatprep.subr.bf16.mxu0 0
        %4139 = vmatpush1.bf16.msra.mxu0 %v3513
        %4140 = vmatprep.subr.bf16.mxu0 0
        %4141 = vmatpush1.bf16.msra.mxu0 %v3514
        %4142 = vmatprep.subr.bf16.mxu0 0
        %4143 = vmatpush1.bf16.msra.mxu0 %v3515
        %4144 = vmatprep.subr.bf16.mxu0 0
        %4145 = vmatpush1.bf16.msra.mxu0 %v3516
        %4146 = vmatprep.subr.bf16.mxu0 0
        %4147 = vmatpush1.bf16.msra.mxu0 %v3517
        %4148 = vmatprep.subr.bf16.mxu0 0
        %4149 = vmatpush1.bf16.msra.mxu0 %v3518
        %4150 = vmatprep.subr.bf16.mxu0 0
        %4151 = vmatpush1.bf16.msra.mxu0 %v3519
        %4152 = vmatprep.subr.bf16.mxu0 0
        %4153 = vmatpush1.bf16.msra.mxu0 %v3520
        %4154 = vmatprep.mubr.bf16.mxu0 %v3799
        %4155 = vmatmul.mubr.bf16.gmra.mrb[0].mxu0 %v3792
        %v4156 = vpop.f32.mrb[0].mxu0
        %v4157 = vadd.f32 0.0, %v4156
        %v4158 = vpop.f32.mrb[0].mxu0
        %v4159 = vpop.f32.mrb[0].mxu0
        %v4160 = vpop.f32.mrb[0].mxu0
        %4161 = vdwg.mxu0
        %4162 = vmatprep.subr.bf16.mxu0 0
        %4163 = vmatpush1.bf16.msra.mxu0 %v3521
        %4164 = vmatprep.subr.bf16.mxu0 0
        %4165 = vmatpush1.bf16.msra.mxu0 %v3522
        %4166 = vmatprep.subr.bf16.mxu0 0
        %4167 = vmatpush1.bf16.msra.mxu0 %v3523
        %4168 = vmatprep.subr.bf16.mxu0 0
        %4169 = vmatpush1.bf16.msra.mxu0 %v3524
        %4170 = vmatprep.subr.bf16.mxu0 0
        %4171 = vmatpush1.bf16.msra.mxu0 %v3525
        %4172 = vmatprep.subr.bf16.mxu0 0
        %4173 = vmatpush1.bf16.msra.mxu0 %v3526
        %4174 = vmatprep.subr.bf16.mxu0 0
        %4175 = vmatpush1.bf16.msra.mxu0 %v3527
        %4176 = vmatprep.subr.bf16.mxu0 0
        %4177 = vmatpush1.bf16.msra.mxu0 %v3528
        %4178 = vmatprep.subr.bf16.mxu0 0
        %4179 = vmatpush1.bf16.msra.mxu0 %v3529
        %4180 = vmatprep.subr.bf16.mxu0 0
        %4181 = vmatpush1.bf16.msra.mxu0 %v3530
        %4182 = vmatprep.subr.bf16.mxu0 0
        %4183 = vmatpush1.bf16.msra.mxu0 %v3531
        %4184 = vmatprep.subr.bf16.mxu0 0
        %4185 = vmatpush1.bf16.msra.mxu0 %v3532
        %4186 = vmatprep.subr.bf16.mxu0 0
        %4187 = vmatpush1.bf16.msra.mxu0 %v3533
        %4188 = vmatprep.subr.bf16.mxu0 0
        %4189 = vmatpush1.bf16.msra.mxu0 %v3534
        %4190 = vmatprep.subr.bf16.mxu0 0
        %4191 = vmatpush1.bf16.msra.mxu0 %v3535
        %4192 = vmatprep.subr.bf16.mxu0 0
        %4193 = vmatpush1.bf16.msra.mxu0 %v3536
        %4194 = vmatprep.mubr.bf16.mxu0 %v3799
        %4195 = vmatmul.mubr.bf16.gmra.mrb[0].mxu0 %v3792
        %v4196 = vpop.f32.mrb[0].mxu0
        %v4197 = vadd.f32 0.0, %v4196
        %v4198 = vpop.f32.mrb[0].mxu0
        %v4199 = vpop.f32.mrb[0].mxu0
        %v4200 = vpop.f32.mrb[0].mxu0
        %4201 = vdwg.mxu0
        %4202 = vmatprep.subr.bf16.mxu0 0
        %4203 = vmatpush1.bf16.msra.mxu0 %v3537
        %4204 = vmatprep.subr.bf16.mxu0 0
        %4205 = vmatpush1.bf16.msra.mxu0 %v3538
        %4206 = vmatprep.subr.bf16.mxu0 0
        %4207 = vmatpush1.bf16.msra.mxu0 %v3539
        %4208 = vmatprep.subr.bf16.mxu0 0
        %4209 = vmatpush1.bf16.msra.mxu0 %v3540
        %4210 = vmatprep.subr.bf16.mxu0 0
        %4211 = vmatpush1.bf16.msra.mxu0 %v3541
        %4212 = vmatprep.subr.bf16.mxu0 0
        %4213 = vmatpush1.bf16.msra.mxu0 %v3542
        %4214 = vmatprep.subr.bf16.mxu0 0
        %4215 = vmatpush1.bf16.msra.mxu0 %v3543
        %4216 = vmatprep.subr.bf16.mxu0 0
        %4217 = vmatpush1.bf16.msra.mxu0 %v3544
        %4218 = vmatprep.subr.bf16.mxu0 0
        %4219 = vmatpush1.bf16.msra.mxu0 %v3545
        %4220 = vmatprep.subr.bf16.mxu0 0
        %4221 = vmatpush1.bf16.msra.mxu0 %v3546
        %4222 = vmatprep.subr.bf16.mxu0 0
        %4223 = vmatpush1.bf16.msra.mxu0 %v3547
        %4224 = vmatprep.subr.bf16.mxu0 0
        %4225 = vmatpush1.bf16.msra.mxu0 %v3548
        %4226 = vmatprep.subr.bf16.mxu0 0
        %4227 = vmatpush1.bf16.msra.mxu0 %v3549
        %4228 = vmatprep.subr.bf16.mxu0 0
        %4229 = vmatpush1.bf16.msra.mxu0 %v3550
        %4230 = vmatprep.subr.bf16.mxu0 0
        %4231 = vmatpush1.bf16.msra.mxu0 %v3551
        %4232 = vmatprep.subr.bf16.mxu0 0
        %4233 = vmatpush1.bf16.msra.mxu0 %v3552
        %4234 = vmatprep.mubr.bf16.mxu0 %v3799
        %4235 = vmatmul.mubr.bf16.gmra.mrb[0].mxu0 %v3792
        %v4236 = vpop.f32.mrb[0].mxu0
        %v4237 = vadd.f32 0.0, %v4236
        %v4238 = vpop.f32.mrb[0].mxu0
        %v4239 = vpop.f32.mrb[0].mxu0
        %v4240 = vpop.f32.mrb[0].mxu0
        %4241 = vdwg.mxu0
        %4242 = vmatprep.subr.bf16.mxu0 0
        %4243 = vmatpush1.bf16.msra.mxu0 %v3553
        %4244 = vmatprep.subr.bf16.mxu0 0
        %4245 = vmatpush1.bf16.msra.mxu0 %v3554
        %4246 = vmatprep.subr.bf16.mxu0 0
        %4247 = vmatpush1.bf16.msra.mxu0 %v3555
        %4248 = vmatprep.subr.bf16.mxu0 0
        %4249 = vmatpush1.bf16.msra.mxu0 %v3556
        %4250 = vmatprep.subr.bf16.mxu0 0
        %4251 = vmatpush1.bf16.msra.mxu0 %v3557
        %4252 = vmatprep.subr.bf16.mxu0 0
        %4253 = vmatpush1.bf16.msra.mxu0 %v3558
        %4254 = vmatprep.subr.bf16.mxu0 0
        %4255 = vmatpush1.bf16.msra.mxu0 %v3559
        %4256 = vmatprep.subr.bf16.mxu0 0
        %4257 = vmatpush1.bf16.msra.mxu0 %v3560
        %4258 = vmatprep.subr.bf16.mxu0 0
        %4259 = vmatpush1.bf16.msra.mxu0 %v3561
        %4260 = vmatprep.subr.bf16.mxu0 0
        %4261 = vmatpush1.bf16.msra.mxu0 %v3562
        %4262 = vmatprep.subr.bf16.mxu0 0
        %4263 = vmatpush1.bf16.msra.mxu0 %v3563
        %4264 = vmatprep.subr.bf16.mxu0 0
        %4265 = vmatpush1.bf16.msra.mxu0 %v3564
        %4266 = vmatprep.subr.bf16.mxu0 0
        %4267 = vmatpush1.bf16.msra.mxu0 %v3565
        %4268 = vmatprep.subr.bf16.mxu0 0
        %4269 = vmatpush1.bf16.msra.mxu0 %v3566
        %4270 = vmatprep.subr.bf16.mxu0 0
        %4271 = vmatpush1.bf16.msra.mxu0 %v3567
        %4272 = vmatprep.subr.bf16.mxu0 0
        %4273 = vmatpush1.bf16.msra.mxu0 %v3568
        %4274 = vmatprep.mubr.bf16.mxu0 %v3799
        %4275 = vmatmul.mubr.bf16.gmra.mrb[0].mxu0 %v3792
        %v4276 = vpop.f32.mrb[0].mxu0
        %v4277 = vadd.f32 0.0, %v4276
        %v4278 = vpop.f32.mrb[0].mxu0
        %v4279 = vpop.f32.mrb[0].mxu0
        %v4280 = vpop.f32.mrb[0].mxu0
        %4281 = vdwg.mxu0
        %4282 = vmatprep.subr.bf16.mxu0 0
        %4283 = vmatpush1.bf16.msra.mxu0 %v3569
        %4284 = vmatprep.subr.bf16.mxu0 0
        %4285 = vmatpush1.bf16.msra.mxu0 %v3570
        %4286 = vmatprep.subr.bf16.mxu0 0
        %4287 = vmatpush1.bf16.msra.mxu0 %v3571
        %4288 = vmatprep.subr.bf16.mxu0 0
        %4289 = vmatpush1.bf16.msra.mxu0 %v3572
        %4290 = vmatprep.subr.bf16.mxu0 0
        %4291 = vmatpush1.bf16.msra.mxu0 %v3573
        %4292 = vmatprep.subr.bf16.mxu0 0
        %4293 = vmatpush1.bf16.msra.mxu0 %v3574
        %4294 = vmatprep.subr.bf16.mxu0 0
        %4295 = vmatpush1.bf16.msra.mxu0 %v3575
        %4296 = vmatprep.subr.bf16.mxu0 0
        %4297 = vmatpush1.bf16.msra.mxu0 %v3576
        %4298 = vmatprep.subr.bf16.mxu0 0
        %4299 = vmatpush1.bf16.msra.mxu0 %v3577
        %4300 = vmatprep.subr.bf16.mxu0 0
        %4301 = vmatpush1.bf16.msra.mxu0 %v3578
        %4302 = vmatprep.subr.bf16.mxu0 0
        %4303 = vmatpush1.bf16.msra.mxu0 %v3579
        %4304 = vmatprep.subr.bf16.mxu0 0
        %4305 = vmatpush1.bf16.msra.mxu0 %v3580
        %4306 = vmatprep.subr.bf16.mxu0 0
        %4307 = vmatpush1.bf16.msra.mxu0 %v3581
        %4308 = vmatprep.subr.bf16.mxu0 0
        %4309 = vmatpush1.bf16.msra.mxu0 %v3582
        %4310 = vmatprep.subr.bf16.mxu0 0
        %4311 = vmatpush1.bf16.msra.mxu0 %v3583
        %4312 = vmatprep.subr.bf16.mxu0 0
        %4313 = vmatpush1.bf16.msra.mxu0 %v3584
        %4314 = vmatprep.mubr.bf16.mxu0 %v3799
        %4315 = vmatmul.mubr.bf16.gmra.mrb[0].mxu0 %v3792
        %v4316 = vpop.f32.mrb[0].mxu0
        %v4317 = vadd.f32 0.0, %v4316
        %v4318 = vpop.f32.mrb[0].mxu0
        %v4319 = vpop.f32.mrb[0].mxu0
        %v4320 = vpop.f32.mrb[0].mxu0
        %4321 = vdwg.mxu0
        %4322 = vmatprep.subr.bf16.mxu0 0
        %4323 = vmatpush1.bf16.msra.mxu0 %v3585
        %4324 = vmatprep.subr.bf16.mxu0 0
        %4325 = vmatpush1.bf16.msra.mxu0 %v3586
        %4326 = vmatprep.subr.bf16.mxu0 0
        %4327 = vmatpush1.bf16.msra.mxu0 %v3587
        %4328 = vmatprep.subr.bf16.mxu0 0
        %4329 = vmatpush1.bf16.msra.mxu0 %v3588
        %4330 = vmatprep.subr.bf16.mxu0 0
        %4331 = vmatpush1.bf16.msra.mxu0 %v3589
        %4332 = vmatprep.subr.bf16.mxu0 0
        %4333 = vmatpush1.bf16.msra.mxu0 %v3590
        %4334 = vmatprep.subr.bf16.mxu0 0
        %4335 = vmatpush1.bf16.msra.mxu0 %v3591
        %4336 = vmatprep.subr.bf16.mxu0 0
        %4337 = vmatpush1.bf16.msra.mxu0 %v3592
        %4338 = vmatprep.subr.bf16.mxu0 0
        %4339 = vmatpush1.bf16.msra.mxu0 %v3593
        %4340 = vmatprep.subr.bf16.mxu0 0
        %4341 = vmatpush1.bf16.msra.mxu0 %v3594
        %4342 = vmatprep.subr.bf16.mxu0 0
        %4343 = vmatpush1.bf16.msra.mxu0 %v3595
        %4344 = vmatprep.subr.bf16.mxu0 0
        %4345 = vmatpush1.bf16.msra.mxu0 %v3596
        %4346 = vmatprep.subr.bf16.mxu0 0
        %4347 = vmatpush1.bf16.msra.mxu0 %v3597
        %4348 = vmatprep.subr.bf16.mxu0 0
        %4349 = vmatpush1.bf16.msra.mxu0 %v3598
        %4350 = vmatprep.subr.bf16.mxu0 0
        %4351 = vmatpush1.bf16.msra.mxu0 %v3599
        %4352 = vmatprep.subr.bf16.mxu0 0
        %4353 = vmatpush1.bf16.msra.mxu0 %v3600
        %4354 = vmatprep.mubr.bf16.mxu0 %v3799
        %4355 = vmatmul.mubr.bf16.gmra.mrb[0].mxu0 %v3792
        %v4356 = vpop.f32.mrb[0].mxu0
        %v4357 = vadd.f32 0.0, %v4356
        %v4358 = vpop.f32.mrb[0].mxu0
        %v4359 = vpop.f32.mrb[0].mxu0
        %v4360 = vpop.f32.mrb[0].mxu0
        %4361 = vdwg.mxu0
        %4362 = vmatprep.subr.bf16.mxu0 0
        %4363 = vmatpush1.bf16.msra.mxu0 %v3601
        %4364 = vmatprep.subr.bf16.mxu0 0
        %4365 = vmatpush1.bf16.msra.mxu0 %v3602
        %4366 = vmatprep.subr.bf16.mxu0 0
        %4367 = vmatpush1.bf16.msra.mxu0 %v3603
        %4368 = vmatprep.subr.bf16.mxu0 0
        %4369 = vmatpush1.bf16.msra.mxu0 %v3604
        %4370 = vmatprep.subr.bf16.mxu0 0
        %4371 = vmatpush1.bf16.msra.mxu0 %v3605
        %4372 = vmatprep.subr.bf16.mxu0 0
        %4373 = vmatpush1.bf16.msra.mxu0 %v3606
        %4374 = vmatprep.subr.bf16.mxu0 0
        %4375 = vmatpush1.bf16.msra.mxu0 %v3607
        %4376 = vmatprep.subr.bf16.mxu0 0
        %4377 = vmatpush1.bf16.msra.mxu0 %v3608
        %4378 = vmatprep.subr.bf16.mxu0 0
        %4379 = vmatpush1.bf16.msra.mxu0 %v3609
        %4380 = vmatprep.subr.bf16.mxu0 0
        %4381 = vmatpush1.bf16.msra.mxu0 %v3610
        %4382 = vmatprep.subr.bf16.mxu0 0
        %4383 = vmatpush1.bf16.msra.mxu0 %v3611
        %4384 = vmatprep.subr.bf16.mxu0 0
        %4385 = vmatpush1.bf16.msra.mxu0 %v3612
        %4386 = vmatprep.subr.bf16.mxu0 0
        %4387 = vmatpush1.bf16.msra.mxu0 %v3613
        %4388 = vmatprep.subr.bf16.mxu0 0
        %4389 = vmatpush1.bf16.msra.mxu0 %v3614
        %4390 = vmatprep.subr.bf16.mxu0 0
        %4391 = vmatpush1.bf16.msra.mxu0 %v3615
        %4392 = vmatprep.subr.bf16.mxu0 0
        %4393 = vmatpush1.bf16.msra.mxu0 %v3616
        %4394 = vmatprep.mubr.bf16.mxu0 %v3799
        %4395 = vmatmul.mubr.bf16.gmra.mrb[0].mxu0 %v3792
        %v4396 = vpop.f32.mrb[0].mxu0
        %v4397 = vadd.f32 0.0, %v4396
        %v4398 = vpop.f32.mrb[0].mxu0
        %v4399 = vpop.f32.mrb[0].mxu0
        %v4400 = vpop.f32.mrb[0].mxu0
        %4401 = vdwg.mxu0
        %4402 = vmatprep.subr.bf16.mxu0 0
        %4403 = vmatpush1.bf16.msra.mxu0 %v3617
        %4404 = vmatprep.subr.bf16.mxu0 0
        %4405 = vmatpush1.bf16.msra.mxu0 %v3618
        %4406 = vmatprep.subr.bf16.mxu0 0
        %4407 = vmatpush1.bf16.msra.mxu0 %v3619
        %4408 = vmatprep.subr.bf16.mxu0 0
        %4409 = vmatpush1.bf16.msra.mxu0 %v3620
        %4410 = vmatprep.subr.bf16.mxu0 0
        %4411 = vmatpush1.bf16.msra.mxu0 %v3621
        %4412 = vmatprep.subr.bf16.mxu0 0
        %4413 = vmatpush1.bf16.msra.mxu0 %v3622
        %4414 = vmatprep.subr.bf16.mxu0 0
        %4415 = vmatpush1.bf16.msra.mxu0 %v3623
        %4416 = vmatprep.subr.bf16.mxu0 0
        %4417 = vmatpush1.bf16.msra.mxu0 %v3624
        %4418 = vmatprep.subr.bf16.mxu0 0
        %4419 = vmatpush1.bf16.msra.mxu0 %v3625
        %4420 = vmatprep.subr.bf16.mxu0 0
        %4421 = vmatpush1.bf16.msra.mxu0 %v3626
        %4422 = vmatprep.subr.bf16.mxu0 0
        %4423 = vmatpush1.bf16.msra.mxu0 %v3627
        %4424 = vmatprep.subr.bf16.mxu0 0
        %4425 = vmatpush1.bf16.msra.mxu0 %v3628
        %4426 = vmatprep.subr.bf16.mxu0 0
        %4427 = vmatpush1.bf16.msra.mxu0 %v3629
        %4428 = vmatprep.subr.bf16.mxu0 0
        %4429 = vmatpush1.bf16.msra.mxu0 %v3630
        %4430 = vmatprep.subr.bf16.mxu0 0
        %4431 = vmatpush1.bf16.msra.mxu0 %v3631
        %4432 = vmatprep.subr.bf16.mxu0 0
        %4433 = vmatpush1.bf16.msra.mxu0 %v3632
        %4434 = vmatprep.mubr.bf16.mxu0 %v3799
        %4435 = vmatmul.mubr.bf16.gmra.mrb[0].mxu0 %v3792
        %v4436 = vpop.f32.mrb[0].mxu0
        %v4437 = vadd.f32 0.0, %v4436
        %v4438 = vpop.f32.mrb[0].mxu0
        %v4439 = vpop.f32.mrb[0].mxu0
        %v4440 = vpop.f32.mrb[0].mxu0
        %4441 = vdwg.mxu0
        %4442 = vmatprep.subr.bf16.mxu0 0
        %4443 = vmatpush1.bf16.msra.mxu0 %v3633
        %4444 = vmatprep.subr.bf16.mxu0 0
        %4445 = vmatpush1.bf16.msra.mxu0 %v3634
        %4446 = vmatprep.subr.bf16.mxu0 0
        %4447 = vmatpush1.bf16.msra.mxu0 %v3635
        %4448 = vmatprep.subr.bf16.mxu0 0
        %4449 = vmatpush1.bf16.msra.mxu0 %v3636
        %4450 = vmatprep.subr.bf16.mxu0 0
        %4451 = vmatpush1.bf16.msra.mxu0 %v3637
        %4452 = vmatprep.subr.bf16.mxu0 0
        %4453 = vmatpush1.bf16.msra.mxu0 %v3638
        %4454 = vmatprep.subr.bf16.mxu0 0
        %4455 = vmatpush1.bf16.msra.mxu0 %v3639
        %4456 = vmatprep.subr.bf16.mxu0 0
        %4457 = vmatpush1.bf16.msra.mxu0 %v3640
        %4458 = vmatprep.subr.bf16.mxu0 0
        %4459 = vmatpush1.bf16.msra.mxu0 %v3641
        %4460 = vmatprep.subr.bf16.mxu0 0
        %4461 = vmatpush1.bf16.msra.mxu0 %v3642
        %4462 = vmatprep.subr.bf16.mxu0 0
        %4463 = vmatpush1.bf16.msra.mxu0 %v3643
        %4464 = vmatprep.subr.bf16.mxu0 0
        %4465 = vmatpush1.bf16.msra.mxu0 %v3644
        %4466 = vmatprep.subr.bf16.mxu0 0
        %4467 = vmatpush1.bf16.msra.mxu0 %v3645
        %4468 = vmatprep.subr.bf16.mxu0 0
        %4469 = vmatpush1.bf16.msra.mxu0 %v3646
        %4470 = vmatprep.subr.bf16.mxu0 0
        %4471 = vmatpush1.bf16.msra.mxu0 %v3647
        %4472 = vmatprep.subr.bf16.mxu0 0
        %4473 = vmatpush1.bf16.msra.mxu0 %v3648
        %4474 = vmatprep.mubr.bf16.mxu0 %v3799
        %4475 = vmatmul.mubr.bf16.gmra.mrb[0].mxu0 %v3792
        %v4476 = vpop.f32.mrb[0].mxu0
        %v4477 = vadd.f32 0.0, %v4476
        %v4478 = vpop.f32.mrb[0].mxu0
        %v4479 = vpop.f32.mrb[0].mxu0
        %v4480 = vpop.f32.mrb[0].mxu0
        %4481 = vdwg.mxu0
        %4482 = vmatprep.subr.bf16.mxu0 0
        %4483 = vmatpush1.bf16.msra.mxu0 %v3649
        %4484 = vmatprep.subr.bf16.mxu0 0
        %4485 = vmatpush1.bf16.msra.mxu0 %v3650
        %4486 = vmatprep.subr.bf16.mxu0 0
        %4487 = vmatpush1.bf16.msra.mxu0 %v3651
        %4488 = vmatprep.subr.bf16.mxu0 0
        %4489 = vmatpush1.bf16.msra.mxu0 %v3652
        %4490 = vmatprep.subr.bf16.mxu0 0
        %4491 = vmatpush1.bf16.msra.mxu0 %v3653
        %4492 = vmatprep.subr.bf16.mxu0 0
        %4493 = vmatpush1.bf16.msra.mxu0 %v3654
        %4494 = vmatprep.subr.bf16.mxu0 0
        %4495 = vmatpush1.bf16.msra.mxu0 %v3655
        %4496 = vmatprep.subr.bf16.mxu0 0
        %4497 = vmatpush1.bf16.msra.mxu0 %v3656
        %4498 = vmatprep.subr.bf16.mxu0 0
        %4499 = vmatpush1.bf16.msra.mxu0 %v3657
        %4500 = vmatprep.subr.bf16.mxu0 0
        %4501 = vmatpush1.bf16.msra.mxu0 %v3658
        %4502 = vmatprep.subr.bf16.mxu0 0
        %4503 = vmatpush1.bf16.msra.mxu0 %v3659
        %4504 = vmatprep.subr.bf16.mxu0 0
        %4505 = vmatpush1.bf16.msra.mxu0 %v3660
        %4506 = vmatprep.subr.bf16.mxu0 0
        %4507 = vmatpush1.bf16.msra.mxu0 %v3661
        %4508 = vmatprep.subr.bf16.mxu0 0
        %4509 = vmatpush1.bf16.msra.mxu0 %v3662
        %4510 = vmatprep.subr.bf16.mxu0 0
        %4511 = vmatpush1.bf16.msra.mxu0 %v3663
        %4512 = vmatprep.subr.bf16.mxu0 0
        %4513 = vmatpush1.bf16.msra.mxu0 %v3664
        %4514 = vmatprep.mubr.bf16.mxu0 %v3799
        %4515 = vmatmul.mubr.bf16.gmra.mrb[0].mxu0 %v3792
        %v4516 = vpop.f32.mrb[0].mxu0
        %v4517 = vadd.f32 0.0, %v4516
        %v4518 = vpop.f32.mrb[0].mxu0
        %v4519 = vpop.f32.mrb[0].mxu0
        %v4520 = vpop.f32.mrb[0].mxu0
        %4521 = vdwg.mxu0
        %4522 = vmatprep.subr.bf16.mxu0 0
        %4523 = vmatpush1.bf16.msra.mxu0 %v3665
        %4524 = vmatprep.subr.bf16.mxu0 0
        %4525 = vmatpush1.bf16.msra.mxu0 %v3666
        %4526 = vmatprep.subr.bf16.mxu0 0
        %4527 = vmatpush1.bf16.msra.mxu0 %v3667
        %4528 = vmatprep.subr.bf16.mxu0 0
        %4529 = vmatpush1.bf16.msra.mxu0 %v3668
        %4530 = vmatprep.subr.bf16.mxu0 0
        %4531 = vmatpush1.bf16.msra.mxu0 %v3669
        %4532 = vmatprep.subr.bf16.mxu0 0
        %4533 = vmatpush1.bf16.msra.mxu0 %v3670
        %4534 = vmatprep.subr.bf16.mxu0 0
        %4535 = vmatpush1.bf16.msra.mxu0 %v3671
        %4536 = vmatprep.subr.bf16.mxu0 0
        %4537 = vmatpush1.bf16.msra.mxu0 %v3672
        %4538 = vmatprep.subr.bf16.mxu0 0
        %4539 = vmatpush1.bf16.msra.mxu0 %v3673
        %4540 = vmatprep.subr.bf16.mxu0 0
        %4541 = vmatpush1.bf16.msra.mxu0 %v3674
        %4542 = vmatprep.subr.bf16.mxu0 0
        %4543 = vmatpush1.bf16.msra.mxu0 %v3675
        %4544 = vmatprep.subr.bf16.mxu0 0
        %4545 = vmatpush1.bf16.msra.mxu0 %v3676
        %4546 = vmatprep.subr.bf16.mxu0 0
        %4547 = vmatpush1.bf16.msra.mxu0 %v3677
        %4548 = vmatprep.subr.bf16.mxu0 0
        %4549 = vmatpush1.bf16.msra.mxu0 %v3678
        %4550 = vmatprep.subr.bf16.mxu0 0
        %4551 = vmatpush1.bf16.msra.mxu0 %v3679
        %4552 = vmatprep.subr.bf16.mxu0 0
        %4553 = vmatpush1.bf16.msra.mxu0 %v3680
        %4554 = vmatprep.mubr.bf16.mxu0 %v3799
        %4555 = vmatmul.mubr.bf16.gmra.mrb[0].mxu0 %v3792
        %v4556 = vpop.f32.mrb[0].mxu0
        %v4557 = vadd.f32 0.0, %v4556
        %v4558 = vpop.f32.mrb[0].mxu0
        %v4559 = vpop.f32.mrb[0].mxu0
        %v4560 = vpop.f32.mrb[0].mxu0
        %4561 = vdwg.mxu0
        %4562 = vmatprep.subr.bf16.mxu0 0
        %4563 = vmatpush1.bf16.msra.mxu0 %v3681
        %4564 = vmatprep.subr.bf16.mxu0 0
        %4565 = vmatpush1.bf16.msra.mxu0 %v3682
        %4566 = vmatprep.subr.bf16.mxu0 0
        %4567 = vmatpush1.bf16.msra.mxu0 %v3683
        %4568 = vmatprep.subr.bf16.mxu0 0
        %4569 = vmatpush1.bf16.msra.mxu0 %v3684
        %4570 = vmatprep.subr.bf16.mxu0 0
        %4571 = vmatpush1.bf16.msra.mxu0 %v3685
        %4572 = vmatprep.subr.bf16.mxu0 0
        %4573 = vmatpush1.bf16.msra.mxu0 %v3686
        %4574 = vmatprep.subr.bf16.mxu0 0
        %4575 = vmatpush1.bf16.msra.mxu0 %v3687
        %4576 = vmatprep.subr.bf16.mxu0 0
        %4577 = vmatpush1.bf16.msra.mxu0 %v3688
        %4578 = vmatprep.subr.bf16.mxu0 0
        %4579 = vmatpush1.bf16.msra.mxu0 %v3689
        %4580 = vmatprep.subr.bf16.mxu0 0
        %4581 = vmatpush1.bf16.msra.mxu0 %v3690
        %4582 = vmatprep.subr.bf16.mxu0 0
        %4583 = vmatpush1.bf16.msra.mxu0 %v3691
        %4584 = vmatprep.subr.bf16.mxu0 0
        %4585 = vmatpush1.bf16.msra.mxu0 %v3692
        %4586 = vmatprep.subr.bf16.mxu0 0
        %4587 = vmatpush1.bf16.msra.mxu0 %v3693
        %4588 = vmatprep.subr.bf16.mxu0 0
        %4589 = vmatpush1.bf16.msra.mxu0 %v3694
        %4590 = vmatprep.subr.bf16.mxu0 0
        %4591 = vmatpush1.bf16.msra.mxu0 %v3695
        %4592 = vmatprep.subr.bf16.mxu0 0
        %4593 = vmatpush1.bf16.msra.mxu0 %v3696
        %4594 = vmatprep.mubr.bf16.mxu0 %v3799
        %4595 = vmatmul.mubr.bf16.gmra.mrb[0].mxu0 %v3792
        %v4596 = vpop.f32.mrb[0].mxu0
        %v4597 = vadd.f32 0.0, %v4596
        %v4598 = vpop.f32.mrb[0].mxu0
        %v4599 = vpop.f32.mrb[0].mxu0
        %v4600 = vpop.f32.mrb[0].mxu0
        %4601 = vdwg.mxu0
        %4602 = vmatprep.subr.bf16.mxu0 0
        %4603 = vmatpush1.bf16.msra.mxu0 %v3697
        %4604 = vmatprep.subr.bf16.mxu0 0
        %4605 = vmatpush1.bf16.msra.mxu0 %v3698
        %4606 = vmatprep.subr.bf16.mxu0 0
        %4607 = vmatpush1.bf16.msra.mxu0 %v3699
        %4608 = vmatprep.subr.bf16.mxu0 0
        %4609 = vmatpush1.bf16.msra.mxu0 %v3700
        %4610 = vmatprep.subr.bf16.mxu0 0
        %4611 = vmatpush1.bf16.msra.mxu0 %v3701
        %4612 = vmatprep.subr.bf16.mxu0 0
        %4613 = vmatpush1.bf16.msra.mxu0 %v3702
        %4614 = vmatprep.subr.bf16.mxu0 0
        %4615 = vmatpush1.bf16.msra.mxu0 %v3703
        %4616 = vmatprep.subr.bf16.mxu0 0
        %4617 = vmatpush1.bf16.msra.mxu0 %v3704
        %4618 = vmatprep.subr.bf16.mxu0 0
        %4619 = vmatpush1.bf16.msra.mxu0 %v3705
        %4620 = vmatprep.subr.bf16.mxu0 0
        %4621 = vmatpush1.bf16.msra.mxu0 %v3706
        %4622 = vmatprep.subr.bf16.mxu0 0
        %4623 = vmatpush1.bf16.msra.mxu0 %v3707
        %4624 = vmatprep.subr.bf16.mxu0 0
        %4625 = vmatpush1.bf16.msra.mxu0 %v3708
        %4626 = vmatprep.subr.bf16.mxu0 0
        %4627 = vmatpush1.bf16.msra.mxu0 %v3709
        %4628 = vmatprep.subr.bf16.mxu0 0
        %4629 = vmatpush1.bf16.msra.mxu0 %v3710
        %4630 = vmatprep.subr.bf16.mxu0 0
        %4631 = vmatpush1.bf16.msra.mxu0 %v3711
        %4632 = vmatprep.subr.bf16.mxu0 0
        %4633 = vmatpush1.bf16.msra.mxu0 %v3712
        %4634 = vmatprep.mubr.bf16.mxu0 %v3799
        %4635 = vmatmul.mubr.bf16.gmra.mrb[0].mxu0 %v3792
        %v4636 = vpop.f32.mrb[0].mxu0
        %v4637 = vadd.f32 0.0, %v4636
        %v4638 = vpop.f32.mrb[0].mxu0
        %v4639 = vpop.f32.mrb[0].mxu0
        %v4640 = vpop.f32.mrb[0].mxu0
        %4641 = vdwg.mxu0
        %4642 = vmatprep.subr.bf16.mxu0 0
        %4643 = vmatpush1.bf16.msra.mxu0 %v3713
        %4644 = vmatprep.subr.bf16.mxu0 0
        %4645 = vmatpush1.bf16.msra.mxu0 %v3714
        %4646 = vmatprep.subr.bf16.mxu0 0
        %4647 = vmatpush1.bf16.msra.mxu0 %v3715
        %4648 = vmatprep.subr.bf16.mxu0 0
        %4649 = vmatpush1.bf16.msra.mxu0 %v3716
        %4650 = vmatprep.subr.bf16.mxu0 0
        %4651 = vmatpush1.bf16.msra.mxu0 %v3717
        %4652 = vmatprep.subr.bf16.mxu0 0
        %4653 = vmatpush1.bf16.msra.mxu0 %v3718
        %4654 = vmatprep.subr.bf16.mxu0 0
        %4655 = vmatpush1.bf16.msra.mxu0 %v3719
        %4656 = vmatprep.subr.bf16.mxu0 0
        %4657 = vmatpush1.bf16.msra.mxu0 %v3720
        %4658 = vmatprep.subr.bf16.mxu0 0
        %4659 = vmatpush1.bf16.msra.mxu0 %v3721
        %4660 = vmatprep.subr.bf16.mxu0 0
        %4661 = vmatpush1.bf16.msra.mxu0 %v3722
        %4662 = vmatprep.subr.bf16.mxu0 0
        %4663 = vmatpush1.bf16.msra.mxu0 %v3723
        %4664 = vmatprep.subr.bf16.mxu0 0
        %4665 = vmatpush1.bf16.msra.mxu0 %v3724
        %4666 = vmatprep.subr.bf16.mxu0 0
        %4667 = vmatpush1.bf16.msra.mxu0 %v3725
        %4668 = vmatprep.subr.bf16.mxu0 0
        %4669 = vmatpush1.bf16.msra.mxu0 %v3726
        %4670 = vmatprep.subr.bf16.mxu0 0
        %4671 = vmatpush1.bf16.msra.mxu0 %v3727
        %4672 = vmatprep.subr.bf16.mxu0 0
        %4673 = vmatpush1.bf16.msra.mxu0 %v3728
        %4674 = vmatprep.mubr.bf16.mxu0 %v3799
        %4675 = vmatmul.mubr.bf16.gmra.mrb[0].mxu0 %v3792
        %v4676 = vpop.f32.mrb[0].mxu0
        %v4677 = vadd.f32 0.0, %v4676
        %v4678 = vpop.f32.mrb[0].mxu0
        %v4679 = vpop.f32.mrb[0].mxu0
        %v4680 = vpop.f32.mrb[0].mxu0
        %4681 = vdwg.mxu0
        %4682 = vmatprep.subr.bf16.mxu0 0
        %4683 = vmatpush1.bf16.msra.mxu0 %v3729
        %4684 = vmatprep.subr.bf16.mxu0 0
        %4685 = vmatpush1.bf16.msra.mxu0 %v3730
        %4686 = vmatprep.subr.bf16.mxu0 0
        %4687 = vmatpush1.bf16.msra.mxu0 %v3731
        %4688 = vmatprep.subr.bf16.mxu0 0
        %4689 = vmatpush1.bf16.msra.mxu0 %v3732
        %4690 = vmatprep.subr.bf16.mxu0 0
        %4691 = vmatpush1.bf16.msra.mxu0 %v3733
        %4692 = vmatprep.subr.bf16.mxu0 0
        %4693 = vmatpush1.bf16.msra.mxu0 %v3734
        %4694 = vmatprep.subr.bf16.mxu0 0
        %4695 = vmatpush1.bf16.msra.mxu0 %v3735
        %4696 = vmatprep.subr.bf16.mxu0 0
        %4697 = vmatpush1.bf16.msra.mxu0 %v3736
        %4698 = vmatprep.subr.bf16.mxu0 0
        %4699 = vmatpush1.bf16.msra.mxu0 %v3737
        %4700 = vmatprep.subr.bf16.mxu0 0
        %4701 = vmatpush1.bf16.msra.mxu0 %v3738
        %4702 = vmatprep.subr.bf16.mxu0 0
        %4703 = vmatpush1.bf16.msra.mxu0 %v3739
        %4704 = vmatprep.subr.bf16.mxu0 0
        %4705 = vmatpush1.bf16.msra.mxu0 %v3740
        %4706 = vmatprep.subr.bf16.mxu0 0
        %4707 = vmatpush1.bf16.msra.mxu0 %v3741
        %4708 = vmatprep.subr.bf16.mxu0 0
        %4709 = vmatpush1.bf16.msra.mxu0 %v3742
        %4710 = vmatprep.subr.bf16.mxu0 0
        %4711 = vmatpush1.bf16.msra.mxu0 %v3743
        %4712 = vmatprep.subr.bf16.mxu0 0
        %4713 = vmatpush1.bf16.msra.mxu0 %v3744
        %4714 = vmatprep.mubr.bf16.mxu0 %v3799
        %4715 = vmatmul.mubr.bf16.gmra.mrb[0].mxu0 %v3792
        %v4716 = vpop.f32.mrb[0].mxu0
        %v4717 = vadd.f32 0.0, %v4716
        %v4718 = vpop.f32.mrb[0].mxu0
        %v4719 = vpop.f32.mrb[0].mxu0
        %v4720 = vpop.f32.mrb[0].mxu0
        %4721 = vdwg.mxu0
        %4722 = vmatprep.subr.bf16.mxu0 0
        %4723 = vmatpush1.bf16.msra.mxu0 %v3745
        %4724 = vmatprep.subr.bf16.mxu0 0
        %4725 = vmatpush1.bf16.msra.mxu0 %v3746
        %4726 = vmatprep.subr.bf16.mxu0 0
        %4727 = vmatpush1.bf16.msra.mxu0 %v3747
        %4728 = vmatprep.subr.bf16.mxu0 0
        %4729 = vmatpush1.bf16.msra.mxu0 %v3748
        %4730 = vmatprep.subr.bf16.mxu0 0
        %4731 = vmatpush1.bf16.msra.mxu0 %v3749
        %4732 = vmatprep.subr.bf16.mxu0 0
        %4733 = vmatpush1.bf16.msra.mxu0 %v3750
        %4734 = vmatprep.subr.bf16.mxu0 0
        %4735 = vmatpush1.bf16.msra.mxu0 %v3751
        %4736 = vmatprep.subr.bf16.mxu0 0
        %4737 = vmatpush1.bf16.msra.mxu0 %v3752
        %4738 = vmatprep.subr.bf16.mxu0 0
        %4739 = vmatpush1.bf16.msra.mxu0 %v3753
        %4740 = vmatprep.subr.bf16.mxu0 0
        %4741 = vmatpush1.bf16.msra.mxu0 %v3754
        %4742 = vmatprep.subr.bf16.mxu0 0
        %4743 = vmatpush1.bf16.msra.mxu0 %v3755
        %4744 = vmatprep.subr.bf16.mxu0 0
        %4745 = vmatpush1.bf16.msra.mxu0 %v3756
        %4746 = vmatprep.subr.bf16.mxu0 0
        %4747 = vmatpush1.bf16.msra.mxu0 %v3757
        %4748 = vmatprep.subr.bf16.mxu0 0
        %4749 = vmatpush1.bf16.msra.mxu0 %v3758
        %4750 = vmatprep.subr.bf16.mxu0 0
        %4751 = vmatpush1.bf16.msra.mxu0 %v3759
        %4752 = vmatprep.subr.bf16.mxu0 0
        %4753 = vmatpush1.bf16.msra.mxu0 %v3760
        %4754 = vmatprep.mubr.bf16.mxu0 %v3799
        %4755 = vmatmul.mubr.bf16.gmra.mrb[0].mxu0 %v3792
        %v4756 = vpop.f32.mrb[0].mxu0
        %v4757 = vadd.f32 0.0, %v4756
        %v4758 = vpop.f32.mrb[0].mxu0
        %v4759 = vpop.f32.mrb[0].mxu0
        %v4760 = vpop.f32.mrb[0].mxu0
        %4761 = vdwg.mxu0
        %4762 = vmatprep.subr.bf16.mxu0 0
        %4763 = vmatpush1.bf16.msra.mxu0 %v3761
        %4764 = vmatprep.subr.bf16.mxu0 0
        %4765 = vmatpush1.bf16.msra.mxu0 %v3762
        %4766 = vmatprep.subr.bf16.mxu0 0
        %4767 = vmatpush1.bf16.msra.mxu0 %v3763
        %4768 = vmatprep.subr.bf16.mxu0 0
        %4769 = vmatpush1.bf16.msra.mxu0 %v3764
        %4770 = vmatprep.subr.bf16.mxu0 0
        %4771 = vmatpush1.bf16.msra.mxu0 %v3765
        %4772 = vmatprep.subr.bf16.mxu0 0
        %4773 = vmatpush1.bf16.msra.mxu0 %v3766
        %4774 = vmatprep.subr.bf16.mxu0 0
        %4775 = vmatpush1.bf16.msra.mxu0 %v3767
        %4776 = vmatprep.subr.bf16.mxu0 0
        %4777 = vmatpush1.bf16.msra.mxu0 %v3768
        %4778 = vmatprep.subr.bf16.mxu0 0
        %4779 = vmatpush1.bf16.msra.mxu0 %v3769
        %4780 = vmatprep.subr.bf16.mxu0 0
        %4781 = vmatpush1.bf16.msra.mxu0 %v3770
        %4782 = vmatprep.subr.bf16.mxu0 0
        %4783 = vmatpush1.bf16.msra.mxu0 %v3771
        %4784 = vmatprep.subr.bf16.mxu0 0
        %4785 = vmatpush1.bf16.msra.mxu0 %v3772
        %4786 = vmatprep.subr.bf16.mxu0 0
        %4787 = vmatpush1.bf16.msra.mxu0 %v3773
        %4788 = vmatprep.subr.bf16.mxu0 0
        %4789 = vmatpush1.bf16.msra.mxu0 %v3774
        %4790 = vmatprep.subr.bf16.mxu0 0
        %4791 = vmatpush1.bf16.msra.mxu0 %v3775
        %4792 = vmatprep.subr.bf16.mxu0 0
        %4793 = vmatpush1.bf16.msra.mxu0 %v3776
        %4794 = vmatprep.mubr.bf16.mxu0 %v3799
        %4795 = vmatmul.mubr.bf16.gmra.mrb[0].mxu0 %v3792
        %v4796 = vpop.f32.mrb[0].mxu0
        %v4797 = vadd.f32 0.0, %v4796
        %v4798 = vpop.f32.mrb[0].mxu0
        %v4799 = vpop.f32.mrb[0].mxu0
        %v4800 = vpop.f32.mrb[0].mxu0
        %4801 = vdwg.mxu0
        %v4802 = vld [vmem:[%s553] sm:$0x1]
        %v4803 = vld [vmem:[%s553 + $0x1] sm:$0x1]
        %v4804 = vld [vmem:[%s553 + $0x2] sm:$0x1]
        %v4805 = vld [vmem:[%s553 + $0x3] sm:$0x1]
        %v4806 = vld [vmem:[%s553 + $0x4] sm:$0x1]
        %v4807 = vld [vmem:[%s553 + $0x5] sm:$0x1]
        %v4808 = vld [vmem:[%s553 + $0x6] sm:$0x1]
        %v4809 = vld [vmem:[%s553 + $0x7] sm:$0x1]
        %v4810 = vld [vmem:[%s553 + $0x8] sm:$0x1]
        %v4811 = vld [vmem:[%s553 + $0x9] sm:$0x1]
        %v4812 = vld [vmem:[%s553 + $0xa] sm:$0x1]
        %v4813 = vld [vmem:[%s553 + $0xb] sm:$0x1]
        %v4814 = vld [vmem:[%s553 + $0xc] sm:$0x1]
        %v4815 = vld [vmem:[%s553 + $0xd] sm:$0x1]
        %v4816 = vld [vmem:[%s553 + $0xe] sm:$0x1]
        %v4817 = vld [vmem:[%s553 + $0xf] sm:$0x1]
        %v4818 = vld [vmem:[%s553 + $0x10] sm:$0x1]
        %v4819 = vld [vmem:[%s553 + $0x11] sm:$0x1]
        %v4820 = vld [vmem:[%s553 + $0x12] sm:$0x1]
        %v4821 = vld [vmem:[%s553 + $0x13] sm:$0x1]
        %v4822 = vld [vmem:[%s553 + $0x14] sm:$0x1]
        %v4823 = vld [vmem:[%s553 + $0x15] sm:$0x1]
        %v4824 = vld [vmem:[%s553 + $0x16] sm:$0x1]
        %v4825 = vld [vmem:[%s553 + $0x17] sm:$0x1]
        %v4826 = vld [vmem:[%s553 + $0x18] sm:$0x1]
        %v4827 = vmul.f32 %v3837, %v4802
        %v4828 = vmul.f32 %v3877, %v4803
        %v4829 = vmul.f32 %v3917, %v4804
        %v4830 = vmul.f32 %v3957, %v4805
        %v4831 = vmul.f32 %v3997, %v4806
        %v4832 = vmul.f32 %v4037, %v4807
        %v4833 = vmul.f32 %v4077, %v4808
        %v4834 = vmul.f32 %v4117, %v4809
        %v4835 = vmul.f32 %v4157, %v4810
        %v4836 = vmul.f32 %v4197, %v4811
        %v4837 = vmul.f32 %v4237, %v4812
        %v4838 = vmul.f32 %v4277, %v4813
        %v4839 = vmul.f32 %v4317, %v4814
        %v4840 = vmul.f32 %v4357, %v4815
        %v4841 = vmul.f32 %v4397, %v4816
        %v4842 = vmul.f32 %v4437, %v4817
        %v4843 = vmul.f32 %v4477, %v4818
        %v4844 = vmul.f32 %v4517, %v4819
        %v4845 = vmul.f32 %v4557, %v4820
        %v4846 = vmul.f32 %v4597, %v4821
        %v4847 = vmul.f32 %v4637, %v4822
        %v4848 = vmul.f32 %v4677, %v4823
        %v4849 = vmul.f32 %v4717, %v4824
        %v4850 = vmul.f32 %v4757, %v4825
        %v4851 = vmul.f32 %v4797, %v4826
        %v4852 = vld [vmem:[%s558] sm:$0x1]
        %v4853 = vld [vmem:[%s558 + $0x1] sm:$0x1]
        %v4854 = vld [vmem:[%s558 + $0x2] sm:$0x1]
        %v4855 = vld [vmem:[%s558 + $0x3] sm:$0x1]
        %v4856 = vld [vmem:[%s558 + $0x4] sm:$0x1]
        %v4857 = vld [vmem:[%s558 + $0x5] sm:$0x1]
        %v4858 = vld [vmem:[%s558 + $0x6] sm:$0x1]
        %v4859 = vld [vmem:[%s558 + $0x7] sm:$0x1]
        %v4860 = vld [vmem:[%s558 + $0x8] sm:$0x1]
        %v4861 = vld [vmem:[%s558 + $0x9] sm:$0x1]
        %v4862 = vld [vmem:[%s558 + $0xa] sm:$0x1]
        %v4863 = vld [vmem:[%s558 + $0xb] sm:$0x1]
        %v4864 = vld [vmem:[%s558 + $0xc] sm:$0x1]
        %v4865 = vld [vmem:[%s558 + $0xd] sm:$0x1]
        %v4866 = vld [vmem:[%s558 + $0xe] sm:$0x1]
        %v4867 = vld [vmem:[%s558 + $0xf] sm:$0x1]
        %v4868 = vld [vmem:[%s558 + $0x10] sm:$0x1]
        %v4869 = vld [vmem:[%s558 + $0x11] sm:$0x1]
        %v4870 = vld [vmem:[%s558 + $0x12] sm:$0x1]
        %v4871 = vld [vmem:[%s558 + $0x13] sm:$0x1]
        %v4872 = vld [vmem:[%s558 + $0x14] sm:$0x1]
        %v4873 = vld [vmem:[%s558 + $0x15] sm:$0x1]
        %v4874 = vld [vmem:[%s558 + $0x16] sm:$0x1]
        %v4875 = vld [vmem:[%s558 + $0x17] sm:$0x1]
        %v4876 = vld [vmem:[%s558 + $0x18] sm:$0x1]
        %v4877 = vadd.f32 %v4827, %v4852
        %v4878 = vadd.f32 %v4828, %v4853
        %v4879 = vadd.f32 %v4829, %v4854
        %v4880 = vadd.f32 %v4830, %v4855
        %v4881 = vadd.f32 %v4831, %v4856
        %v4882 = vadd.f32 %v4832, %v4857
        %v4883 = vadd.f32 %v4833, %v4858
        %v4884 = vadd.f32 %v4834, %v4859
        %v4885 = vadd.f32 %v4835, %v4860
        %v4886 = vadd.f32 %v4836, %v4861
        %v4887 = vadd.f32 %v4837, %v4862
        %v4888 = vadd.f32 %v4838, %v4863
        %v4889 = vadd.f32 %v4839, %v4864
        %v4890 = vadd.f32 %v4840, %v4865
        %v4891 = vadd.f32 %v4841, %v4866
        %v4892 = vadd.f32 %v4842, %v4867
        %v4893 = vadd.f32 %v4843, %v4868
        %v4894 = vadd.f32 %v4844, %v4869
        %v4895 = vadd.f32 %v4845, %v4870
        %v4896 = vadd.f32 %v4846, %v4871
        %v4897 = vadd.f32 %v4847, %v4872
        %v4898 = vadd.f32 %v4848, %v4873
        %v4899 = vadd.f32 %v4849, %v4874
        %v4900 = vadd.f32 %v4850, %v4875
        %v4901 = vadd.f32 %v4851, %v4876
        %vm4902 = vcmask 401408
        %v4903 = vsel %vm4902, %v4877, -inf
        %4904 = vmax.xlane.f32.xlu0 %v4903
        %v4905 = vpop.xlane.xlu0 %4904
        %v4906 = vsel %vm4902, %v4878, -inf
        %4907 = vmax.xlane.f32.xlu0 %v4906
        %v4908 = vpop.xlane.xlu0 %4907
        %v4909 = vsel %vm4902, %v4879, -inf
        %4910 = vmax.xlane.f32.xlu0 %v4909
        %v4911 = vpop.xlane.xlu0 %4910
        %v4912 = vsel %vm4902, %v4880, -inf
        %4913 = vmax.xlane.f32.xlu0 %v4912
        %v4914 = vpop.xlane.xlu0 %4913
        %v4915 = vsel %vm4902, %v4881, -inf
        %4916 = vmax.xlane.f32.xlu0 %v4915
        %v4917 = vpop.xlane.xlu0 %4916
        %v4918 = vsel %vm4902, %v4882, -inf
        %4919 = vmax.xlane.f32.xlu0 %v4918
        %v4920 = vpop.xlane.xlu0 %4919
        %v4921 = vsel %vm4902, %v4883, -inf
        %4922 = vmax.xlane.f32.xlu0 %v4921
        %v4923 = vpop.xlane.xlu0 %4922
        %v4924 = vsel %vm4902, %v4884, -inf
        %4925 = vmax.xlane.f32.xlu0 %v4924
        %v4926 = vpop.xlane.xlu0 %4925
        %v4927 = vsel %vm4902, %v4885, -inf
        %4928 = vmax.xlane.f32.xlu0 %v4927
        %v4929 = vpop.xlane.xlu0 %4928
        %v4930 = vsel %vm4902, %v4886, -inf
        %4931 = vmax.xlane.f32.xlu0 %v4930
        %v4932 = vpop.xlane.xlu0 %4931
        %v4933 = vsel %vm4902, %v4887, -inf
        %4934 = vmax.xlane.f32.xlu0 %v4933
        %v4935 = vpop.xlane.xlu0 %4934
        %v4936 = vsel %vm4902, %v4888, -inf
        %4937 = vmax.xlane.f32.xlu0 %v4936
        %v4938 = vpop.xlane.xlu0 %4937
        %v4939 = vsel %vm4902, %v4889, -inf
        %4940 = vmax.xlane.f32.xlu0 %v4939
        %v4941 = vpop.xlane.xlu0 %4940
        %v4942 = vsel %vm4902, %v4890, -inf
        %4943 = vmax.xlane.f32.xlu0 %v4942
        %v4944 = vpop.xlane.xlu0 %4943
        %v4945 = vsel %vm4902, %v4891, -inf
        %4946 = vmax.xlane.f32.xlu0 %v4945
        %v4947 = vpop.xlane.xlu0 %4946
        %v4948 = vsel %vm4902, %v4892, -inf
        %4949 = vmax.xlane.f32.xlu0 %v4948
        %v4950 = vpop.xlane.xlu0 %4949
        %v4951 = vsel %vm4902, %v4893, -inf
        %4952 = vmax.xlane.f32.xlu0 %v4951
        %v4953 = vpop.xlane.xlu0 %4952
        %v4954 = vsel %vm4902, %v4894, -inf
        %4955 = vmax.xlane.f32.xlu0 %v4954
        %v4956 = vpop.xlane.xlu0 %4955
        %v4957 = vsel %vm4902, %v4895, -inf
        %4958 = vmax.xlane.f32.xlu0 %v4957
        %v4959 = vpop.xlane.xlu0 %4958
        %v4960 = vsel %vm4902, %v4896, -inf
        %4961 = vmax.xlane.f32.xlu0 %v4960
        %v4962 = vpop.xlane.xlu0 %4961
        %v4963 = vsel %vm4902, %v4897, -inf
        %4964 = vmax.xlane.f32.xlu0 %v4963
        %v4965 = vpop.xlane.xlu0 %4964
        %v4966 = vsel %vm4902, %v4898, -inf
        %4967 = vmax.xlane.f32.xlu0 %v4966
        %v4968 = vpop.xlane.xlu0 %4967
        %v4969 = vsel %vm4902, %v4899, -inf
        %4970 = vmax.xlane.f32.xlu0 %v4969
        %v4971 = vpop.xlane.xlu0 %4970
        %v4972 = vsel %vm4902, %v4900, -inf
        %4973 = vmax.xlane.f32.xlu0 %v4972
        %v4974 = vpop.xlane.xlu0 %4973
        %v4975 = vsel %vm4902, %v4901, -inf
        %4976 = vmax.xlane.f32.xlu0 %v4975
        %v4977 = vpop.xlane.xlu0 %4976
        %v4978 = vsub.f32 %v4877, %v4905
        %v4979 = vsub.f32 %v4878, %v4908
        %v4980 = vsub.f32 %v4879, %v4911
        %v4981 = vsub.f32 %v4880, %v4914
        %v4982 = vsub.f32 %v4881, %v4917
        %v4983 = vsub.f32 %v4882, %v4920
        %v4984 = vsub.f32 %v4883, %v4923
        %v4985 = vsub.f32 %v4884, %v4926
        %v4986 = vsub.f32 %v4885, %v4929
        %v4987 = vsub.f32 %v4886, %v4932
        %v4988 = vsub.f32 %v4887, %v4935
        %v4989 = vsub.f32 %v4888, %v4938
        %v4990 = vsub.f32 %v4889, %v4941
        %v4991 = vsub.f32 %v4890, %v4944
        %v4992 = vsub.f32 %v4891, %v4947
        %v4993 = vsub.f32 %v4892, %v4950
        %v4994 = vsub.f32 %v4893, %v4953
        %v4995 = vsub.f32 %v4894, %v4956
        %v4996 = vsub.f32 %v4895, %v4959
        %v4997 = vsub.f32 %v4896, %v4962
        %v4998 = vsub.f32 %v4897, %v4965
        %v4999 = vsub.f32 %v4898, %v4968
        %v5000 = vsub.f32 %v4899, %v4971
        %v5001 = vsub.f32 %v4900, %v4974
        %v5002 = vsub.f32 %v4901, %v4977
        %v5003 = vmul.f32 %v4978, 1.442695
        %v5004 = vpow.pop %v5003
        %v5005 = vmul.f32 %v4979, 1.442695
        %v5006 = vpow.pop %v5005
        %v5007 = vmul.f32 %v4980, 1.442695
        %v5008 = vpow.pop %v5007
        %v5009 = vmul.f32 %v4981, 1.442695
        %v5010 = vpow.pop %v5009
        %v5011 = vmul.f32 %v4982, 1.442695
        %v5012 = vpow.pop %v5011
        %v5013 = vmul.f32 %v4983, 1.442695
        %v5014 = vpow.pop %v5013
        %v5015 = vmul.f32 %v4984, 1.442695
        %v5016 = vpow.pop %v5015
        %v5017 = vmul.f32 %v4985, 1.442695
        %v5018 = vpow.pop %v5017
        %v5019 = vmul.f32 %v4986, 1.442695
        %v5020 = vpow.pop %v5019
        %v5021 = vmul.f32 %v4987, 1.442695
        %v5022 = vpow.pop %v5021
        %v5023 = vmul.f32 %v4988, 1.442695
        %v5024 = vpow.pop %v5023
        %v5025 = vmul.f32 %v4989, 1.442695
        %v5026 = vpow.pop %v5025
        %v5027 = vmul.f32 %v4990, 1.442695
        %v5028 = vpow.pop %v5027
        %v5029 = vmul.f32 %v4991, 1.442695
        %v5030 = vpow.pop %v5029
        %v5031 = vmul.f32 %v4992, 1.442695
        %v5032 = vpow.pop %v5031
        %v5033 = vmul.f32 %v4993, 1.442695
        %v5034 = vpow.pop %v5033
        %v5035 = vmul.f32 %v4994, 1.442695
        %v5036 = vpow.pop %v5035
        %v5037 = vmul.f32 %v4995, 1.442695
        %v5038 = vpow.pop %v5037
        %v5039 = vmul.f32 %v4996, 1.442695
        %v5040 = vpow.pop %v5039
        %v5041 = vmul.f32 %v4997, 1.442695
        %v5042 = vpow.pop %v5041
        %v5043 = vmul.f32 %v4998, 1.442695
        %v5044 = vpow.pop %v5043
        %v5045 = vmul.f32 %v4999, 1.442695
        %v5046 = vpow.pop %v5045
        %v5047 = vmul.f32 %v5000, 1.442695
        %v5048 = vpow.pop %v5047
        %v5049 = vmul.f32 %v5001, 1.442695
        %v5050 = vpow.pop %v5049
        %v5051 = vmul.f32 %v5002, 1.442695
        %v5052 = vpow.pop %v5051
        %v5053 = vsel %vm4902, %v5004, 0.0
        %5054 = vadd.xlane.f32.xlu0 %v5053
        %v5055 = vpop.xlane.xlu0 %5054
        %v5056 = vsel %vm4902, %v5006, 0.0
        %5057 = vadd.xlane.f32.xlu0 %v5056
        %v5058 = vpop.xlane.xlu0 %5057
        %v5059 = vsel %vm4902, %v5008, 0.0
        %5060 = vadd.xlane.f32.xlu0 %v5059
        %v5061 = vpop.xlane.xlu0 %5060
        %v5062 = vsel %vm4902, %v5010, 0.0
        %5063 = vadd.xlane.f32.xlu0 %v5062
        %v5064 = vpop.xlane.xlu0 %5063
        %v5065 = vsel %vm4902, %v5012, 0.0
        %5066 = vadd.xlane.f32.xlu0 %v5065
        %v5067 = vpop.xlane.xlu0 %5066
        %v5068 = vsel %vm4902, %v5014, 0.0
        %5069 = vadd.xlane.f32.xlu0 %v5068
        %v5070 = vpop.xlane.xlu0 %5069
        %v5071 = vsel %vm4902, %v5016, 0.0
        %5072 = vadd.xlane.f32.xlu0 %v5071
        %v5073 = vpop.xlane.xlu0 %5072
        %v5074 = vsel %vm4902, %v5018, 0.0
        %5075 = vadd.xlane.f32.xlu0 %v5074
        %v5076 = vpop.xlane.xlu0 %5075
        %v5077 = vsel %vm4902, %v5020, 0.0
        %5078 = vadd.xlane.f32.xlu0 %v5077
        %v5079 = vpop.xlane.xlu0 %5078
        %v5080 = vsel %vm4902, %v5022, 0.0
        %5081 = vadd.xlane.f32.xlu0 %v5080
        %v5082 = vpop.xlane.xlu0 %5081
        %v5083 = vsel %vm4902, %v5024, 0.0
        %5084 = vadd.xlane.f32.xlu0 %v5083
        %v5085 = vpop.xlane.xlu0 %5084
        %v5086 = vsel %vm4902, %v5026, 0.0
        %5087 = vadd.xlane.f32.xlu0 %v5086
        %v5088 = vpop.xlane.xlu0 %5087
        %v5089 = vsel %vm4902, %v5028, 0.0
        %5090 = vadd.xlane.f32.xlu0 %v5089
        %v5091 = vpop.xlane.xlu0 %5090
        %v5092 = vsel %vm4902, %v5030, 0.0
        %5093 = vadd.xlane.f32.xlu0 %v5092
        %v5094 = vpop.xlane.xlu0 %5093
        %v5095 = vsel %vm4902, %v5032, 0.0
        %5096 = vadd.xlane.f32.xlu0 %v5095
        %v5097 = vpop.xlane.xlu0 %5096
        %v5098 = vsel %vm4902, %v5034, 0.0
        %5099 = vadd.xlane.f32.xlu0 %v5098
        %v5100 = vpop.xlane.xlu0 %5099
        %v5101 = vsel %vm4902, %v5036, 0.0
        %5102 = vadd.xlane.f32.xlu0 %v5101
        %v5103 = vpop.xlane.xlu0 %5102
        %v5104 = vsel %vm4902, %v5038, 0.0
        %5105 = vadd.xlane.f32.xlu0 %v5104
        %v5106 = vpop.xlane.xlu0 %5105
        %v5107 = vsel %vm4902, %v5040, 0.0
        %5108 = vadd.xlane.f32.xlu0 %v5107
        %v5109 = vpop.xlane.xlu0 %5108
        %v5110 = vsel %vm4902, %v5042, 0.0
        %5111 = vadd.xlane.f32.xlu0 %v5110
        %v5112 = vpop.xlane.xlu0 %5111
        %v5113 = vsel %vm4902, %v5044, 0.0
        %5114 = vadd.xlane.f32.xlu0 %v5113
        %v5115 = vpop.xlane.xlu0 %5114
        %v5116 = vsel %vm4902, %v5046, 0.0
        %5117 = vadd.xlane.f32.xlu0 %v5116
        %v5118 = vpop.xlane.xlu0 %5117
        %v5119 = vsel %vm4902, %v5048, 0.0
        %5120 = vadd.xlane.f32.xlu0 %v5119
        %v5121 = vpop.xlane.xlu0 %5120
        %v5122 = vsel %vm4902, %v5050, 0.0
        %5123 = vadd.xlane.f32.xlu0 %v5122
        %v5124 = vpop.xlane.xlu0 %5123
        %v5125 = vsel %vm4902, %v5052, 0.0
        %5126 = vadd.xlane.f32.xlu0 %v5125
        %v5127 = vpop.xlane.xlu0 %5126
        %v5128 = vrcp.pop %v5055
        %v5129 = vmul.f32 %v5004, %v5128
        %v5130 = vrcp.pop %v5058
        %v5131 = vmul.f32 %v5006, %v5130
        %v5132 = vrcp.pop %v5061
        %v5133 = vmul.f32 %v5008, %v5132
        %v5134 = vrcp.pop %v5064
        %v5135 = vmul.f32 %v5010, %v5134
        %v5136 = vrcp.pop %v5067
        %v5137 = vmul.f32 %v5012, %v5136
        %v5138 = vrcp.pop %v5070
        %v5139 = vmul.f32 %v5014, %v5138
        %v5140 = vrcp.pop %v5073
        %v5141 = vmul.f32 %v5016, %v5140
        %v5142 = vrcp.pop %v5076
        %v5143 = vmul.f32 %v5018, %v5142
        %v5144 = vrcp.pop %v5079
        %v5145 = vmul.f32 %v5020, %v5144
        %v5146 = vrcp.pop %v5082
        %v5147 = vmul.f32 %v5022, %v5146
        %v5148 = vrcp.pop %v5085
        %v5149 = vmul.f32 %v5024, %v5148
        %v5150 = vrcp.pop %v5088
        %v5151 = vmul.f32 %v5026, %v5150
        %v5152 = vrcp.pop %v5091
        %v5153 = vmul.f32 %v5028, %v5152
        %v5154 = vrcp.pop %v5094
        %v5155 = vmul.f32 %v5030, %v5154
        %v5156 = vrcp.pop %v5097
        %v5157 = vmul.f32 %v5032, %v5156
        %v5158 = vrcp.pop %v5100
        %v5159 = vmul.f32 %v5034, %v5158
        %v5160 = vrcp.pop %v5103
        %v5161 = vmul.f32 %v5036, %v5160
        %v5162 = vrcp.pop %v5106
        %v5163 = vmul.f32 %v5038, %v5162
        %v5164 = vrcp.pop %v5109
        %v5165 = vmul.f32 %v5040, %v5164
        %v5166 = vrcp.pop %v5112
        %v5167 = vmul.f32 %v5042, %v5166
        %v5168 = vrcp.pop %v5115
        %v5169 = vmul.f32 %v5044, %v5168
        %v5170 = vrcp.pop %v5118
        %v5171 = vmul.f32 %v5046, %v5170
        %v5172 = vrcp.pop %v5121
        %v5173 = vmul.f32 %v5048, %v5172
        %v5174 = vrcp.pop %v5124
        %v5175 = vmul.f32 %v5050, %v5174
        %v5176 = vrcp.pop %v5127
        %v5177 = vmul.f32 %v5052, %v5176
        %5178 = vst.msk [vmem:[%s563] sm:$0x1] %vm4902, %v5129
        %5179 = vst.msk [vmem:[%s563 + $0x1] sm:$0x1] %vm4902, %v5131
        %5180 = vst.msk [vmem:[%s563 + $0x2] sm:$0x1] %vm4902, %v5133
        %5181 = vst.msk [vmem:[%s563 + $0x3] sm:$0x1] %vm4902, %v5135
        %5182 = vst.msk [vmem:[%s563 + $0x4] sm:$0x1] %vm4902, %v5137
        %5183 = vst.msk [vmem:[%s563 + $0x5] sm:$0x1] %vm4902, %v5139
        %5184 = vst.msk [vmem:[%s563 + $0x6] sm:$0x1] %vm4902, %v5141
        %5185 = vst.msk [vmem:[%s563 + $0x7] sm:$0x1] %vm4902, %v5143
        %5186 = vst.msk [vmem:[%s563 + $0x8] sm:$0x1] %vm4902, %v5145
        %5187 = vst.msk [vmem:[%s563 + $0x9] sm:$0x1] %vm4902, %v5147
        %5188 = vst.msk [vmem:[%s563 + $0xa] sm:$0x1] %vm4902, %v5149
        %5189 = vst.msk [vmem:[%s563 + $0xb] sm:$0x1] %vm4902, %v5151
        %5190 = vst.msk [vmem:[%s563 + $0xc] sm:$0x1] %vm4902, %v5153
        %5191 = vst.msk [vmem:[%s563 + $0xd] sm:$0x1] %vm4902, %v5155
        %5192 = vst.msk [vmem:[%s563 + $0xe] sm:$0x1] %vm4902, %v5157
        %5193 = vst.msk [vmem:[%s563 + $0xf] sm:$0x1] %vm4902, %v5159
        %5194 = vst.msk [vmem:[%s563 + $0x10] sm:$0x1] %vm4902, %v5161
        %5195 = vst.msk [vmem:[%s563 + $0x11] sm:$0x1] %vm4902, %v5163
        %5196 = vst.msk [vmem:[%s563 + $0x12] sm:$0x1] %vm4902, %v5165
        %5197 = vst.msk [vmem:[%s563 + $0x13] sm:$0x1] %vm4902, %v5167
        %5198 = vst.msk [vmem:[%s563 + $0x14] sm:$0x1] %vm4902, %v5169
        %5199 = vst.msk [vmem:[%s563 + $0x15] sm:$0x1] %vm4902, %v5171
        %5200 = vst.msk [vmem:[%s563 + $0x16] sm:$0x1] %vm4902, %v5173
        %5201 = vst.msk [vmem:[%s563 + $0x17] sm:$0x1] %vm4902, %v5175
        %5202 = vst.msk [vmem:[%s563 + $0x18] sm:$0x1] %vm4902, %v5177
        %s5203 = smul.u32 25, %s31
        %p5204 = scmp.lt.s32.totalorder %s5203, 49
        %s5205 = scalar_select %p5204, %s5203, 49
        %s5206 = scalar_lea.vmem %s16, %s5205
        // Predicated region
        $region85: #{energy_50_rl_forward.1} parent=79 // pred_check
          %p5207 = pneg %p374
        $region86: #{energy_50_rl_forward.1} parent=79 // pred_check_branch
          %5209 = sbr.rel (%p5207) target = $region88
        $region87: #{energy_50_rl_forward.1} parent=79 // pred_region
          %s5211 = ssub.s32 16, 16
          %5212 = vsyncadd [#allocation5], %s5211
          %s5214 = sshll.u32 [#allocation4], 4
          %s5215 = int_to_ptr.vmem [resolvable:$true] %s5214
          %5217 = dma.vmem_to_hbm [thread:$0]  %s5215, 16, %s15, [#allocation5]
        $region88: #{energy_50_rl_forward.1} parent=79 // pred_fallthru
          _
        // Predicated region
        $region89: #{energy_50_rl_forward.1} parent=79 // pred_check
          %p5218 = pneg %p400
        $region90: #{energy_50_rl_forward.1} parent=79 // pred_check_branch
          %5220 = sbr.rel (%p5218) target = $region92
        $region91: #{energy_50_rl_forward.1} parent=79 // pred_region
          %s5221 = smul.u32 25, %s31
        $region92: #{energy_50_rl_forward.1} parent=79 // pred_fallthru
          _
        // Predicated region
        $region93: #{energy_50_rl_forward.1} parent=79 // pred_check
          %p5222 = pneg %p374
        $region94: #{energy_50_rl_forward.1} parent=79 // pred_check_branch
          %5224 = sbr.rel (%p5222) target = $region96
        $region95: #{energy_50_rl_forward.1} parent=79 // pred_region
          %5225 = dma.done [#allocation5], 16
        $region96: #{energy_50_rl_forward.1} parent=79 // pred_fallthru
          _
      $region80: #{energy_50_rl_forward.1} parent=5 // pred_fallthru
        _
      %p5226 = scmp.le.s32.totalorder 2, %s26
      // Predicated region
      $region97: #{energy_50_rl_forward.1} parent=5 // pred_check
        %p5227 = pneg %p5226
      $region98: #{energy_50_rl_forward.1} parent=5 // pred_check_branch
        %5229 = sbr.rel (%p5227) target = $region100
      $region99: #{energy_50_rl_forward.1} parent=5 // pred_region
        %s5230 = ssub.s32 %s26, 2
        // Predicated region
        $region101: #{energy_50_rl_forward.1} parent=99 // pred_check
          %p5231 = pneg %p406
        $region102: #{energy_50_rl_forward.1} parent=99 // pred_check_branch
          %5233 = sbr.rel (%p5231) target = $region104
        $region103: #{energy_50_rl_forward.1} parent=99 // pred_region
          %s5234 = smul.u32 25, %s32
          %p5235 = scmp.lt.s32.totalorder %s5234, 49
          %s5236 = scalar_select %p5235, %s5234, 49
          %s5237 = scalar_lea.vmem %s16, %s5236
        $region104: #{energy_50_rl_forward.1} parent=99 // pred_fallthru
          _
      $region100: #{energy_50_rl_forward.1} parent=5 // pred_fallthru
        _
    $region6: #{energy_50_rl_forward.1} parent=1 // loop_footer
      %s30 = sadd.s32 1, %s26
    $region7: #{energy_50_rl_forward.1} parent=1 // loop_footer_branch
      %25 = sbr.rel target = $region3
    $region8: #{energy_50_rl_forward.1} parent=1 // loop_exit
      _
    %5238 = vsyncpa [#allocation5], 1
    %s5239 = scalar_lea.sflag [#allocation5], 1
    %5240 = vsyncpa %s5239, 1

</llo_original>
